<compile_context>
chip_gen: v6e
topology: v6e:2x2x1
jax: 0.10.0
libtpu: 0.0.40
codegen_flags: <defaults>
</compile_context>

<pallas_src>
import jax
import jax.numpy as jnp
from jax import lax
from jax.experimental import pallas as pl
from jax.experimental.pallas import tpu as pltpu

HIDDEN = 128            # LSTM hidden size
FEAT = 2048             # CNN feature size == LSTM input size (folded away)
NUM_CLASSES = 2
CONV_OC = 32            # conv output channels
CNN_FRAMES_PER_STEP = 8 # frames per CNN grid step (raise toward 128 for big N)
LSTM_BATCH_TILE = 8     # batch rows carried per LSTM grid step


def _round_up(x, m):
    return ((x + m - 1) // m) * m


# ---------------------------------------------------------------------------
# CNN kernel: Fr frames per step; im2col conv + ReLU + avg-pool as two matmuls
# ---------------------------------------------------------------------------
def cnn_kernel(patch_ref, wconv_ref, bconv_ref, pool_ref, out_ref):
    # 3x3 conv over Fr frames as ONE im2col matmul (bf16 operands, f32 acc).
    conv = jnp.dot(patch_ref[...], wconv_ref[...],
                   preferred_element_type=jnp.float32)          # (Fr*HW, OC)
    conv = jnp.maximum(conv + bconv_ref[...], 0.0)              # bias + ReLU
    # Global average pool per frame expressed as a second small MXU matmul:
    # pool_ref is (Fr, Fr*HW) block-diagonal 1/HW.
    pooled = jnp.dot(pool_ref[...], conv.astype(jnp.bfloat16),
                     preferred_element_type=jnp.float32)        # (Fr, OC)
    out_ref[...] = pooled.astype(out_ref.dtype)


def cnn_forward(patches2d, wconv, bconv, pool_mat, n_pad, fr, hw, ck):
    oc = wconv.shape[1]
    return pl.pallas_call(
        cnn_kernel,
        out_shape=jax.ShapeDtypeStruct((n_pad, oc), jnp.bfloat16),
        grid=(n_pad // fr,),
        in_specs=[
            pl.BlockSpec((fr * hw, ck), lambda i: (i, 0)),
            pl.BlockSpec((ck, oc), lambda i: (0, 0)),
            pl.BlockSpec((1, oc), lambda i: (0, 0)),
            pl.BlockSpec((fr, fr * hw), lambda i: (0, 0)),
        ],
        out_specs=pl.BlockSpec((fr, oc), lambda i: (i, 0)),
        compiler_params=pltpu.CompilerParams(dimension_semantics=("parallel",)),
    )(patches2d, wconv, bconv, pool_mat)


# ---------------------------------------------------------------------------
# LSTM (variable-length) + final FC kernel: one batch *tile* per grid step
#   x tile layout: rows ordered (t, b_local) so timestep t is a contiguous,
#   sublane-aligned (BB, 4H) slice of the hoisted-gates scratch.
# ---------------------------------------------------------------------------
def lstm_fc_kernel(len_smem, x_ref, lenv_ref, wfold_ref, bfold_ref,
                   whh_ref, wfc_ref, bfc_ref, out_ref, gx_ref, h_sc, c_sc):
    BB = h_sc.shape[0]

    # (1) Hoisted, folded input projection for EVERY timestep of this tile:
    #     one (T*BB, 32) @ (32, 512) matmul instead of T tiny M=1 matmuls.
    gx_ref[...] = (jnp.dot(x_ref[0], wfold_ref[...],
                           preferred_element_type=jnp.float32)
                   + bfold_ref[...])

    h_sc[...] = jnp.zeros_like(h_sc)
    c_sc[...] = jnp.zeros_like(c_sc)

    # Per-row valid lengths (VMEM column) + dynamic loop bound (max in tile).
    lens_col = lenv_ref[0]                                      # (BB, 1) int32
    b0 = pl.program_id(0) * BB
    lmax = len_smem[b0]
    for j in range(1, BB):                                      # BB is static
        lmax = jnp.maximum(lmax, len_smem[b0 + j])

    @pl.loop(0, lmax)                                           # skip padded steps
    def _(t):
        row = pl.multiple_of(t * BB, BB)
        gates = gx_ref[pl.ds(row, BB), :] + jnp.dot(
            h_sc[...].astype(jnp.bfloat16), whh_ref[...],
            preferred_element_type=jnp.float32)                 # (BB, 4*HIDDEN)
        i_g = jax.nn.sigmoid(gates[:, 0 * HIDDEN:1 * HIDDEN])
        f_g = jax.nn.sigmoid(gates[:, 1 * HIDDEN:2 * HIDDEN])
        g_g = jnp.tanh(gates[:, 2 * HIDDEN:3 * HIDDEN])
        o_g = jax.nn.sigmoid(gates[:, 3 * HIDDEN:4 * HIDDEN])
        c_new = f_g * c_sc[...] + i_g * g_g
        h_new = o_g * jnp.tanh(c_new)
        # pack_padded_sequence semantics: rows past their true length keep
        # their state, so h_sc ends up == lstm_output[b, lengths[b]-1].
        valid = t < lens_col
        h_sc[...] = jnp.where(valid, h_new, h_sc[...])
        c_sc[...] = jnp.where(valid, c_new, c_sc[...])

    # final fc: Linear(128, 2) applied to the last valid LSTM output
    out_ref[0] = (jnp.dot(h_sc[...], wfc_ref[...],
                          preferred_element_type=jnp.float32) + bfc_ref[...])


def lstm_fc_forward(x_tiles, lenv, lengths_pad, wfold, bfold, whh, wfc, bfc,
                    seq_len, bb, nb):
    k = x_tiles.shape[-1]
    return pl.pallas_call(
        lstm_fc_kernel,
        out_shape=jax.ShapeDtypeStruct((nb, bb, NUM_CLASSES), jnp.float32),
        grid_spec=pltpu.PrefetchScalarGridSpec(
            num_scalar_prefetch=1,
            grid=(nb,),
            in_specs=[
                pl.BlockSpec((1, seq_len * bb, k), lambda i, lens: (i, 0, 0)),
                pl.BlockSpec((1, bb, 1), lambda i, lens: (i, 0, 0)),
                pl.BlockSpec((k, 4 * HIDDEN), lambda i, lens: (0, 0)),
                pl.BlockSpec((1, 4 * HIDDEN), lambda i, lens: (0, 0)),
                pl.BlockSpec((HIDDEN, 4 * HIDDEN), lambda i, lens: (0, 0)),
                pl.BlockSpec((HIDDEN, NUM_CLASSES), lambda i, lens: (0, 0)),
                pl.BlockSpec((1, NUM_CLASSES), lambda i, lens: (0, 0)),
            ],
            out_specs=pl.BlockSpec((1, bb, NUM_CLASSES), lambda i, lens: (i, 0, 0)),
            scratch_shapes=[
                pltpu.VMEM((seq_len * bb, 4 * HIDDEN), jnp.float32),  # gates_x
                pltpu.VMEM((bb, HIDDEN), jnp.float32),                # h
                pltpu.VMEM((bb, HIDDEN), jnp.float32),                # c
            ],
        ),
        # Batch tiles are independent (h/c re-initialized per step) -> parallel,
        # letting v7x shard tiles across its two TensorCores.
        compiler_params=pltpu.CompilerParams(dimension_semantics=("parallel",)),
    )(lengths_pad, x_tiles, lenv, wfold, bfold, whh, wfc, bfc)


# ---------------------------------------------------------------------------
# Plain-JAX glue
# ---------------------------------------------------------------------------
def im2col_3x3_same(x):
    """x: (N, C, H, W) NCHW  ->  (N, H*W, C*9) patches (3x3, pad=1, stride=1)."""
    N, C, H, W = x.shape
    xp = jnp.pad(x, ((0, 0), (0, 0), (1, 1), (1, 1)))
    cols = [xp[:, :, dh:dh + H, dw:dw + W] for dh in range(3) for dw in range(3)]
    p = jnp.stack(cols, axis=2)                 # (N, C, 9, H, W)
    p = p.transpose(0, 3, 4, 1, 2)              # (N, H, W, C, 9)
    return p.reshape(N, H * W, C * 9)


def anomaly_detection_forward(params, frame_sequence, lengths):
    """frame_sequence: (B, T, C, H, W) float32; lengths: (B,) int32."""
    B, T, C, H, W = frame_sequence.shape
    HW, CK, N = H * W, C * 9, B * T

    # ----- CNN stage ------------------------------------------------------
    x = frame_sequence.reshape(N, C, H, W)
    patches = im2col_3x3_same(x)                                # (N, HW, CK)
    Fr = CNN_FRAMES_PER_STEP
    n_pad = _round_up(N, Fr)
    patches = jnp.pad(patches, ((0, n_pad - N), (0, 0), (0, 0)))
    patches2d = patches.reshape(n_pad * HW, CK).astype(jnp.bfloat16)
    pool_mat = jnp.kron(jnp.eye(Fr, dtype=jnp.float32),
                        jnp.full((1, HW), 1.0 / HW, jnp.float32)).astype(jnp.bfloat16)
    pooled = cnn_forward(patches2d, params["wconv"].astype(jnp.bfloat16),
                         params["bconv"], pool_mat, n_pad, Fr, HW, CK)
    pooled = pooled[:N].reshape(B, T, CONV_OC)                  # (B, T, 32) bf16

    # ----- Fold Linear(32->2048) into the LSTM input transform (exact) -----
    wfold = (params["wproj"] @ params["wih_t"]).astype(jnp.bfloat16)   # (32, 512)
    bfold = params["bproj"] @ params["wih_t"] + params["b_lstm"]       # (1, 512)

    # ----- LSTM + FC stage --------------------------------------------------
    BB = LSTM_BATCH_TILE
    b_pad = _round_up(B, BB)
    nb = b_pad // BB
    pooled = jnp.pad(pooled, ((0, b_pad - B), (0, 0), (0, 0)))
    # rows inside a tile ordered (t, b_local): timestep t = contiguous BB rows.
    x_tiles = (pooled.reshape(nb, BB, T, CONV_OC)
               .transpose(0, 2, 1, 3)
               .reshape(nb, T * BB, CONV_OC))
    lengths = jnp.asarray(lengths, jnp.int32)
    lengths_pad = jnp.pad(lengths, (0, b_pad - B))              # padded rows: len 0
    lenv = lengths_pad.reshape(nb, BB, 1)

    scores = lstm_fc_forward(x_tiles, lenv, lengths_pad, wfold, bfold,
                             params["whh_t"].astype(jnp.bfloat16),
                             params["wfc_t"], params["bfc"], T, BB, nb)
    return scores.reshape(b_pad, NUM_CLASSES)[:B]               # (B, 2)


def init_params(key, channels):
    ks = jax.random.split(key, 9)
    wconv4d = 0.1 * jax.random.normal(ks[0], (CONV_OC, channels, 3, 3), jnp.float32)
    return {
        # conv weight flattened to (C*9, OC) matching im2col ordering
        "wconv": wconv4d.reshape(CONV_OC, channels * 9).T,
        "bconv": 0.1 * jax.random.normal(ks[1], (1, CONV_OC), jnp.float32),
        "wproj": 0.05 * jax.random.normal(ks[2], (CONV_OC, FEAT), jnp.float32),
        "bproj": 0.05 * jax.random.normal(ks[3], (1, FEAT), jnp.float32),
        # LSTM weights stored transposed: x @ W_ih^T, h @ W_hh^T; gate order i,f,g,o
        "wih_t": 0.02 * jax.random.normal(ks[4], (FEAT, 4 * HIDDEN), jnp.float32),
        "whh_t": 0.08 * jax.random.normal(ks[5], (HIDDEN, 4 * HIDDEN), jnp.float32),
        "b_lstm": 0.02 * jax.random.normal(ks[6], (1, 4 * HIDDEN), jnp.float32),
        # final fc: Linear(128, 2)
        "wfc_t": 0.09 * jax.random.normal(ks[7], (HIDDEN, NUM_CLASSES), jnp.float32),
        "bfc": 0.01 * jax.random.normal(ks[8], (1, NUM_CLASSES), jnp.float32),
    }


# Pure-JAX (f32, unfused) reference mirroring the PyTorch module semantics.
def _reference_forward(params, frame_sequence, lengths):
    B, T, C, H, W = frame_sequence.shape
    patches = im2col_3x3_same(frame_sequence.reshape(B * T, C, H, W))
    conv = jnp.maximum(jnp.einsum("npk,ko->npo", patches, params["wconv"])
                       + params["bconv"], 0.0)
    pooled = conv.mean(axis=1)                                   # (N, 32)
    feats = (pooled @ params["wproj"] + params["bproj"]).reshape(B, T, FEAT)

    def cell(carry, x_t):
        h, c = carry
        gates = x_t @ params["wih_t"] + h @ params["whh_t"] + params["b_lstm"]
        i = jax.nn.sigmoid(gates[:, :HIDDEN])
        f = jax.nn.sigmoid(gates[:, HIDDEN:2 * HIDDEN])
        g = jnp.tanh(gates[:, 2 * HIDDEN:3 * HIDDEN])
        o = jax.nn.sigmoid(gates[:, 3 * HIDDEN:])
        c = f * c + i * g
        h = o * jnp.tanh(c)
        return (h, c), h

    init = (jnp.zeros((B, HIDDEN), jnp.float32), jnp.zeros((B, HIDDEN), jnp.float32))
    _, hs = lax.scan(cell, init, jnp.swapaxes(feats, 0, 1))
    hs = jnp.swapaxes(hs, 0, 1)                                  # (B, T, H)
    last = hs[jnp.arange(B), jnp.asarray(lengths) - 1]           # gather(lengths-1)
    return last @ params["wfc_t"] + params["bfc"]


if __name__ == "__main__":
    key = jax.random.PRNGKey(0)
    k_par, k_in = jax.random.split(key)

    B, T, C, H, W = 2, 8, 4, 16, 16
    params = init_params(k_par, C)
    frame_sequence = jax.random.normal(k_in, (B, T, C, H, W), jnp.float32)
    lengths = jnp.array([8, 5], dtype=jnp.int32)   # variable-length sequences

    fwd = jax.jit(anomaly_detection_forward)
    scores = jax.block_until_ready(fwd(params, frame_sequence, lengths))

    assert scores.shape == (B, NUM_CLASSES)
    assert bool(jnp.all(jnp.isfinite(scores)))

    ref = _reference_forward(params, frame_sequence, lengths)
    max_err = float(jnp.max(jnp.abs(scores - ref)))
    assert max_err < 5e-2, f"mismatch vs f32 reference: {max_err}"

    print("KERNEL_OK")
</pallas_src>

<mosaic_0001>
module attributes {stable_mosaic.version = 11 : i64} {
  func.func @cnn_kernel(%arg0: i32, %arg1: memref<2048x36xbf16, #tpu.memory_space<vmem>>, %arg2: memref<36x32xbf16, #tpu.memory_space<vmem>>, %arg3: memref<1x32xf32, #tpu.memory_space<vmem>>, %arg4: memref<8x2048xbf16, #tpu.memory_space<vmem>>, %arg5: memref<8x32xbf16, #tpu.memory_space<vmem>>) attributes {dimension_semantics = [#tpu.dimension_semantics<parallel>], iteration_bounds = array<i64: 2>, scalar_prefetch = 0 : i64, scratch_operands = 0 : i64, tpu.core_type = #tpu.core_type<tc>, window_params = [{transform_indices = @transform_0, window_bounds = array<i64: 2048, 36>}, {pipeline_mode = #tpu.pipeline_mode<synchronous>, transform_indices = @transform_1, window_bounds = array<i64: 36, 32>}, {pipeline_mode = #tpu.pipeline_mode<synchronous>, transform_indices = @transform_2, window_bounds = array<i64: 1, 32>}, {pipeline_mode = #tpu.pipeline_mode<synchronous>, transform_indices = @transform_3, window_bounds = array<i64: 8, 2048>}, {transform_indices = @transform_4, window_bounds = array<i64: 8, 32>}]} {
    %c0 = arith.constant 0 : index
    %c0_0 = arith.constant 0 : index
    %0 = vector.load %arg1[%c0, %c0_0] : memref<2048x36xbf16, #tpu.memory_space<vmem>>, vector<2048x36xbf16>
    %c0_1 = arith.constant 0 : index
    %c0_2 = arith.constant 0 : index
    %1 = vector.load %arg2[%c0_1, %c0_2] : memref<36x32xbf16, #tpu.memory_space<vmem>>, vector<36x32xbf16>
    %cst = arith.constant dense<0.000000e+00> : vector<2048x32xf32>
    %2 = tpu.matmul %0, %1, %cst {dimension_numbers = #tpu.dot_dimension_numbers<[1], [0], [0], [1], [0, 0, 1, 1], [], []>} : vector<2048x36xbf16>, vector<36x32xbf16>, vector<2048x32xf32> -> vector<2048x32xf32>
    %c0_3 = arith.constant 0 : index
    %c0_4 = arith.constant 0 : index
    %3 = vector.load %arg3[%c0_3, %c0_4] : memref<1x32xf32, #tpu.memory_space<vmem>>, vector<1x32xf32>
    %4 = vector.broadcast %3 : vector<1x32xf32> to vector<2048x32xf32>
    %5 = arith.addf %2, %4 : vector<2048x32xf32>
    %cst_5 = arith.constant 0.000000e+00 : f32
    %6 = vector.broadcast %cst_5 : f32 to vector<2048x32xf32>
    %7 = arith.maximumf %5, %6 : vector<2048x32xf32>
    %c0_6 = arith.constant 0 : index
    %c0_7 = arith.constant 0 : index
    %8 = vector.load %arg4[%c0_6, %c0_7] : memref<8x2048xbf16, #tpu.memory_space<vmem>>, vector<8x2048xbf16>
    %9 = arith.truncf %7 : vector<2048x32xf32> to vector<2048x32xbf16>
    %cst_8 = arith.constant dense<0.000000e+00> : vector<8x32xf32>
    %10 = tpu.matmul %8, %9, %cst_8 {dimension_numbers = #tpu.dot_dimension_numbers<[1], [0], [0], [1], [0, 0, 1, 1], [], []>} : vector<8x2048xbf16>, vector<2048x32xbf16>, vector<8x32xf32> -> vector<8x32xf32>
    %11 = arith.truncf %10 : vector<8x32xf32> to vector<8x32xbf16>
    %c0_9 = arith.constant 0 : index
    %c0_10 = arith.constant 0 : index
    %12 = vector.load %arg5[%c0_9, %c0_10] : memref<8x32xbf16, #tpu.memory_space<vmem>>, vector<8x32xbf16>
    tpu.vector_store %arg5[%c0_9, %c0_10], %11 {strides = array<i32>} : memref<8x32xbf16, #tpu.memory_space<vmem>>, vector<8x32xbf16>,
    return
  }
  func.func @transform_0(%arg0: i32) -> (i32, i32) {
    %c0_i32 = arith.constant 0 : i32
    %c0_i32_0 = arith.constant 0 : i32
    return %arg0, %c0_i32 : i32, i32
  }
  func.func @transform_1(%arg0: i32) -> (i32, i32) {
    %c0_i32 = arith.constant 0 : i32
    %c0_i32_0 = arith.constant 0 : i32
    %c0_i32_1 = arith.constant 0 : i32
    return %c0_i32, %c0_i32_0 : i32, i32
  }
  func.func @transform_2(%arg0: i32) -> (i32, i32) {
    %c0_i32 = arith.constant 0 : i32
    %c0_i32_0 = arith.constant 0 : i32
    %c0_i32_1 = arith.constant 0 : i32
    return %c0_i32, %c0_i32_0 : i32, i32
  }
  func.func @transform_3(%arg0: i32) -> (i32, i32) {
    %c0_i32 = arith.constant 0 : i32
    %c0_i32_0 = arith.constant 0 : i32
    %c0_i32_1 = arith.constant 0 : i32
    return %c0_i32, %c0_i32_0 : i32, i32
  }
  func.func @transform_4(%arg0: i32) -> (i32, i32) {
    %c0_i32 = arith.constant 0 : i32
    %c0_i32_0 = arith.constant 0 : i32
    return %arg0, %c0_i32 : i32, i32
  }
}

module attributes {stable_mosaic.version = 11 : i64} {
  func.func @lstm_fc_kernel(%arg0: i32, %arg1: memref<8xi32, #tpu.memory_space<smem>>, %arg2: memref<1x64x32xbf16, #tpu.memory_space<vmem>>, %arg3: memref<1x8x1xi32, #tpu.memory_space<vmem>>, %arg4: memref<32x512xbf16, #tpu.memory_space<vmem>>, %arg5: memref<1x512xf32, #tpu.memory_space<vmem>>, %arg6: memref<128x512xbf16, #tpu.memory_space<vmem>>, %arg7: memref<128x2xf32, #tpu.memory_space<vmem>>, %arg8: memref<1x2xf32, #tpu.memory_space<vmem>>, %arg9: memref<1x8x2xf32, #tpu.memory_space<vmem>>, %arg10: memref<64x512xf32, #tpu.memory_space<vmem>>, %arg11: memref<8x128xf32, #tpu.memory_space<vmem>>, %arg12: memref<8x128xf32, #tpu.memory_space<vmem>>) attributes {dimension_semantics = [#tpu.dimension_semantics<parallel>], iteration_bounds = array<i64: 1>, scalar_prefetch = 1 : i64, scratch_operands = 3 : i64, tpu.core_type = #tpu.core_type<tc>, window_params = [{transform_indices = @transform_0, window_bounds = array<i64: 1, 64, 32>}, {transform_indices = @transform_1, window_bounds = array<i64: 1, 8, 1>}, {pipeline_mode = #tpu.pipeline_mode<synchronous>, transform_indices = @transform_2, window_bounds = array<i64: 32, 512>}, {pipeline_mode = #tpu.pipeline_mode<synchronous>, transform_indices = @transform_3, window_bounds = array<i64: 1, 512>}, {pipeline_mode = #tpu.pipeline_mode<synchronous>, transform_indices = @transform_4, window_bounds = array<i64: 128, 512>}, {pipeline_mode = #tpu.pipeline_mode<synchronous>, transform_indices = @transform_5, window_bounds = array<i64: 128, 2>}, {pipeline_mode = #tpu.pipeline_mode<synchronous>, transform_indices = @transform_6, window_bounds = array<i64: 1, 2>}, {transform_indices = @transform_7, window_bounds = array<i64: 1, 8, 2>}]} {
    %c0 = arith.constant 0 : index
    %c0_0 = arith.constant 0 : index
    %c0_1 = arith.constant 0 : index
    %0 = vector.load %arg2[%c0, %c0_0, %c0_1] : memref<1x64x32xbf16, #tpu.memory_space<vmem>>, vector<1x64x32xbf16>
    %1 = vector.shape_cast %0 : vector<1x64x32xbf16> to vector<64x32xbf16>
    %c0_2 = arith.constant 0 : index
    %c0_3 = arith.constant 0 : index
    %2 = vector.load %arg4[%c0_2, %c0_3] : memref<32x512xbf16, #tpu.memory_space<vmem>>, vector<32x512xbf16>
    %cst = arith.constant dense<0.000000e+00> : vector<64x512xf32>
    %3 = tpu.matmul %1, %2, %cst {dimension_numbers = #tpu.dot_dimension_numbers<[1], [0], [0], [1], [0, 0, 1, 1], [], []>} : vector<64x32xbf16>, vector<32x512xbf16>, vector<64x512xf32> -> vector<64x512xf32>
    %c0_4 = arith.constant 0 : index
    %c0_5 = arith.constant 0 : index
    %4 = vector.load %arg5[%c0_4, %c0_5] : memref<1x512xf32, #tpu.memory_space<vmem>>, vector<1x512xf32>
    %5 = vector.broadcast %4 : vector<1x512xf32> to vector<64x512xf32>
    %6 = arith.addf %3, %5 : vector<64x512xf32>
    %c0_6 = arith.constant 0 : index
    %c0_7 = arith.constant 0 : index
    %7 = vector.load %arg10[%c0_6, %c0_7] : memref<64x512xf32, #tpu.memory_space<vmem>>, vector<64x512xf32>
    tpu.vector_store %arg10[%c0_6, %c0_7], %6 {strides = array<i32>} : memref<64x512xf32, #tpu.memory_space<vmem>>, vector<64x512xf32>,
    %cst_8 = arith.constant 0.000000e+00 : f32
    %8 = vector.broadcast %cst_8 : f32 to vector<8x128xf32>
    %c0_9 = arith.constant 0 : index
    %c0_10 = arith.constant 0 : index
    %9 = vector.load %arg11[%c0_9, %c0_10] : memref<8x128xf32, #tpu.memory_space<vmem>>, vector<8x128xf32>
    tpu.vector_store %arg11[%c0_9, %c0_10], %8 {strides = array<i32>} : memref<8x128xf32, #tpu.memory_space<vmem>>, vector<8x128xf32>,
    %cst_11 = arith.constant 0.000000e+00 : f32
    %10 = vector.broadcast %cst_11 : f32 to vector<8x128xf32>
    %c0_12 = arith.constant 0 : index
    %c0_13 = arith.constant 0 : index
    %11 = vector.load %arg12[%c0_12, %c0_13] : memref<8x128xf32, #tpu.memory_space<vmem>>, vector<8x128xf32>
    tpu.vector_store %arg12[%c0_12, %c0_13], %10 {strides = array<i32>} : memref<8x128xf32, #tpu.memory_space<vmem>>, vector<8x128xf32>,
    %c0_14 = arith.constant 0 : index
    %c0_15 = arith.constant 0 : index
    %c0_16 = arith.constant 0 : index
    %12 = vector.load %arg3[%c0_14, %c0_15, %c0_16] : memref<1x8x1xi32, #tpu.memory_space<vmem>>, vector<1x8x1xi32>
    %13 = vector.shape_cast %12 : vector<1x8x1xi32> to vector<8x1xi32>
    %c8_i32 = arith.constant 8 : i32
    %14 = arith.muli %arg0, %c8_i32 : i32
    %15 = arith.index_cast %14 : i32 to index
    %16 = memref.load %arg1[%15] : memref<8xi32, #tpu.memory_space<smem>>
    %c1_i32 = arith.constant 1 : i32
    %17 = arith.addi %14, %c1_i32 : i32
    %18 = arith.index_cast %17 : i32 to index
    %19 = memref.load %arg1[%18] : memref<8xi32, #tpu.memory_space<smem>>
    %20 = arith.maxsi %16, %19 : i32
    %c2_i32 = arith.constant 2 : i32
    %21 = arith.addi %14, %c2_i32 : i32
    %22 = arith.index_cast %21 : i32 to index
    %23 = memref.load %arg1[%22] : memref<8xi32, #tpu.memory_space<smem>>
    %24 = arith.maxsi %20, %23 : i32
    %c3_i32 = arith.constant 3 : i32
    %25 = arith.addi %14, %c3_i32 : i32
    %26 = arith.index_cast %25 : i32 to index
    %27 = memref.load %arg1[%26] : memref<8xi32, #tpu.memory_space<smem>>
    %28 = arith.maxsi %24, %27 : i32
    %c4_i32 = arith.constant 4 : i32
    %29 = arith.addi %14, %c4_i32 : i32
    %30 = arith.index_cast %29 : i32 to index
    %31 = memref.load %arg1[%30] : memref<8xi32, #tpu.memory_space<smem>>
    %32 = arith.maxsi %28, %31 : i32
    %c5_i32 = arith.constant 5 : i32
    %33 = arith.addi %14, %c5_i32 : i32
    %34 = arith.index_cast %33 : i32 to index
    %35 = memref.load %arg1[%34] : memref<8xi32, #tpu.memory_space<smem>>
    %36 = arith.maxsi %32, %35 : i32
    %c6_i32 = arith.constant 6 : i32
    %37 = arith.addi %14, %c6_i32 : i32
    %38 = arith.index_cast %37 : i32 to index
    %39 = memref.load %arg1[%38] : memref<8xi32, #tpu.memory_space<smem>>
    %40 = arith.maxsi %36, %39 : i32
    %c7_i32 = arith.constant 7 : i32
    %41 = arith.addi %14, %c7_i32 : i32
    %42 = arith.index_cast %41 : i32 to index
    %43 = memref.load %arg1[%42] : memref<8xi32, #tpu.memory_space<smem>>
    %44 = arith.maxsi %40, %43 : i32
    %c0_i32 = arith.constant 0 : i32
    %45 = arith.subi %44, %c0_i32 : i32
    %c1_i32_17 = arith.constant 1 : i32
    %c1_i32_18 = arith.constant 1 : i32
    %46 = arith.subi %c1_i32_17, %c1_i32_18 : i32
    %47 = arith.addi %45, %46 : i32
    %c1_i32_19 = arith.constant 1 : i32
    %48 = arith.divsi %47, %c1_i32_19 : i32
    %c1_i32_20 = arith.constant 1 : i32
    %c0_i32_21 = arith.constant 0 : i32
    %c0_i32_22 = arith.constant 0 : i32
    %49 = arith.subi %48, %c0_i32_22 : i32
    %50 = arith.addi %c0_i32_22, %49 : i32
    %c1_i32_23 = arith.constant 1 : i32
    scf.for %arg13 = %c0_i32_22 to %50 step %c1_i32_23  : i32 {
      %60 = arith.muli %arg13, %c1_i32_20 : i32
      %61 = arith.addi %c0_i32_21, %60 : i32
      %c8_i32_34 = arith.constant 8 : i32
      %62 = arith.muli %61, %c8_i32_34 : i32
      %63 = tpu.assume_multiple %62, 8 : i32
      %64 = arith.index_cast %63 : i32 to index
      %c0_35 = arith.constant 0 : index
      %65 = vector.load %arg10[%64, %c0_35] : memref<64x512xf32, #tpu.memory_space<vmem>>, vector<8x512xf32>
      %c0_36 = arith.constant 0 : index
      %c0_37 = arith.constant 0 : index
      %66 = vector.load %arg11[%c0_36, %c0_37] : memref<8x128xf32, #tpu.memory_space<vmem>>, vector<8x128xf32>
      %67 = arith.truncf %66 : vector<8x128xf32> to vector<8x128xbf16>
      %c0_38 = arith.constant 0 : index
      %c0_39 = arith.constant 0 : index
      %68 = vector.load %arg6[%c0_38, %c0_39] : memref<128x512xbf16, #tpu.memory_space<vmem>>, vector<128x512xbf16>
      %cst_40 = arith.constant dense<0.000000e+00> : vector<8x512xf32>
      %69 = tpu.matmul %67, %68, %cst_40 {dimension_numbers = #tpu.dot_dimension_numbers<[1], [0], [0], [1], [0, 0, 1, 1], [], []>} : vector<8x128xbf16>, vector<128x512xbf16>, vector<8x512xf32> -> vector<8x512xf32>
      %70 = arith.addf %65, %69 : vector<8x512xf32>
      %71 = vector.extract_strided_slice %70 {offsets = [0, 0], sizes = [8, 128], strides = [1, 1]} : vector<8x512xf32> to vector<8x128xf32>
      %72 = arith.negf %71 : vector<8x128xf32>
      %73 = math.exp %72 : vector<8x128xf32>
      %cst_41 = arith.constant 1.000000e+00 : f32
      %74 = vector.broadcast %cst_41 : f32 to vector<8x128xf32>
      %75 = arith.addf %74, %73 : vector<8x128xf32>
      %76 = arith.divf %74, %75 : vector<8x128xf32>
      %77 = vector.extract_strided_slice %70 {offsets = [0, 128], sizes = [8, 128], strides = [1, 1]} : vector<8x512xf32> to vector<8x128xf32>
      %78 = arith.negf %77 : vector<8x128xf32>
      %79 = math.exp %78 : vector<8x128xf32>
      %cst_42 = arith.constant 1.000000e+00 : f32
      %80 = vector.broadcast %cst_42 : f32 to vector<8x128xf32>
      %81 = arith.addf %80, %79 : vector<8x128xf32>
      %82 = arith.divf %80, %81 : vector<8x128xf32>
      %83 = vector.extract_strided_slice %70 {offsets = [0, 256], sizes = [8, 128], strides = [1, 1]} : vector<8x512xf32> to vector<8x128xf32>
      %84 = math.tanh %83 : vector<8x128xf32>
      %85 = vector.extract_strided_slice %70 {offsets = [0, 384], sizes = [8, 128], strides = [1, 1]} : vector<8x512xf32> to vector<8x128xf32>
      %86 = arith.negf %85 : vector<8x128xf32>
      %87 = math.exp %86 : vector<8x128xf32>
      %cst_43 = arith.constant 1.000000e+00 : f32
      %88 = vector.broadcast %cst_43 : f32 to vector<8x128xf32>
      %89 = arith.addf %88, %87 : vector<8x128xf32>
      %90 = arith.divf %88, %89 : vector<8x128xf32>
      %c0_44 = arith.constant 0 : index
      %c0_45 = arith.constant 0 : index
      %91 = vector.load %arg12[%c0_44, %c0_45] : memref<8x128xf32, #tpu.memory_space<vmem>>, vector<8x128xf32>
      %92 = arith.mulf %82, %91 : vector<8x128xf32>
      %93 = arith.mulf %76, %84 : vector<8x128xf32>
      %94 = arith.addf %92, %93 : vector<8x128xf32>
      %95 = math.tanh %94 : vector<8x128xf32>
      %96 = arith.mulf %90, %95 : vector<8x128xf32>
      %97 = vector.broadcast %61 : i32 to vector<8x1xi32>
      %98 = arith.cmpi slt, %97, %13 : vector<8x1xi32>
      %c0_46 = arith.constant 0 : index
      %c0_47 = arith.constant 0 : index
      %99 = vector.load %arg11[%c0_46, %c0_47] : memref<8x128xf32, #tpu.memory_space<vmem>>, vector<8x128xf32>
      %100 = vector.shape_cast %98 : vector<8x1xi1> to vector<8x1xi1>
      %101 = vector.broadcast %100 : vector<8x1xi1> to vector<8x128xi1>
      %102 = arith.select %101, %96, %99 : vector<8x128xi1>, vector<8x128xf32>
      %c0_48 = arith.constant 0 : index
      %c0_49 = arith.constant 0 : index
      %103 = vector.load %arg11[%c0_48, %c0_49] : memref<8x128xf32, #tpu.memory_space<vmem>>, vector<8x128xf32>
      tpu.vector_store %arg11[%c0_48, %c0_49], %102 {strides = array<i32>} : memref<8x128xf32, #tpu.memory_space<vmem>>, vector<8x128xf32>,
      %c0_50 = arith.constant 0 : index
      %c0_51 = arith.constant 0 : index
      %104 = vector.load %arg12[%c0_50, %c0_51] : memref<8x128xf32, #tpu.memory_space<vmem>>, vector<8x128xf32>
      %105 = vector.shape_cast %98 : vector<8x1xi1> to vector<8x1xi1>
      %106 = vector.broadcast %105 : vector<8x1xi1> to vector<8x128xi1>
      %107 = arith.select %106, %94, %104 : vector<8x128xi1>, vector<8x128xf32>
      %c0_52 = arith.constant 0 : index
      %c0_53 = arith.constant 0 : index
      %108 = vector.load %arg12[%c0_52, %c0_53] : memref<8x128xf32, #tpu.memory_space<vmem>>, vector<8x128xf32>
      tpu.vector_store %arg12[%c0_52, %c0_53], %107 {strides = array<i32>} : memref<8x128xf32, #tpu.memory_space<vmem>>, vector<8x128xf32>,
    }
    %c0_24 = arith.constant 0 : index
    %c0_25 = arith.constant 0 : index
    %51 = vector.load %arg11[%c0_24, %c0_25] : memref<8x128xf32, #tpu.memory_space<vmem>>, vector<8x128xf32>
    %c0_26 = arith.constant 0 : index
    %c0_27 = arith.constant 0 : index
    %52 = vector.load %arg7[%c0_26, %c0_27] : memref<128x2xf32, #tpu.memory_space<vmem>>, vector<128x2xf32>
    %cst_28 = arith.constant dense<0.000000e+00> : vector<8x2xf32>
    %53 = tpu.matmul %51, %52, %cst_28 {dimension_numbers = #tpu.dot_dimension_numbers<[1], [0], [0], [1], [0, 0, 1, 1], [], []>} : vector<8x128xf32>, vector<128x2xf32>, vector<8x2xf32> -> vector<8x2xf32>
    %c0_29 = arith.constant 0 : index
    %c0_30 = arith.constant 0 : index
    %54 = vector.load %arg8[%c0_29, %c0_30] : memref<1x2xf32, #tpu.memory_space<vmem>>, vector<1x2xf32>
    %55 = vector.broadcast %54 : vector<1x2xf32> to vector<8x2xf32>
    %56 = arith.addf %53, %55 : vector<8x2xf32>
    %c0_31 = arith.constant 0 : index
    %c0_32 = arith.constant 0 : index
    %c0_33 = arith.constant 0 : index
    %57 = vector.load %arg9[%c0_31, %c0_32, %c0_33] : memref<1x8x2xf32, #tpu.memory_space<vmem>>, vector<1x8x2xf32>
    %58 = vector.shape_cast %57 : vector<1x8x2xf32> to vector<8x2xf32>
    %59 = vector.shape_cast %56 : vector<8x2xf32> to vector<1x8x2xf32>
    tpu.vector_store %arg9[%c0_31, %c0_32, %c0_33], %59 {strides = array<i32>} : memref<1x8x2xf32, #tpu.memory_space<vmem>>, vector<1x8x2xf32>,
    return
  }
  func.func @transform_0(%arg0: i32, %arg1: memref<8xi32, #tpu.memory_space<smem>>) -> (i32, i32, i32) {
    %c0_i32 = arith.constant 0 : i32
    %c0_i32_0 = arith.constant 0 : i32
    %c0_i32_1 = arith.constant 0 : i32
    return %arg0, %c0_i32, %c0_i32_0 : i32, i32, i32
  }
  func.func @transform_1(%arg0: i32, %arg1: memref<8xi32, #tpu.memory_space<smem>>) -> (i32, i32, i32) {
    %c0_i32 = arith.constant 0 : i32
    %c0_i32_0 = arith.constant 0 : i32
    %c0_i32_1 = arith.constant 0 : i32
    return %arg0, %c0_i32, %c0_i32_0 : i32, i32, i32
  }
  func.func @transform_2(%arg0: i32, %arg1: memref<8xi32, #tpu.memory_space<smem>>) -> (i32, i32) {
    %c0_i32 = arith.constant 0 : i32
    %c0_i32_0 = arith.constant 0 : i32
    %c0_i32_1 = arith.constant 0 : i32
    return %c0_i32, %c0_i32_0 : i32, i32
  }
  func.func @transform_3(%arg0: i32, %arg1: memref<8xi32, #tpu.memory_space<smem>>) -> (i32, i32) {
    %c0_i32 = arith.constant 0 : i32
    %c0_i32_0 = arith.constant 0 : i32
    %c0_i32_1 = arith.constant 0 : i32
    return %c0_i32, %c0_i32_0 : i32, i32
  }
  func.func @transform_4(%arg0: i32, %arg1: memref<8xi32, #tpu.memory_space<smem>>) -> (i32, i32) {
    %c0_i32 = arith.constant 0 : i32
    %c0_i32_0 = arith.constant 0 : i32
    %c0_i32_1 = arith.constant 0 : i32
    return %c0_i32, %c0_i32_0 : i32, i32
  }
  func.func @transform_5(%arg0: i32, %arg1: memref<8xi32, #tpu.memory_space<smem>>) -> (i32, i32) {
    %c0_i32 = arith.constant 0 : i32
    %c0_i32_0 = arith.constant 0 : i32
    %c0_i32_1 = arith.constant 0 : i32
    return %c0_i32, %c0_i32_0 : i32, i32
  }
  func.func @transform_6(%arg0: i32, %arg1: memref<8xi32, #tpu.memory_space<smem>>) -> (i32, i32) {
    %c0_i32 = arith.constant 0 : i32
    %c0_i32_0 = arith.constant 0 : i32
    %c0_i32_1 = arith.constant 0 : i32
    return %c0_i32, %c0_i32_0 : i32, i32
  }
  func.func @transform_7(%arg0: i32, %arg1: memref<8xi32, #tpu.memory_space<smem>>) -> (i32, i32, i32) {
    %c0_i32 = arith.constant 0 : i32
    %c0_i32_0 = arith.constant 0 : i32
    %c0_i32_1 = arith.constant 0 : i32
    return %arg0, %c0_i32, %c0_i32_0 : i32, i32, i32
  }
}

</mosaic_0001>

<llo_original>
// kernel: anomaly_detection_forward.2
$region0: #{anomaly_detection_forward.2}
  #allocation0 [shape = 'u32[]', space=smem, size = 0x4, offset = 0x4, fixed_abs, tag = 'smem constant byte address 0x4 - core index']
  #allocation1 [shape = 'u32[144,128]{1,0:T(1,128)}', space=vmem, size = 0x12000, scoped, tag = 'internal scratch']
  %s0 = inlined_call_operand.vmem [shape: bf16[4096,36], index: 0, kind: input, shape index: {}]
  %s1 = inlined_call_operand.vmem [shape: bf16[36,32], index: 1, kind: input, shape index: {}]
  %s2 = inlined_call_operand.vmem [shape: f32[1,32], index: 2, kind: input, shape index: {}]
  %s3 = inlined_call_operand.vmem [shape: bf16[8,2048], index: 3, kind: input, shape index: {}]
  %s4 = inlined_call_operand.vmem [shape: bf16[16,32], index: 4, kind: output, shape index: {}]
  %s5 = sld [smem:[#allocation0]]
  $region49: #{anomaly_detection_forward.2} parent=0
    _
  %s7 = ssub.s32 1, %s5
  %s8 = scalar_select 0, %s7, %s5
  loop: start=0, step=1, limit=4
  $region2: #{anomaly_detection_forward.2} parent=0 // loop_pre_header
    _
  $region3: #{anomaly_detection_forward.2} parent=0 // loop_header
    %s10 = sphi 0, %s14
    %p11 = scmp.ge.s32.totalorder %s10, 4
    %s20 = sphi 0, %s22
    %s23 = sphi 0, %s20
    %s24 = sphi 0, %s23
    %s40 = sphi 0, %s24
    %s44 = sphi 0, %s44
    %s46 = sphi 0, %s44
    %s47 = sphi 0, %s46
    %s61 = sphi 0, %s47
    %s65 = sphi 0, %s65
    %s67 = sphi 0, %s65
    %s68 = sphi 0, %s67
    %s82 = sphi 0, %s68
    %s86 = sphi 0, %s86
    %s88 = sphi 0, %s86
    %s89 = sphi 0, %s88
    %s103 = sphi 0, %s89
    %s109 = sphi 0, %s111
    %s112 = sphi 0, %s109
    %s113 = sphi 0, %s112
    %s129 = sphi 0, %s113
  $region4: #{anomaly_detection_forward.2} parent=0 // loop_header_branch
    %13 = sbr.rel (%p11) target = $region8
  $region5: #{anomaly_detection_forward.2} parent=0 // loop_body
    %s15 = ssub.s32 %s10, 1
    %s16 = ssub.s32 %s10, 2
    %s17 = sadd.s32 %s10, 1
    %s18 = ssub.s32 %s10, %s17
    %p19 = scmp.eq.s32.totalorder %s18, 0
    %s21 = sadd.s32 %s20, 1
    %s22 = scalar_select %p19, %s20, %s21
    %p25 = pneg %p19
    %p26 = scmp.eq.s32.totalorder %s10, 1
    %p27 = por %p25, %p26
    %p28 = scmp.ne.s32.totalorder %s20, %s23
    %p29 = scmp.eq.s32.totalorder %s10, 0
    %p30 = por %p28, %p29
    %p31 = scmp.ne.s32.totalorder %s20, %s23
    %p32 = scmp.eq.s32.totalorder %s15, 1
    %p33 = por %p31, %p32
    %p34 = scmp.ne.s32.totalorder %s23, %s24
    %p35 = scmp.eq.s32.totalorder %s15, 0
    %p36 = por %p34, %p35
    %p37 = scmp.ne.s32.totalorder %s23, %s24
    %p38 = scmp.eq.s32.totalorder %s16, 1
    %p39 = por %p37, %p38
    %p41 = scmp.ne.s32.totalorder %s24, %s40
    %p42 = scmp.eq.s32.totalorder %s16, 0
    %p43 = por %p41, %p42
    %s45 = sadd.s32 %s44, 1
    %p48 = scmp.eq.s32.totalorder %s10, 1
    %p49 = scmp.ne.s32.totalorder %s44, %s46
    %p50 = scmp.eq.s32.totalorder %s10, 0
    %p51 = por %p49, %p50
    %p52 = scmp.ne.s32.totalorder %s44, %s46
    %p53 = scmp.eq.s32.totalorder %s15, 1
    %p54 = por %p52, %p53
    %p55 = scmp.ne.s32.totalorder %s46, %s47
    %p56 = scmp.eq.s32.totalorder %s15, 0
    %p57 = por %p55, %p56
    %p58 = scmp.ne.s32.totalorder %s46, %s47
    %p59 = scmp.eq.s32.totalorder %s16, 1
    %p60 = por %p58, %p59
    %p62 = scmp.ne.s32.totalorder %s47, %s61
    %p63 = scmp.eq.s32.totalorder %s16, 0
    %p64 = por %p62, %p63
    %s66 = sadd.s32 %s65, 1
    %p69 = scmp.eq.s32.totalorder %s10, 1
    %p70 = scmp.ne.s32.totalorder %s65, %s67
    %p71 = scmp.eq.s32.totalorder %s10, 0
    %p72 = por %p70, %p71
    %p73 = scmp.ne.s32.totalorder %s65, %s67
    %p74 = scmp.eq.s32.totalorder %s15, 1
    %p75 = por %p73, %p74
    %p76 = scmp.ne.s32.totalorder %s67, %s68
    %p77 = scmp.eq.s32.totalorder %s15, 0
    %p78 = por %p76, %p77
    %p79 = scmp.ne.s32.totalorder %s67, %s68
    %p80 = scmp.eq.s32.totalorder %s16, 1
    %p81 = por %p79, %p80
    %p83 = scmp.ne.s32.totalorder %s68, %s82
    %p84 = scmp.eq.s32.totalorder %s16, 0
    %p85 = por %p83, %p84
    %s87 = sadd.s32 %s86, 1
    %p90 = scmp.eq.s32.totalorder %s10, 1
    %p91 = scmp.ne.s32.totalorder %s86, %s88
    %p92 = scmp.eq.s32.totalorder %s10, 0
    %p93 = por %p91, %p92
    %p94 = scmp.ne.s32.totalorder %s86, %s88
    %p95 = scmp.eq.s32.totalorder %s15, 1
    %p96 = por %p94, %p95
    %p97 = scmp.ne.s32.totalorder %s88, %s89
    %p98 = scmp.eq.s32.totalorder %s15, 0
    %p99 = por %p97, %p98
    %p100 = scmp.ne.s32.totalorder %s88, %s89
    %p101 = scmp.eq.s32.totalorder %s16, 1
    %p102 = por %p100, %p101
    %p104 = scmp.ne.s32.totalorder %s89, %s103
    %p105 = scmp.eq.s32.totalorder %s16, 0
    %p106 = por %p104, %p105
    %s107 = ssub.s32 %s10, %s17
    %p108 = scmp.eq.s32.totalorder %s107, 0
    %s110 = sadd.s32 %s109, 1
    %s111 = scalar_select %p108, %s109, %s110
    %p114 = pneg %p108
    %p115 = scmp.eq.s32.totalorder %s10, 1
    %p116 = por %p114, %p115
    %p117 = scmp.ne.s32.totalorder %s109, %s112
    %p118 = scmp.eq.s32.totalorder %s10, 0
    %p119 = por %p117, %p118
    %p120 = scmp.ne.s32.totalorder %s109, %s112
    %p121 = scmp.eq.s32.totalorder %s15, 1
    %p122 = por %p120, %p121
    %p123 = scmp.ne.s32.totalorder %s112, %s113
    %p124 = scmp.eq.s32.totalorder %s15, 0
    %p125 = por %p123, %p124
    %p126 = scmp.ne.s32.totalorder %s112, %s113
    %p127 = scmp.eq.s32.totalorder %s16, 1
    %p128 = por %p126, %p127
    %p130 = scmp.ne.s32.totalorder %s113, %s129
    %p131 = scmp.eq.s32.totalorder %s16, 0
    %p132 = por %p130, %p131
    %p133 = scmp.le.s32.totalorder 1, %s10
    %p134 = scmp.lt.s32.totalorder %s10, 3
    %p135 = pnand %p133, %p134
    %p136 = pneg %p135
    // Predicated region
    $region9: #{anomaly_detection_forward.2} parent=5 // pred_check
      _
    $region10: #{anomaly_detection_forward.2} parent=5 // pred_check_branch
      %138 = sbr.rel (%p135) target = $region12
    $region11: #{anomaly_detection_forward.2} parent=5 // pred_region
      %s139 = ssub.s32 %s10, 1
      // Predicated region
      $region13: #{anomaly_detection_forward.2} parent=11 // pred_check
        %p140 = pneg %p57
      $region14: #{anomaly_detection_forward.2} parent=11 // pred_check_branch
        %142 = sbr.rel (%p140) target = $region16
      $region15: #{anomaly_detection_forward.2} parent=11 // pred_region
        _
      $region16: #{anomaly_detection_forward.2} parent=11 // pred_fallthru
        _
      // Predicated region
      $region17: #{anomaly_detection_forward.2} parent=11 // pred_check
        %p143 = pneg %p78
      $region18: #{anomaly_detection_forward.2} parent=11 // pred_check_branch
        %145 = sbr.rel (%p143) target = $region20
      $region19: #{anomaly_detection_forward.2} parent=11 // pred_region
        _
      $region20: #{anomaly_detection_forward.2} parent=11 // pred_fallthru
        _
      // Predicated region
      $region21: #{anomaly_detection_forward.2} parent=11 // pred_check
        %p146 = pneg %p99
      $region22: #{anomaly_detection_forward.2} parent=11 // pred_check_branch
        %148 = sbr.rel (%p146) target = $region24
      $region23: #{anomaly_detection_forward.2} parent=11 // pred_region
        _
      $region24: #{anomaly_detection_forward.2} parent=11 // pred_fallthru
        _
    $region12: #{anomaly_detection_forward.2} parent=5 // pred_fallthru
      _
    %p149 = scmp.lt.s32.totalorder %s10, 2
    // Predicated region
    $region25: #{anomaly_detection_forward.2} parent=5 // pred_check
      %p150 = pneg %p149
    $region26: #{anomaly_detection_forward.2} parent=5 // pred_check_branch
      %152 = sbr.rel (%p150) target = $region28
    $region27: #{anomaly_detection_forward.2} parent=5 // pred_region
      // Predicated region
      $region29: #{anomaly_detection_forward.2} parent=27 // pred_check
        %p153 = pneg %p30
      $region30: #{anomaly_detection_forward.2} parent=27 // pred_check_branch
        %155 = sbr.rel (%p153) target = $region32
      $region31: #{anomaly_detection_forward.2} parent=27 // pred_region
        %s156 = smul.u32 256, %s10
        %p157 = scmp.lt.s32.totalorder %s156, 511
        %s158 = scalar_select %p157, %s156, 511
        %s159 = smul.addr %s158, 4
        %s160 = scalar_lea.vmem %s0, %s159
        %s161 = smul.u32 256, %s10
      $region32: #{anomaly_detection_forward.2} parent=27 // pred_fallthru
        _
    $region28: #{anomaly_detection_forward.2} parent=5 // pred_fallthru
      _
    %p162 = scmp.le.s32.totalorder 1, %s10
    %p163 = scmp.lt.s32.totalorder %s10, 3
    %p164 = pnand %p162, %p163
    %p165 = pneg %p164
    // Predicated region
    $region33: #{anomaly_detection_forward.2} parent=5 // pred_check
      _
    $region34: #{anomaly_detection_forward.2} parent=5 // pred_check_branch
      %167 = sbr.rel (%p164) target = $region36
    $region35: #{anomaly_detection_forward.2} parent=5 // pred_region
      %s168 = ssub.s32 %s10, 1
      %s169 = smul.u32 256, %s15
      %p170 = scmp.lt.s32.totalorder %s169, 511
      %s171 = scalar_select %p170, %s169, 511
      %s172 = smul.addr %s171, 4
      %s173 = scalar_lea.vmem %s0, %s172
      %p174 = pneg %p36
      %p175 = pneg %p33
      %p176 = pneg %p57
      %p177 = pneg %p54
      %p178 = pneg %p78
      %p179 = pneg %p75
      %p180 = pneg %p99
      %p181 = pneg %p96
      %p182 = pneg %p125
      %p183 = pneg %p122
      %p184 = scmp.lt.s32.totalorder %s15, 1
      %s185 = scalar_select %p184, %s15, 1
      %s186 = smul.addr %s185, 4
      %s187 = scalar_lea.vmem %s4, %s186
      %s188 = smul.u32 256, %s15
      %p189 = scmp.lt.s32.totalorder %s188, 511
      %s190 = scalar_select %p189, %s188, 511
      %s191 = smul.addr %s190, 4
      %s192 = scalar_lea.vmem %s0, %s191
      %s193 = smul.u32 256, %s15
      %p194 = scmp.lt.s32.totalorder %s15, 1
      %s195 = scalar_select %p194, %s15, 1
      %s196 = smul.addr %s195, 4
      %s197 = scalar_lea.vmem %s4, %s196
      %v199 = vld [vmem:[%s192] sm:$0xf]
      %v200 = vld [vmem:[%s192 + $0x4] sm:$0xf]
      %v201 = vld [vmem:[%s192 + $0x8] sm:$0xf]
      %v202 = vld [vmem:[%s192 + $0xc] sm:$0xf]
      %v203 = vld [vmem:[%s192 + $0x10] sm:$0xf]
      %v204 = vld [vmem:[%s192 + $0x14] sm:$0xf]
      %v205 = vld [vmem:[%s192 + $0x18] sm:$0xf]
      %v206 = vld [vmem:[%s192 + $0x1c] sm:$0xf]
      %v207 = vld [vmem:[%s192 + $0x20] sm:$0xf]
      %v208 = vld [vmem:[%s192 + $0x24] sm:$0xf]
      %v209 = vld [vmem:[%s192 + $0x28] sm:$0xf]
      %v210 = vld [vmem:[%s192 + $0x2c] sm:$0xf]
      %v211 = vld [vmem:[%s192 + $0x30] sm:$0xf]
      %v212 = vld [vmem:[%s192 + $0x34] sm:$0xf]
      %v213 = vld [vmem:[%s192 + $0x38] sm:$0xf]
      %v214 = vld [vmem:[%s192 + $0x3c] sm:$0xf]
      %v215 = vld [vmem:[%s192 + $0x40] sm:$0xf]
      %v216 = vld [vmem:[%s192 + $0x44] sm:$0xf]
      %v217 = vld [vmem:[%s192 + $0x48] sm:$0xf]
      %v218 = vld [vmem:[%s192 + $0x4c] sm:$0xf]
      %v219 = vld [vmem:[%s192 + $0x50] sm:$0xf]
      %v220 = vld [vmem:[%s192 + $0x54] sm:$0xf]
      %v221 = vld [vmem:[%s192 + $0x58] sm:$0xf]
      %v222 = vld [vmem:[%s192 + $0x5c] sm:$0xf]
      %v223 = vld [vmem:[%s192 + $0x60] sm:$0xf]
      %v224 = vld [vmem:[%s192 + $0x64] sm:$0xf]
      %v225 = vld [vmem:[%s192 + $0x68] sm:$0xf]
      %v226 = vld [vmem:[%s192 + $0x6c] sm:$0xf]
      %v227 = vld [vmem:[%s192 + $0x70] sm:$0xf]
      %v228 = vld [vmem:[%s192 + $0x74] sm:$0xf]
      %v229 = vld [vmem:[%s192 + $0x78] sm:$0xf]
      %v230 = vld [vmem:[%s192 + $0x7c] sm:$0xf]
      %v231 = vld [vmem:[%s192 + $0x80] sm:$0xf]
      %v232 = vld [vmem:[%s192 + $0x84] sm:$0xf]
      %v233 = vld [vmem:[%s192 + $0x88] sm:$0xf]
      %v234 = vld [vmem:[%s192 + $0x8c] sm:$0xf]
      %v235 = vld [vmem:[%s192 + $0x90] sm:$0xf]
      %v236 = vld [vmem:[%s192 + $0x94] sm:$0xf]
      %v237 = vld [vmem:[%s192 + $0x98] sm:$0xf]
      %v238 = vld [vmem:[%s192 + $0x9c] sm:$0xf]
      %v239 = vld [vmem:[%s192 + $0xa0] sm:$0xf]
      %v240 = vld [vmem:[%s192 + $0xa4] sm:$0xf]
      %v241 = vld [vmem:[%s192 + $0xa8] sm:$0xf]
      %v242 = vld [vmem:[%s192 + $0xac] sm:$0xf]
      %v243 = vld [vmem:[%s192 + $0xb0] sm:$0xf]
      %v244 = vld [vmem:[%s192 + $0xb4] sm:$0xf]
      %v245 = vld [vmem:[%s192 + $0xb8] sm:$0xf]
      %v246 = vld [vmem:[%s192 + $0xbc] sm:$0xf]
      %v247 = vld [vmem:[%s192 + $0xc0] sm:$0xf]
      %v248 = vld [vmem:[%s192 + $0xc4] sm:$0xf]
      %v249 = vld [vmem:[%s192 + $0xc8] sm:$0xf]
      %v250 = vld [vmem:[%s192 + $0xcc] sm:$0xf]
      %v251 = vld [vmem:[%s192 + $0xd0] sm:$0xf]
      %v252 = vld [vmem:[%s192 + $0xd4] sm:$0xf]
      %v253 = vld [vmem:[%s192 + $0xd8] sm:$0xf]
      %v254 = vld [vmem:[%s192 + $0xdc] sm:$0xf]
      %v255 = vld [vmem:[%s192 + $0xe0] sm:$0xf]
      %v256 = vld [vmem:[%s192 + $0xe4] sm:$0xf]
      %v257 = vld [vmem:[%s192 + $0xe8] sm:$0xf]
      %v258 = vld [vmem:[%s192 + $0xec] sm:$0xf]
      %v259 = vld [vmem:[%s192 + $0xf0] sm:$0xf]
      %v260 = vld [vmem:[%s192 + $0xf4] sm:$0xf]
      %v261 = vld [vmem:[%s192 + $0xf8] sm:$0xf]
      %v262 = vld [vmem:[%s192 + $0xfc] sm:$0xf]
      %v263 = vld [vmem:[%s192 + $0x100] sm:$0xf]
      %v264 = vld [vmem:[%s192 + $0x104] sm:$0xf]
      %v265 = vld [vmem:[%s192 + $0x108] sm:$0xf]
      %v266 = vld [vmem:[%s192 + $0x10c] sm:$0xf]
      %v267 = vld [vmem:[%s192 + $0x110] sm:$0xf]
      %v268 = vld [vmem:[%s192 + $0x114] sm:$0xf]
      %v269 = vld [vmem:[%s192 + $0x118] sm:$0xf]
      %v270 = vld [vmem:[%s192 + $0x11c] sm:$0xf]
      %v271 = vld [vmem:[%s192 + $0x120] sm:$0xf]
      %v272 = vld [vmem:[%s192 + $0x124] sm:$0xf]
      %v273 = vld [vmem:[%s192 + $0x128] sm:$0xf]
      %v274 = vld [vmem:[%s192 + $0x12c] sm:$0xf]
      %v275 = vld [vmem:[%s192 + $0x130] sm:$0xf]
      %v276 = vld [vmem:[%s192 + $0x134] sm:$0xf]
      %v277 = vld [vmem:[%s192 + $0x138] sm:$0xf]
      %v278 = vld [vmem:[%s192 + $0x13c] sm:$0xf]
      %v279 = vld [vmem:[%s192 + $0x140] sm:$0xf]
      %v280 = vld [vmem:[%s192 + $0x144] sm:$0xf]
      %v281 = vld [vmem:[%s192 + $0x148] sm:$0xf]
      %v282 = vld [vmem:[%s192 + $0x14c] sm:$0xf]
      %v283 = vld [vmem:[%s192 + $0x150] sm:$0xf]
      %v284 = vld [vmem:[%s192 + $0x154] sm:$0xf]
      %v285 = vld [vmem:[%s192 + $0x158] sm:$0xf]
      %v286 = vld [vmem:[%s192 + $0x15c] sm:$0xf]
      %v287 = vld [vmem:[%s192 + $0x160] sm:$0xf]
      %v288 = vld [vmem:[%s192 + $0x164] sm:$0xf]
      %v289 = vld [vmem:[%s192 + $0x168] sm:$0xf]
      %v290 = vld [vmem:[%s192 + $0x16c] sm:$0xf]
      %v291 = vld [vmem:[%s192 + $0x170] sm:$0xf]
      %v292 = vld [vmem:[%s192 + $0x174] sm:$0xf]
      %v293 = vld [vmem:[%s192 + $0x178] sm:$0xf]
      %v294 = vld [vmem:[%s192 + $0x17c] sm:$0xf]
      %v295 = vld [vmem:[%s192 + $0x180] sm:$0xf]
      %v296 = vld [vmem:[%s192 + $0x184] sm:$0xf]
      %v297 = vld [vmem:[%s192 + $0x188] sm:$0xf]
      %v298 = vld [vmem:[%s192 + $0x18c] sm:$0xf]
      %v299 = vld [vmem:[%s192 + $0x190] sm:$0xf]
      %v300 = vld [vmem:[%s192 + $0x194] sm:$0xf]
      %v301 = vld [vmem:[%s192 + $0x198] sm:$0xf]
      %v302 = vld [vmem:[%s192 + $0x19c] sm:$0xf]
      %v303 = vld [vmem:[%s192 + $0x1a0] sm:$0xf]
      %v304 = vld [vmem:[%s192 + $0x1a4] sm:$0xf]
      %v305 = vld [vmem:[%s192 + $0x1a8] sm:$0xf]
      %v306 = vld [vmem:[%s192 + $0x1ac] sm:$0xf]
      %v307 = vld [vmem:[%s192 + $0x1b0] sm:$0xf]
      %v308 = vld [vmem:[%s192 + $0x1b4] sm:$0xf]
      %v309 = vld [vmem:[%s192 + $0x1b8] sm:$0xf]
      %v310 = vld [vmem:[%s192 + $0x1bc] sm:$0xf]
      %v311 = vld [vmem:[%s192 + $0x1c0] sm:$0xf]
      %v312 = vld [vmem:[%s192 + $0x1c4] sm:$0xf]
      %v313 = vld [vmem:[%s192 + $0x1c8] sm:$0xf]
      %v314 = vld [vmem:[%s192 + $0x1cc] sm:$0xf]
      %v315 = vld [vmem:[%s192 + $0x1d0] sm:$0xf]
      %v316 = vld [vmem:[%s192 + $0x1d4] sm:$0xf]
      %v317 = vld [vmem:[%s192 + $0x1d8] sm:$0xf]
      %v318 = vld [vmem:[%s192 + $0x1dc] sm:$0xf]
      %v319 = vld [vmem:[%s192 + $0x1e0] sm:$0xf]
      %v320 = vld [vmem:[%s192 + $0x1e4] sm:$0xf]
      %v321 = vld [vmem:[%s192 + $0x1e8] sm:$0xf]
      %v322 = vld [vmem:[%s192 + $0x1ec] sm:$0xf]
      %v323 = vld [vmem:[%s192 + $0x1f0] sm:$0xf]
      %v324 = vld [vmem:[%s192 + $0x1f4] sm:$0xf]
      %v325 = vld [vmem:[%s192 + $0x1f8] sm:$0xf]
      %v326 = vld [vmem:[%s192 + $0x1fc] sm:$0xf]
      %v327 = vld [vmem:[%s192 + $0x200] sm:$0xf]
      %v328 = vld [vmem:[%s192 + $0x204] sm:$0xf]
      %v329 = vld [vmem:[%s192 + $0x208] sm:$0xf]
      %v330 = vld [vmem:[%s192 + $0x20c] sm:$0xf]
      %v331 = vld [vmem:[%s192 + $0x210] sm:$0xf]
      %v332 = vld [vmem:[%s192 + $0x214] sm:$0xf]
      %v333 = vld [vmem:[%s192 + $0x218] sm:$0xf]
      %v334 = vld [vmem:[%s192 + $0x21c] sm:$0xf]
      %v335 = vld [vmem:[%s192 + $0x220] sm:$0xf]
      %v336 = vld [vmem:[%s192 + $0x224] sm:$0xf]
      %v337 = vld [vmem:[%s192 + $0x228] sm:$0xf]
      %v338 = vld [vmem:[%s192 + $0x22c] sm:$0xf]
      %v339 = vld [vmem:[%s192 + $0x230] sm:$0xf]
      %v340 = vld [vmem:[%s192 + $0x234] sm:$0xf]
      %v341 = vld [vmem:[%s192 + $0x238] sm:$0xf]
      %v342 = vld [vmem:[%s192 + $0x23c] sm:$0xf]
      %v343 = vld [vmem:[%s192 + $0x240] sm:$0xf]
      %v344 = vld [vmem:[%s192 + $0x244] sm:$0xf]
      %v345 = vld [vmem:[%s192 + $0x248] sm:$0xf]
      %v346 = vld [vmem:[%s192 + $0x24c] sm:$0xf]
      %v347 = vld [vmem:[%s192 + $0x250] sm:$0xf]
      %v348 = vld [vmem:[%s192 + $0x254] sm:$0xf]
      %v349 = vld [vmem:[%s192 + $0x258] sm:$0xf]
      %v350 = vld [vmem:[%s192 + $0x25c] sm:$0xf]
      %v351 = vld [vmem:[%s192 + $0x260] sm:$0xf]
      %v352 = vld [vmem:[%s192 + $0x264] sm:$0xf]
      %v353 = vld [vmem:[%s192 + $0x268] sm:$0xf]
      %v354 = vld [vmem:[%s192 + $0x26c] sm:$0xf]
      %v355 = vld [vmem:[%s192 + $0x270] sm:$0xf]
      %v356 = vld [vmem:[%s192 + $0x274] sm:$0xf]
      %v357 = vld [vmem:[%s192 + $0x278] sm:$0xf]
      %v358 = vld [vmem:[%s192 + $0x27c] sm:$0xf]
      %v359 = vld [vmem:[%s192 + $0x280] sm:$0xf]
      %v360 = vld [vmem:[%s192 + $0x284] sm:$0xf]
      %v361 = vld [vmem:[%s192 + $0x288] sm:$0xf]
      %v362 = vld [vmem:[%s192 + $0x28c] sm:$0xf]
      %v363 = vld [vmem:[%s192 + $0x290] sm:$0xf]
      %v364 = vld [vmem:[%s192 + $0x294] sm:$0xf]
      %v365 = vld [vmem:[%s192 + $0x298] sm:$0xf]
      %v366 = vld [vmem:[%s192 + $0x29c] sm:$0xf]
      %v367 = vld [vmem:[%s192 + $0x2a0] sm:$0xf]
      %v368 = vld [vmem:[%s192 + $0x2a4] sm:$0xf]
      %v369 = vld [vmem:[%s192 + $0x2a8] sm:$0xf]
      %v370 = vld [vmem:[%s192 + $0x2ac] sm:$0xf]
      %v371 = vld [vmem:[%s192 + $0x2b0] sm:$0xf]
      %v372 = vld [vmem:[%s192 + $0x2b4] sm:$0xf]
      %v373 = vld [vmem:[%s192 + $0x2b8] sm:$0xf]
      %v374 = vld [vmem:[%s192 + $0x2bc] sm:$0xf]
      %v375 = vld [vmem:[%s192 + $0x2c0] sm:$0xf]
      %v376 = vld [vmem:[%s192 + $0x2c4] sm:$0xf]
      %v377 = vld [vmem:[%s192 + $0x2c8] sm:$0xf]
      %v378 = vld [vmem:[%s192 + $0x2cc] sm:$0xf]
      %v379 = vld [vmem:[%s192 + $0x2d0] sm:$0xf]
      %v380 = vld [vmem:[%s192 + $0x2d4] sm:$0xf]
      %v381 = vld [vmem:[%s192 + $0x2d8] sm:$0xf]
      %v382 = vld [vmem:[%s192 + $0x2dc] sm:$0xf]
      %v383 = vld [vmem:[%s192 + $0x2e0] sm:$0xf]
      %v384 = vld [vmem:[%s192 + $0x2e4] sm:$0xf]
      %v385 = vld [vmem:[%s192 + $0x2e8] sm:$0xf]
      %v386 = vld [vmem:[%s192 + $0x2ec] sm:$0xf]
      %v387 = vld [vmem:[%s192 + $0x2f0] sm:$0xf]
      %v388 = vld [vmem:[%s192 + $0x2f4] sm:$0xf]
      %v389 = vld [vmem:[%s192 + $0x2f8] sm:$0xf]
      %v390 = vld [vmem:[%s192 + $0x2fc] sm:$0xf]
      %v391 = vld [vmem:[%s192 + $0x300] sm:$0xf]
      %v392 = vld [vmem:[%s192 + $0x304] sm:$0xf]
      %v393 = vld [vmem:[%s192 + $0x308] sm:$0xf]
      %v394 = vld [vmem:[%s192 + $0x30c] sm:$0xf]
      %v395 = vld [vmem:[%s192 + $0x310] sm:$0xf]
      %v396 = vld [vmem:[%s192 + $0x314] sm:$0xf]
      %v397 = vld [vmem:[%s192 + $0x318] sm:$0xf]
      %v398 = vld [vmem:[%s192 + $0x31c] sm:$0xf]
      %v399 = vld [vmem:[%s192 + $0x320] sm:$0xf]
      %v400 = vld [vmem:[%s192 + $0x324] sm:$0xf]
      %v401 = vld [vmem:[%s192 + $0x328] sm:$0xf]
      %v402 = vld [vmem:[%s192 + $0x32c] sm:$0xf]
      %v403 = vld [vmem:[%s192 + $0x330] sm:$0xf]
      %v404 = vld [vmem:[%s192 + $0x334] sm:$0xf]
      %v405 = vld [vmem:[%s192 + $0x338] sm:$0xf]
      %v406 = vld [vmem:[%s192 + $0x33c] sm:$0xf]
      %v407 = vld [vmem:[%s192 + $0x340] sm:$0xf]
      %v408 = vld [vmem:[%s192 + $0x344] sm:$0xf]
      %v409 = vld [vmem:[%s192 + $0x348] sm:$0xf]
      %v410 = vld [vmem:[%s192 + $0x34c] sm:$0xf]
      %v411 = vld [vmem:[%s192 + $0x350] sm:$0xf]
      %v412 = vld [vmem:[%s192 + $0x354] sm:$0xf]
      %v413 = vld [vmem:[%s192 + $0x358] sm:$0xf]
      %v414 = vld [vmem:[%s192 + $0x35c] sm:$0xf]
      %v415 = vld [vmem:[%s192 + $0x360] sm:$0xf]
      %v416 = vld [vmem:[%s192 + $0x364] sm:$0xf]
      %v417 = vld [vmem:[%s192 + $0x368] sm:$0xf]
      %v418 = vld [vmem:[%s192 + $0x36c] sm:$0xf]
      %v419 = vld [vmem:[%s192 + $0x370] sm:$0xf]
      %v420 = vld [vmem:[%s192 + $0x374] sm:$0xf]
      %v421 = vld [vmem:[%s192 + $0x378] sm:$0xf]
      %v422 = vld [vmem:[%s192 + $0x37c] sm:$0xf]
      %v423 = vld [vmem:[%s192 + $0x380] sm:$0xf]
      %v424 = vld [vmem:[%s192 + $0x384] sm:$0xf]
      %v425 = vld [vmem:[%s192 + $0x388] sm:$0xf]
      %v426 = vld [vmem:[%s192 + $0x38c] sm:$0xf]
      %v427 = vld [vmem:[%s192 + $0x390] sm:$0xf]
      %v428 = vld [vmem:[%s192 + $0x394] sm:$0xf]
      %v429 = vld [vmem:[%s192 + $0x398] sm:$0xf]
      %v430 = vld [vmem:[%s192 + $0x39c] sm:$0xf]
      %v431 = vld [vmem:[%s192 + $0x3a0] sm:$0xf]
      %v432 = vld [vmem:[%s192 + $0x3a4] sm:$0xf]
      %v433 = vld [vmem:[%s192 + $0x3a8] sm:$0xf]
      %v434 = vld [vmem:[%s192 + $0x3ac] sm:$0xf]
      %v435 = vld [vmem:[%s192 + $0x3b0] sm:$0xf]
      %v436 = vld [vmem:[%s192 + $0x3b4] sm:$0xf]
      %v437 = vld [vmem:[%s192 + $0x3b8] sm:$0xf]
      %v438 = vld [vmem:[%s192 + $0x3bc] sm:$0xf]
      %v439 = vld [vmem:[%s192 + $0x3c0] sm:$0xf]
      %v440 = vld [vmem:[%s192 + $0x3c4] sm:$0xf]
      %v441 = vld [vmem:[%s192 + $0x3c8] sm:$0xf]
      %v442 = vld [vmem:[%s192 + $0x3cc] sm:$0xf]
      %v443 = vld [vmem:[%s192 + $0x3d0] sm:$0xf]
      %v444 = vld [vmem:[%s192 + $0x3d4] sm:$0xf]
      %v445 = vld [vmem:[%s192 + $0x3d8] sm:$0xf]
      %v446 = vld [vmem:[%s192 + $0x3dc] sm:$0xf]
      %v447 = vld [vmem:[%s192 + $0x3e0] sm:$0xf]
      %v448 = vld [vmem:[%s192 + $0x3e4] sm:$0xf]
      %v449 = vld [vmem:[%s192 + $0x3e8] sm:$0xf]
      %v450 = vld [vmem:[%s192 + $0x3ec] sm:$0xf]
      %v451 = vld [vmem:[%s192 + $0x3f0] sm:$0xf]
      %v452 = vld [vmem:[%s192 + $0x3f4] sm:$0xf]
      %v453 = vld [vmem:[%s192 + $0x3f8] sm:$0xf]
      %v454 = vld [vmem:[%s192 + $0x3fc] sm:$0xf]
      %v455 = vld [vmem:[%s1] sm:$0xf]
      %v456 = vld [vmem:[%s1 + $0x4] sm:$0xf]
      %v457 = vld [vmem:[%s1 + $0x8] sm:$0xf]
      %v458 = vld [vmem:[%s1 + $0xc] sm:$0xf]
      %v459 = vld [vmem:[%s1 + $0x10] sm:$0x3]
      %v460 = vld [vmem:[%s2] sm:$0x1]
      %v462 = vlaneseq
      %v463 = vshrl.u32 %v462, 7
      %v464 = vsub.s32 0, %v463
      %v465 = vrot.slane %v460, %v464
      %v723 = vunpack.c.l.b16 %v199
      %v724 = vunpack.c.l.b16 %v200
      %v725 = vunpack.c.l.b16 %v201
      %v726 = vunpack.c.l.b16 %v202
      %v727 = vunpack.c.l.b16 %v203
      %v728 = vunpack.c.l.b16 %v204
      %v729 = vunpack.c.l.b16 %v205
      %v730 = vunpack.c.l.b16 %v206
      %v731 = vunpack.c.l.b16 %v207
      %v732 = vunpack.c.l.b16 %v208
      %v733 = vunpack.c.l.b16 %v209
      %v734 = vunpack.c.l.b16 %v210
      %v735 = vunpack.c.l.b16 %v211
      %v736 = vunpack.c.l.b16 %v212
      %v737 = vunpack.c.l.b16 %v213
      %v738 = vunpack.c.l.b16 %v214
      %v739 = vunpack.c.l.b16 %v215
      %v740 = vunpack.c.l.b16 %v216
      %v741 = vunpack.c.l.b16 %v217
      %v742 = vunpack.c.l.b16 %v218
      %v743 = vunpack.c.l.b16 %v219
      %v744 = vunpack.c.l.b16 %v220
      %v745 = vunpack.c.l.b16 %v221
      %v746 = vunpack.c.l.b16 %v222
      %v747 = vunpack.c.l.b16 %v223
      %v748 = vunpack.c.l.b16 %v224
      %v749 = vunpack.c.l.b16 %v225
      %v750 = vunpack.c.l.b16 %v226
      %v751 = vunpack.c.l.b16 %v227
      %v752 = vunpack.c.l.b16 %v228
      %v753 = vunpack.c.l.b16 %v229
      %v754 = vunpack.c.l.b16 %v230
      %v755 = vunpack.c.l.b16 %v231
      %v756 = vunpack.c.l.b16 %v232
      %v757 = vunpack.c.l.b16 %v233
      %v758 = vunpack.c.l.b16 %v234
      %v759 = vunpack.c.l.b16 %v235
      %v760 = vunpack.c.l.b16 %v236
      %v761 = vunpack.c.l.b16 %v237
      %v762 = vunpack.c.l.b16 %v238
      %v763 = vunpack.c.l.b16 %v239
      %v764 = vunpack.c.l.b16 %v240
      %v765 = vunpack.c.l.b16 %v241
      %v766 = vunpack.c.l.b16 %v242
      %v767 = vunpack.c.l.b16 %v243
      %v768 = vunpack.c.l.b16 %v244
      %v769 = vunpack.c.l.b16 %v245
      %v770 = vunpack.c.l.b16 %v246
      %v771 = vunpack.c.l.b16 %v247
      %v772 = vunpack.c.l.b16 %v248
      %v773 = vunpack.c.l.b16 %v249
      %v774 = vunpack.c.l.b16 %v250
      %v775 = vunpack.c.l.b16 %v251
      %v776 = vunpack.c.l.b16 %v252
      %v777 = vunpack.c.l.b16 %v253
      %v778 = vunpack.c.l.b16 %v254
      %v779 = vunpack.c.l.b16 %v255
      %v780 = vunpack.c.l.b16 %v256
      %v781 = vunpack.c.l.b16 %v257
      %v782 = vunpack.c.l.b16 %v258
      %v783 = vunpack.c.l.b16 %v259
      %v784 = vunpack.c.l.b16 %v260
      %v785 = vunpack.c.l.b16 %v261
      %v786 = vunpack.c.l.b16 %v262
      %v787 = vunpack.c.l.b16 %v263
      %v788 = vunpack.c.l.b16 %v264
      %v789 = vunpack.c.l.b16 %v265
      %v790 = vunpack.c.l.b16 %v266
      %v791 = vunpack.c.l.b16 %v267
      %v792 = vunpack.c.l.b16 %v268
      %v793 = vunpack.c.l.b16 %v269
      %v794 = vunpack.c.l.b16 %v270
      %v795 = vunpack.c.l.b16 %v271
      %v796 = vunpack.c.l.b16 %v272
      %v797 = vunpack.c.l.b16 %v273
      %v798 = vunpack.c.l.b16 %v274
      %v799 = vunpack.c.l.b16 %v275
      %v800 = vunpack.c.l.b16 %v276
      %v801 = vunpack.c.l.b16 %v277
      %v802 = vunpack.c.l.b16 %v278
      %v803 = vunpack.c.l.b16 %v279
      %v804 = vunpack.c.l.b16 %v280
      %v805 = vunpack.c.l.b16 %v281
      %v806 = vunpack.c.l.b16 %v282
      %v807 = vunpack.c.l.b16 %v283
      %v808 = vunpack.c.l.b16 %v284
      %v809 = vunpack.c.l.b16 %v285
      %v810 = vunpack.c.l.b16 %v286
      %v811 = vunpack.c.l.b16 %v287
      %v812 = vunpack.c.l.b16 %v288
      %v813 = vunpack.c.l.b16 %v289
      %v814 = vunpack.c.l.b16 %v290
      %v815 = vunpack.c.l.b16 %v291
      %v816 = vunpack.c.l.b16 %v292
      %v817 = vunpack.c.l.b16 %v293
      %v818 = vunpack.c.l.b16 %v294
      %v819 = vunpack.c.l.b16 %v295
      %v820 = vunpack.c.l.b16 %v296
      %v821 = vunpack.c.l.b16 %v297
      %v822 = vunpack.c.l.b16 %v298
      %v823 = vunpack.c.l.b16 %v299
      %v824 = vunpack.c.l.b16 %v300
      %v825 = vunpack.c.l.b16 %v301
      %v826 = vunpack.c.l.b16 %v302
      %v827 = vunpack.c.l.b16 %v303
      %v828 = vunpack.c.l.b16 %v304
      %v829 = vunpack.c.l.b16 %v305
      %v830 = vunpack.c.l.b16 %v306
      %v831 = vunpack.c.l.b16 %v307
      %v832 = vunpack.c.l.b16 %v308
      %v833 = vunpack.c.l.b16 %v309
      %v834 = vunpack.c.l.b16 %v310
      %v835 = vunpack.c.l.b16 %v311
      %v836 = vunpack.c.l.b16 %v312
      %v837 = vunpack.c.l.b16 %v313
      %v838 = vunpack.c.l.b16 %v314
      %v839 = vunpack.c.l.b16 %v315
      %v840 = vunpack.c.l.b16 %v316
      %v841 = vunpack.c.l.b16 %v317
      %v842 = vunpack.c.l.b16 %v318
      %v843 = vunpack.c.l.b16 %v319
      %v844 = vunpack.c.l.b16 %v320
      %v845 = vunpack.c.l.b16 %v321
      %v846 = vunpack.c.l.b16 %v322
      %v847 = vunpack.c.l.b16 %v323
      %v848 = vunpack.c.l.b16 %v324
      %v849 = vunpack.c.l.b16 %v325
      %v850 = vunpack.c.l.b16 %v326
      %v851 = vunpack.c.l.b16 %v327
      %v852 = vunpack.c.l.b16 %v328
      %v853 = vunpack.c.l.b16 %v329
      %v854 = vunpack.c.l.b16 %v330
      %v855 = vunpack.c.l.b16 %v331
      %v856 = vunpack.c.l.b16 %v332
      %v857 = vunpack.c.l.b16 %v333
      %v858 = vunpack.c.l.b16 %v334
      %v859 = vunpack.c.l.b16 %v335
      %v860 = vunpack.c.l.b16 %v336
      %v861 = vunpack.c.l.b16 %v337
      %v862 = vunpack.c.l.b16 %v338
      %v863 = vunpack.c.l.b16 %v339
      %v864 = vunpack.c.l.b16 %v340
      %v865 = vunpack.c.l.b16 %v341
      %v866 = vunpack.c.l.b16 %v342
      %v867 = vunpack.c.l.b16 %v343
      %v868 = vunpack.c.l.b16 %v344
      %v869 = vunpack.c.l.b16 %v345
      %v870 = vunpack.c.l.b16 %v346
      %v871 = vunpack.c.l.b16 %v347
      %v872 = vunpack.c.l.b16 %v348
      %v873 = vunpack.c.l.b16 %v349
      %v874 = vunpack.c.l.b16 %v350
      %v875 = vunpack.c.l.b16 %v351
      %v876 = vunpack.c.l.b16 %v352
      %v877 = vunpack.c.l.b16 %v353
      %v878 = vunpack.c.l.b16 %v354
      %v879 = vunpack.c.l.b16 %v355
      %v880 = vunpack.c.l.b16 %v356
      %v881 = vunpack.c.l.b16 %v357
      %v882 = vunpack.c.l.b16 %v358
      %v883 = vunpack.c.l.b16 %v359
      %v884 = vunpack.c.l.b16 %v360
      %v885 = vunpack.c.l.b16 %v361
      %v886 = vunpack.c.l.b16 %v362
      %v887 = vunpack.c.l.b16 %v363
      %v888 = vunpack.c.l.b16 %v364
      %v889 = vunpack.c.l.b16 %v365
      %v890 = vunpack.c.l.b16 %v366
      %v891 = vunpack.c.l.b16 %v367
      %v892 = vunpack.c.l.b16 %v368
      %v893 = vunpack.c.l.b16 %v369
      %v894 = vunpack.c.l.b16 %v370
      %v895 = vunpack.c.l.b16 %v371
      %v896 = vunpack.c.l.b16 %v372
      %v897 = vunpack.c.l.b16 %v373
      %v898 = vunpack.c.l.b16 %v374
      %v899 = vunpack.c.l.b16 %v375
      %v900 = vunpack.c.l.b16 %v376
      %v901 = vunpack.c.l.b16 %v377
      %v902 = vunpack.c.l.b16 %v378
      %v903 = vunpack.c.l.b16 %v379
      %v904 = vunpack.c.l.b16 %v380
      %v905 = vunpack.c.l.b16 %v381
      %v906 = vunpack.c.l.b16 %v382
      %v907 = vunpack.c.l.b16 %v383
      %v908 = vunpack.c.l.b16 %v384
      %v909 = vunpack.c.l.b16 %v385
      %v910 = vunpack.c.l.b16 %v386
      %v911 = vunpack.c.l.b16 %v387
      %v912 = vunpack.c.l.b16 %v388
      %v913 = vunpack.c.l.b16 %v389
      %v914 = vunpack.c.l.b16 %v390
      %v915 = vunpack.c.l.b16 %v391
      %v916 = vunpack.c.l.b16 %v392
      %v917 = vunpack.c.l.b16 %v393
      %v918 = vunpack.c.l.b16 %v394
      %v919 = vunpack.c.l.b16 %v395
      %v920 = vunpack.c.l.b16 %v396
      %v921 = vunpack.c.l.b16 %v397
      %v922 = vunpack.c.l.b16 %v398
      %v923 = vunpack.c.l.b16 %v399
      %v924 = vunpack.c.l.b16 %v400
      %v925 = vunpack.c.l.b16 %v401
      %v926 = vunpack.c.l.b16 %v402
      %v927 = vunpack.c.l.b16 %v403
      %v928 = vunpack.c.l.b16 %v404
      %v929 = vunpack.c.l.b16 %v405
      %v930 = vunpack.c.l.b16 %v406
      %v931 = vunpack.c.l.b16 %v407
      %v932 = vunpack.c.l.b16 %v408
      %v933 = vunpack.c.l.b16 %v409
      %v934 = vunpack.c.l.b16 %v410
      %v935 = vunpack.c.l.b16 %v411
      %v936 = vunpack.c.l.b16 %v412
      %v937 = vunpack.c.l.b16 %v413
      %v938 = vunpack.c.l.b16 %v414
      %v939 = vunpack.c.l.b16 %v415
      %v940 = vunpack.c.l.b16 %v416
      %v941 = vunpack.c.l.b16 %v417
      %v942 = vunpack.c.l.b16 %v418
      %v943 = vunpack.c.l.b16 %v419
      %v944 = vunpack.c.l.b16 %v420
      %v945 = vunpack.c.l.b16 %v421
      %v946 = vunpack.c.l.b16 %v422
      %v947 = vunpack.c.l.b16 %v423
      %v948 = vunpack.c.l.b16 %v424
      %v949 = vunpack.c.l.b16 %v425
      %v950 = vunpack.c.l.b16 %v426
      %v951 = vunpack.c.l.b16 %v427
      %v952 = vunpack.c.l.b16 %v428
      %v953 = vunpack.c.l.b16 %v429
      %v954 = vunpack.c.l.b16 %v430
      %v955 = vunpack.c.l.b16 %v431
      %v956 = vunpack.c.l.b16 %v432
      %v957 = vunpack.c.l.b16 %v433
      %v958 = vunpack.c.l.b16 %v434
      %v959 = vunpack.c.l.b16 %v435
      %v960 = vunpack.c.l.b16 %v436
      %v961 = vunpack.c.l.b16 %v437
      %v962 = vunpack.c.l.b16 %v438
      %v963 = vunpack.c.l.b16 %v439
      %v964 = vunpack.c.l.b16 %v440
      %v965 = vunpack.c.l.b16 %v441
      %v966 = vunpack.c.l.b16 %v442
      %v967 = vunpack.c.l.b16 %v443
      %v968 = vunpack.c.l.b16 %v444
      %v969 = vunpack.c.l.b16 %v445
      %v970 = vunpack.c.l.b16 %v446
      %v971 = vunpack.c.l.b16 %v447
      %v972 = vunpack.c.l.b16 %v448
      %v973 = vunpack.c.l.b16 %v449
      %v974 = vunpack.c.l.b16 %v450
      %v975 = vunpack.c.l.b16 %v451
      %v976 = vunpack.c.l.b16 %v452
      %v977 = vunpack.c.l.b16 %v453
      %v978 = vunpack.c.l.b16 %v454
      %v979 = vpack.c.b16 %v724, %v723
      %v980 = vpack.c.b16 %v726, %v725
      %v981 = vpack.c.b16 %v728, %v727
      %v982 = vpack.c.b16 %v730, %v729
      %v983 = vpack.c.b16 %v732, %v731
      %v984 = vpack.c.b16 %v734, %v733
      %v985 = vpack.c.b16 %v736, %v735
      %v986 = vpack.c.b16 %v738, %v737
      %v987 = vpack.c.b16 %v740, %v739
      %v988 = vpack.c.b16 %v742, %v741
      %v989 = vpack.c.b16 %v744, %v743
      %v990 = vpack.c.b16 %v746, %v745
      %v991 = vpack.c.b16 %v748, %v747
      %v992 = vpack.c.b16 %v750, %v749
      %v993 = vpack.c.b16 %v752, %v751
      %v994 = vpack.c.b16 %v754, %v753
      %v995 = vpack.c.b16 %v756, %v755
      %v996 = vpack.c.b16 %v758, %v757
      %v997 = vpack.c.b16 %v760, %v759
      %v998 = vpack.c.b16 %v762, %v761
      %v999 = vpack.c.b16 %v764, %v763
      %v1000 = vpack.c.b16 %v766, %v765
      %v1001 = vpack.c.b16 %v768, %v767
      %v1002 = vpack.c.b16 %v770, %v769
      %v1003 = vpack.c.b16 %v772, %v771
      %v1004 = vpack.c.b16 %v774, %v773
      %v1005 = vpack.c.b16 %v776, %v775
      %v1006 = vpack.c.b16 %v778, %v777
      %v1007 = vpack.c.b16 %v780, %v779
      %v1008 = vpack.c.b16 %v782, %v781
      %v1009 = vpack.c.b16 %v784, %v783
      %v1010 = vpack.c.b16 %v786, %v785
      %v1011 = vpack.c.b16 %v788, %v787
      %v1012 = vpack.c.b16 %v790, %v789
      %v1013 = vpack.c.b16 %v792, %v791
      %v1014 = vpack.c.b16 %v794, %v793
      %v1015 = vpack.c.b16 %v796, %v795
      %v1016 = vpack.c.b16 %v798, %v797
      %v1017 = vpack.c.b16 %v800, %v799
      %v1018 = vpack.c.b16 %v802, %v801
      %v1019 = vpack.c.b16 %v804, %v803
      %v1020 = vpack.c.b16 %v806, %v805
      %v1021 = vpack.c.b16 %v808, %v807
      %v1022 = vpack.c.b16 %v810, %v809
      %v1023 = vpack.c.b16 %v812, %v811
      %v1024 = vpack.c.b16 %v814, %v813
      %v1025 = vpack.c.b16 %v816, %v815
      %v1026 = vpack.c.b16 %v818, %v817
      %v1027 = vpack.c.b16 %v820, %v819
      %v1028 = vpack.c.b16 %v822, %v821
      %v1029 = vpack.c.b16 %v824, %v823
      %v1030 = vpack.c.b16 %v826, %v825
      %v1031 = vpack.c.b16 %v828, %v827
      %v1032 = vpack.c.b16 %v830, %v829
      %v1033 = vpack.c.b16 %v832, %v831
      %v1034 = vpack.c.b16 %v834, %v833
      %v1035 = vpack.c.b16 %v836, %v835
      %v1036 = vpack.c.b16 %v838, %v837
      %v1037 = vpack.c.b16 %v840, %v839
      %v1038 = vpack.c.b16 %v842, %v841
      %v1039 = vpack.c.b16 %v844, %v843
      %v1040 = vpack.c.b16 %v846, %v845
      %v1041 = vpack.c.b16 %v848, %v847
      %v1042 = vpack.c.b16 %v850, %v849
      %v1043 = vpack.c.b16 %v852, %v851
      %v1044 = vpack.c.b16 %v854, %v853
      %v1045 = vpack.c.b16 %v856, %v855
      %v1046 = vpack.c.b16 %v858, %v857
      %v1047 = vpack.c.b16 %v860, %v859
      %v1048 = vpack.c.b16 %v862, %v861
      %v1049 = vpack.c.b16 %v864, %v863
      %v1050 = vpack.c.b16 %v866, %v865
      %v1051 = vpack.c.b16 %v868, %v867
      %v1052 = vpack.c.b16 %v870, %v869
      %v1053 = vpack.c.b16 %v872, %v871
      %v1054 = vpack.c.b16 %v874, %v873
      %v1055 = vpack.c.b16 %v876, %v875
      %v1056 = vpack.c.b16 %v878, %v877
      %v1057 = vpack.c.b16 %v880, %v879
      %v1058 = vpack.c.b16 %v882, %v881
      %v1059 = vpack.c.b16 %v884, %v883
      %v1060 = vpack.c.b16 %v886, %v885
      %v1061 = vpack.c.b16 %v888, %v887
      %v1062 = vpack.c.b16 %v890, %v889
      %v1063 = vpack.c.b16 %v892, %v891
      %v1064 = vpack.c.b16 %v894, %v893
      %v1065 = vpack.c.b16 %v896, %v895
      %v1066 = vpack.c.b16 %v898, %v897
      %v1067 = vpack.c.b16 %v900, %v899
      %v1068 = vpack.c.b16 %v902, %v901
      %v1069 = vpack.c.b16 %v904, %v903
      %v1070 = vpack.c.b16 %v906, %v905
      %v1071 = vpack.c.b16 %v908, %v907
      %v1072 = vpack.c.b16 %v910, %v909
      %v1073 = vpack.c.b16 %v912, %v911
      %v1074 = vpack.c.b16 %v914, %v913
      %v1075 = vpack.c.b16 %v916, %v915
      %v1076 = vpack.c.b16 %v918, %v917
      %v1077 = vpack.c.b16 %v920, %v919
      %v1078 = vpack.c.b16 %v922, %v921
      %v1079 = vpack.c.b16 %v924, %v923
      %v1080 = vpack.c.b16 %v926, %v925
      %v1081 = vpack.c.b16 %v928, %v927
      %v1082 = vpack.c.b16 %v930, %v929
      %v1083 = vpack.c.b16 %v932, %v931
      %v1084 = vpack.c.b16 %v934, %v933
      %v1085 = vpack.c.b16 %v936, %v935
      %v1086 = vpack.c.b16 %v938, %v937
      %v1087 = vpack.c.b16 %v940, %v939
      %v1088 = vpack.c.b16 %v942, %v941
      %v1089 = vpack.c.b16 %v944, %v943
      %v1090 = vpack.c.b16 %v946, %v945
      %v1091 = vpack.c.b16 %v948, %v947
      %v1092 = vpack.c.b16 %v950, %v949
      %v1093 = vpack.c.b16 %v952, %v951
      %v1094 = vpack.c.b16 %v954, %v953
      %v1095 = vpack.c.b16 %v956, %v955
      %v1096 = vpack.c.b16 %v958, %v957
      %v1097 = vpack.c.b16 %v960, %v959
      %v1098 = vpack.c.b16 %v962, %v961
      %v1099 = vpack.c.b16 %v964, %v963
      %v1100 = vpack.c.b16 %v966, %v965
      %v1101 = vpack.c.b16 %v968, %v967
      %v1102 = vpack.c.b16 %v970, %v969
      %v1103 = vpack.c.b16 %v972, %v971
      %v1104 = vpack.c.b16 %v974, %v973
      %v1105 = vpack.c.b16 %v976, %v975
      %v1106 = vpack.c.b16 %v978, %v977
      %v1112 = vunpack.c.l.b16 %v455
      %v1113 = vunpack.c.l.b16 %v456
      %v1114 = vunpack.c.l.b16 %v457
      %v1115 = vunpack.c.l.b16 %v458
      %v1116 = vunpack.c.l.b16 %v459
      %v1117 = vpack.c.b16 %v1113, %v1112
      %v1118 = vpack.c.b16 %v1115, %v1114
      %v1119 = vpack.c.b16 %v1116, %v1116
      %vm1122 = vcmask 293888
      %v1124 = vsel %vm1122, %v979, 0
      %v1127 = vsel %vm1122, %v980, 0
      %v1130 = vsel %vm1122, %v981, 0
      %v1133 = vsel %vm1122, %v982, 0
      %v1136 = vsel %vm1122, %v983, 0
      %v1139 = vsel %vm1122, %v984, 0
      %v1142 = vsel %vm1122, %v985, 0
      %v1145 = vsel %vm1122, %v986, 0
      %v1148 = vsel %vm1122, %v987, 0
      %v1151 = vsel %vm1122, %v988, 0
      %v1154 = vsel %vm1122, %v989, 0
      %v1157 = vsel %vm1122, %v990, 0
      %v1160 = vsel %vm1122, %v991, 0
      %v1163 = vsel %vm1122, %v992, 0
      %v1166 = vsel %vm1122, %v993, 0
      %v1169 = vsel %vm1122, %v994, 0
      %v1172 = vsel %vm1122, %v995, 0
      %v1175 = vsel %vm1122, %v996, 0
      %v1178 = vsel %vm1122, %v997, 0
      %v1181 = vsel %vm1122, %v998, 0
      %v1184 = vsel %vm1122, %v999, 0
      %v1187 = vsel %vm1122, %v1000, 0
      %v1190 = vsel %vm1122, %v1001, 0
      %v1193 = vsel %vm1122, %v1002, 0
      %v1196 = vsel %vm1122, %v1003, 0
      %v1199 = vsel %vm1122, %v1004, 0
      %v1202 = vsel %vm1122, %v1005, 0
      %v1205 = vsel %vm1122, %v1006, 0
      %v1208 = vsel %vm1122, %v1007, 0
      %v1211 = vsel %vm1122, %v1008, 0
      %v1214 = vsel %vm1122, %v1009, 0
      %v1217 = vsel %vm1122, %v1010, 0
      %v1220 = vsel %vm1122, %v1011, 0
      %v1223 = vsel %vm1122, %v1012, 0
      %v1226 = vsel %vm1122, %v1013, 0
      %v1229 = vsel %vm1122, %v1014, 0
      %v1232 = vsel %vm1122, %v1015, 0
      %v1235 = vsel %vm1122, %v1016, 0
      %v1238 = vsel %vm1122, %v1017, 0
      %v1241 = vsel %vm1122, %v1018, 0
      %v1244 = vsel %vm1122, %v1019, 0
      %v1247 = vsel %vm1122, %v1020, 0
      %v1250 = vsel %vm1122, %v1021, 0
      %v1253 = vsel %vm1122, %v1022, 0
      %v1256 = vsel %vm1122, %v1023, 0
      %v1259 = vsel %vm1122, %v1024, 0
      %v1262 = vsel %vm1122, %v1025, 0
      %v1265 = vsel %vm1122, %v1026, 0
      %v1268 = vsel %vm1122, %v1027, 0
      %v1271 = vsel %vm1122, %v1028, 0
      %v1274 = vsel %vm1122, %v1029, 0
      %v1277 = vsel %vm1122, %v1030, 0
      %v1280 = vsel %vm1122, %v1031, 0
      %v1283 = vsel %vm1122, %v1032, 0
      %v1286 = vsel %vm1122, %v1033, 0
      %v1289 = vsel %vm1122, %v1034, 0
      %v1292 = vsel %vm1122, %v1035, 0
      %v1295 = vsel %vm1122, %v1036, 0
      %v1298 = vsel %vm1122, %v1037, 0
      %v1301 = vsel %vm1122, %v1038, 0
      %v1304 = vsel %vm1122, %v1039, 0
      %v1307 = vsel %vm1122, %v1040, 0
      %v1310 = vsel %vm1122, %v1041, 0
      %v1313 = vsel %vm1122, %v1042, 0
      %v1316 = vsel %vm1122, %v1043, 0
      %v1319 = vsel %vm1122, %v1044, 0
      %v1322 = vsel %vm1122, %v1045, 0
      %v1325 = vsel %vm1122, %v1046, 0
      %v1328 = vsel %vm1122, %v1047, 0
      %v1331 = vsel %vm1122, %v1048, 0
      %v1334 = vsel %vm1122, %v1049, 0
      %v1337 = vsel %vm1122, %v1050, 0
      %v1340 = vsel %vm1122, %v1051, 0
      %v1343 = vsel %vm1122, %v1052, 0
      %v1346 = vsel %vm1122, %v1053, 0
      %v1349 = vsel %vm1122, %v1054, 0
      %v1352 = vsel %vm1122, %v1055, 0
      %v1355 = vsel %vm1122, %v1056, 0
      %v1358 = vsel %vm1122, %v1057, 0
      %v1361 = vsel %vm1122, %v1058, 0
      %v1364 = vsel %vm1122, %v1059, 0
      %v1367 = vsel %vm1122, %v1060, 0
      %v1370 = vsel %vm1122, %v1061, 0
      %v1373 = vsel %vm1122, %v1062, 0
      %v1376 = vsel %vm1122, %v1063, 0
      %v1379 = vsel %vm1122, %v1064, 0
      %v1382 = vsel %vm1122, %v1065, 0
      %v1385 = vsel %vm1122, %v1066, 0
      %v1388 = vsel %vm1122, %v1067, 0
      %v1391 = vsel %vm1122, %v1068, 0
      %v1394 = vsel %vm1122, %v1069, 0
      %v1397 = vsel %vm1122, %v1070, 0
      %v1400 = vsel %vm1122, %v1071, 0
      %v1403 = vsel %vm1122, %v1072, 0
      %v1406 = vsel %vm1122, %v1073, 0
      %v1409 = vsel %vm1122, %v1074, 0
      %v1412 = vsel %vm1122, %v1075, 0
      %v1415 = vsel %vm1122, %v1076, 0
      %v1418 = vsel %vm1122, %v1077, 0
      %v1421 = vsel %vm1122, %v1078, 0
      %v1424 = vsel %vm1122, %v1079, 0
      %v1427 = vsel %vm1122, %v1080, 0
      %v1430 = vsel %vm1122, %v1081, 0
      %v1433 = vsel %vm1122, %v1082, 0
      %v1436 = vsel %vm1122, %v1083, 0
      %v1439 = vsel %vm1122, %v1084, 0
      %v1442 = vsel %vm1122, %v1085, 0
      %v1445 = vsel %vm1122, %v1086, 0
      %v1448 = vsel %vm1122, %v1087, 0
      %v1451 = vsel %vm1122, %v1088, 0
      %v1454 = vsel %vm1122, %v1089, 0
      %v1457 = vsel %vm1122, %v1090, 0
      %v1460 = vsel %vm1122, %v1091, 0
      %v1463 = vsel %vm1122, %v1092, 0
      %v1466 = vsel %vm1122, %v1093, 0
      %v1469 = vsel %vm1122, %v1094, 0
      %v1472 = vsel %vm1122, %v1095, 0
      %v1475 = vsel %vm1122, %v1096, 0
      %v1478 = vsel %vm1122, %v1097, 0
      %v1481 = vsel %vm1122, %v1098, 0
      %v1484 = vsel %vm1122, %v1099, 0
      %v1487 = vsel %vm1122, %v1100, 0
      %v1490 = vsel %vm1122, %v1101, 0
      %v1493 = vsel %vm1122, %v1102, 0
      %v1496 = vsel %vm1122, %v1103, 0
      %v1499 = vsel %vm1122, %v1104, 0
      %v1502 = vsel %vm1122, %v1105, 0
      %v1505 = vsel %vm1122, %v1106, 0
      %vm1507 = vcmask 1041408
      %v1509 = vsel %vm1507, %v1119, 0
      %1511 = vmatprep.subr.bf16.mxu0 0
      %1512 = vmatpush1.bf16.msra.mxu0 0
      %1513 = vmatprep.subr.bf16.mxu0 0
      %1514 = vmatpush1.bf16.msra.mxu0 0
      %1515 = vmatprep.subr.bf16.mxu0 0
      %1516 = vmatpush1.bf16.msra.mxu0 0
      %1517 = vmatprep.subr.bf16.mxu0 0
      %1518 = vmatpush1.bf16.msra.mxu0 0
      %1519 = vmatprep.subr.bf16.mxu0 0
      %1520 = vmatpush1.bf16.msra.mxu0 0
      %1521 = vmatprep.subr.bf16.mxu0 0
      %1522 = vmatpush1.bf16.msra.mxu0 %v1509
      %1523 = vmatprep.subr.bf16.mxu0 0
      %1524 = vmatpush1.bf16.msra.mxu0 %v1118
      %1525 = vmatprep.subr.bf16.mxu0 0
      %1526 = vmatpush1.bf16.msra.mxu0 %v1117
      %1527 = vmatprep.subr.bf16.mxu0 0
      %1528 = vmatpush2.bf16.msra.mxu0 0
      %1529 = vmatprep.subr.bf16.mxu0 0
      %1530 = vmatpush2.bf16.msra.mxu0 0
      %1531 = vmatprep.subr.bf16.mxu0 0
      %1532 = vmatpush2.bf16.msra.mxu0 0
      %1533 = vmatprep.subr.bf16.mxu0 0
      %1534 = vmatpush2.bf16.msra.mxu0 0
      %1535 = vmatprep.subr.bf16.mxu0 0
      %1536 = vmatpush2.bf16.msra.mxu0 0
      %1537 = vmatprep.subr.bf16.mxu0 0
      %1538 = vmatpush2.bf16.msra.mxu0 0
      %1539 = vmatprep.subr.bf16.mxu0 0
      %1540 = vmatpush2.bf16.msra.mxu0 0
      %1541 = vmatprep.subr.bf16.mxu0 0
      %1542 = vmatpush2.bf16.msra.mxu0 0
      %1543 = vmatprep.mubr.bf16.mxu0 0
      %1544 = vmatmul.mubr.bf16.gmra.mxu0 %v1124
      %v1545 = vpop.f32.mrf.mxu0
      %v1546 = vadd.f32 %v465, %v1545
      %v1547 = vpop.f32.mrf.mxu0
      %v1548 = vpop.f32.mrf.mxu0
      %v1549 = vadd.f32 %v465, %v1548
      %v1550 = vpop.f32.mrf.mxu0
      %1551 = vmatprep.mubr.bf16.mxu0 0
      %1552 = vmatmul.mubr.bf16.gmra.mxu0 %v1127
      %v1553 = vpop.f32.mrf.mxu0
      %v1554 = vadd.f32 %v465, %v1553
      %v1555 = vpop.f32.mrf.mxu0
      %v1556 = vpop.f32.mrf.mxu0
      %v1557 = vadd.f32 %v465, %v1556
      %v1558 = vpop.f32.mrf.mxu0
      %1559 = vmatprep.mubr.bf16.mxu0 0
      %1560 = vmatmul.mubr.bf16.gmra.mxu0 %v1130
      %v1561 = vpop.f32.mrf.mxu0
      %v1562 = vadd.f32 %v465, %v1561
      %v1563 = vpop.f32.mrf.mxu0
      %v1564 = vpop.f32.mrf.mxu0
      %v1565 = vadd.f32 %v465, %v1564
      %v1566 = vpop.f32.mrf.mxu0
      %1567 = vmatprep.mubr.bf16.mxu0 0
      %1568 = vmatmul.mubr.bf16.gmra.mxu0 %v1133
      %v1569 = vpop.f32.mrf.mxu0
      %v1570 = vadd.f32 %v465, %v1569
      %v1571 = vpop.f32.mrf.mxu0
      %v1572 = vpop.f32.mrf.mxu0
      %v1573 = vadd.f32 %v465, %v1572
      %v1574 = vpop.f32.mrf.mxu0
      %1575 = vmatprep.mubr.bf16.mxu0 0
      %1576 = vmatmul.mubr.bf16.gmra.mxu0 %v1136
      %v1577 = vpop.f32.mrf.mxu0
      %v1578 = vadd.f32 %v465, %v1577
      %v1579 = vpop.f32.mrf.mxu0
      %v1580 = vpop.f32.mrf.mxu0
      %v1581 = vadd.f32 %v465, %v1580
      %v1582 = vpop.f32.mrf.mxu0
      %1583 = vmatprep.mubr.bf16.mxu0 0
      %1584 = vmatmul.mubr.bf16.gmra.mxu0 %v1139
      %v1585 = vpop.f32.mrf.mxu0
      %v1586 = vadd.f32 %v465, %v1585
      %v1587 = vpop.f32.mrf.mxu0
      %v1588 = vpop.f32.mrf.mxu0
      %v1589 = vadd.f32 %v465, %v1588
      %v1590 = vpop.f32.mrf.mxu0
      %1591 = vmatprep.mubr.bf16.mxu0 0
      %1592 = vmatmul.mubr.bf16.gmra.mxu0 %v1142
      %v1593 = vpop.f32.mrf.mxu0
      %v1594 = vadd.f32 %v465, %v1593
      %v1595 = vpop.f32.mrf.mxu0
      %v1596 = vpop.f32.mrf.mxu0
      %v1597 = vadd.f32 %v465, %v1596
      %v1598 = vpop.f32.mrf.mxu0
      %1599 = vmatprep.mubr.bf16.mxu0 0
      %1600 = vmatmul.mubr.bf16.gmra.mxu0 %v1145
      %v1601 = vpop.f32.mrf.mxu0
      %v1602 = vadd.f32 %v465, %v1601
      %v1603 = vpop.f32.mrf.mxu0
      %v1604 = vpop.f32.mrf.mxu0
      %v1605 = vadd.f32 %v465, %v1604
      %v1606 = vpop.f32.mrf.mxu0
      %1607 = vmatprep.mubr.bf16.mxu0 0
      %1608 = vmatmul.mubr.bf16.gmra.mxu0 %v1148
      %v1609 = vpop.f32.mrf.mxu0
      %v1610 = vadd.f32 %v465, %v1609
      %v1611 = vpop.f32.mrf.mxu0
      %v1612 = vpop.f32.mrf.mxu0
      %v1613 = vadd.f32 %v465, %v1612
      %v1614 = vpop.f32.mrf.mxu0
      %1615 = vmatprep.mubr.bf16.mxu0 0
      %1616 = vmatmul.mubr.bf16.gmra.mxu0 %v1151
      %v1617 = vpop.f32.mrf.mxu0
      %v1618 = vadd.f32 %v465, %v1617
      %v1619 = vpop.f32.mrf.mxu0
      %v1620 = vpop.f32.mrf.mxu0
      %v1621 = vadd.f32 %v465, %v1620
      %v1622 = vpop.f32.mrf.mxu0
      %1623 = vmatprep.mubr.bf16.mxu0 0
      %1624 = vmatmul.mubr.bf16.gmra.mxu0 %v1154
      %v1625 = vpop.f32.mrf.mxu0
      %v1626 = vadd.f32 %v465, %v1625
      %v1627 = vpop.f32.mrf.mxu0
      %v1628 = vpop.f32.mrf.mxu0
      %v1629 = vadd.f32 %v465, %v1628
      %v1630 = vpop.f32.mrf.mxu0
      %1631 = vmatprep.mubr.bf16.mxu0 0
      %1632 = vmatmul.mubr.bf16.gmra.mxu0 %v1157
      %v1633 = vpop.f32.mrf.mxu0
      %v1634 = vadd.f32 %v465, %v1633
      %v1635 = vpop.f32.mrf.mxu0
      %v1636 = vpop.f32.mrf.mxu0
      %v1637 = vadd.f32 %v465, %v1636
      %v1638 = vpop.f32.mrf.mxu0
      %1639 = vmatprep.mubr.bf16.mxu0 0
      %1640 = vmatmul.mubr.bf16.gmra.mxu0 %v1160
      %v1641 = vpop.f32.mrf.mxu0
      %v1642 = vadd.f32 %v465, %v1641
      %v1643 = vpop.f32.mrf.mxu0
      %v1644 = vpop.f32.mrf.mxu0
      %v1645 = vadd.f32 %v465, %v1644
      %v1646 = vpop.f32.mrf.mxu0
      %1647 = vmatprep.mubr.bf16.mxu0 0
      %1648 = vmatmul.mubr.bf16.gmra.mxu0 %v1163
      %v1649 = vpop.f32.mrf.mxu0
      %v1650 = vadd.f32 %v465, %v1649
      %v1651 = vpop.f32.mrf.mxu0
      %v1652 = vpop.f32.mrf.mxu0
      %v1653 = vadd.f32 %v465, %v1652
      %v1654 = vpop.f32.mrf.mxu0
      %1655 = vmatprep.mubr.bf16.mxu0 0
      %1656 = vmatmul.mubr.bf16.gmra.mxu0 %v1166
      %v1657 = vpop.f32.mrf.mxu0
      %v1658 = vadd.f32 %v465, %v1657
      %v1659 = vpop.f32.mrf.mxu0
      %v1660 = vpop.f32.mrf.mxu0
      %v1661 = vadd.f32 %v465, %v1660
      %v1662 = vpop.f32.mrf.mxu0
      %1663 = vmatprep.mubr.bf16.mxu0 0
      %1664 = vmatmul.mubr.bf16.gmra.mxu0 %v1169
      %v1665 = vpop.f32.mrf.mxu0
      %v1666 = vadd.f32 %v465, %v1665
      %v1667 = vpop.f32.mrf.mxu0
      %v1668 = vpop.f32.mrf.mxu0
      %v1669 = vadd.f32 %v465, %v1668
      %v1670 = vpop.f32.mrf.mxu0
      %1671 = vmatprep.mubr.bf16.mxu0 0
      %1672 = vmatmul.mubr.bf16.gmra.mxu0 %v1172
      %v1673 = vpop.f32.mrf.mxu0
      %v1674 = vadd.f32 %v465, %v1673
      %v1675 = vpop.f32.mrf.mxu0
      %v1676 = vpop.f32.mrf.mxu0
      %v1677 = vadd.f32 %v465, %v1676
      %v1678 = vpop.f32.mrf.mxu0
      %1679 = vmatprep.mubr.bf16.mxu0 0
      %1680 = vmatmul.mubr.bf16.gmra.mxu0 %v1175
      %v1681 = vpop.f32.mrf.mxu0
      %v1682 = vadd.f32 %v465, %v1681
      %v1683 = vpop.f32.mrf.mxu0
      %v1684 = vpop.f32.mrf.mxu0
      %v1685 = vadd.f32 %v465, %v1684
      %v1686 = vpop.f32.mrf.mxu0
      %1687 = vmatprep.mubr.bf16.mxu0 0
      %1688 = vmatmul.mubr.bf16.gmra.mxu0 %v1178
      %v1689 = vpop.f32.mrf.mxu0
      %v1690 = vadd.f32 %v465, %v1689
      %v1691 = vpop.f32.mrf.mxu0
      %v1692 = vpop.f32.mrf.mxu0
      %v1693 = vadd.f32 %v465, %v1692
      %v1694 = vpop.f32.mrf.mxu0
      %1695 = vmatprep.mubr.bf16.mxu0 0
      %1696 = vmatmul.mubr.bf16.gmra.mxu0 %v1181
      %v1697 = vpop.f32.mrf.mxu0
      %v1698 = vadd.f32 %v465, %v1697
      %v1699 = vpop.f32.mrf.mxu0
      %v1700 = vpop.f32.mrf.mxu0
      %v1701 = vadd.f32 %v465, %v1700
      %v1702 = vpop.f32.mrf.mxu0
      %1703 = vmatprep.mubr.bf16.mxu0 0
      %1704 = vmatmul.mubr.bf16.gmra.mxu0 %v1184
      %v1705 = vpop.f32.mrf.mxu0
      %v1706 = vadd.f32 %v465, %v1705
      %v1707 = vpop.f32.mrf.mxu0
      %v1708 = vpop.f32.mrf.mxu0
      %v1709 = vadd.f32 %v465, %v1708
      %v1710 = vpop.f32.mrf.mxu0
      %1711 = vmatprep.mubr.bf16.mxu0 0
      %1712 = vmatmul.mubr.bf16.gmra.mxu0 %v1187
      %v1713 = vpop.f32.mrf.mxu0
      %v1714 = vadd.f32 %v465, %v1713
      %v1715 = vpop.f32.mrf.mxu0
      %v1716 = vpop.f32.mrf.mxu0
      %v1717 = vadd.f32 %v465, %v1716
      %v1718 = vpop.f32.mrf.mxu0
      %1719 = vmatprep.mubr.bf16.mxu0 0
      %1720 = vmatmul.mubr.bf16.gmra.mxu0 %v1190
      %v1721 = vpop.f32.mrf.mxu0
      %v1722 = vadd.f32 %v465, %v1721
      %v1723 = vpop.f32.mrf.mxu0
      %v1724 = vpop.f32.mrf.mxu0
      %v1725 = vadd.f32 %v465, %v1724
      %v1726 = vpop.f32.mrf.mxu0
      %1727 = vmatprep.mubr.bf16.mxu0 0
      %1728 = vmatmul.mubr.bf16.gmra.mxu0 %v1193
      %v1729 = vpop.f32.mrf.mxu0
      %v1730 = vadd.f32 %v465, %v1729
      %v1731 = vpop.f32.mrf.mxu0
      %v1732 = vpop.f32.mrf.mxu0
      %v1733 = vadd.f32 %v465, %v1732
      %v1734 = vpop.f32.mrf.mxu0
      %1735 = vmatprep.mubr.bf16.mxu0 0
      %1736 = vmatmul.mubr.bf16.gmra.mxu0 %v1196
      %v1737 = vpop.f32.mrf.mxu0
      %v1738 = vadd.f32 %v465, %v1737
      %v1739 = vpop.f32.mrf.mxu0
      %v1740 = vpop.f32.mrf.mxu0
      %v1741 = vadd.f32 %v465, %v1740
      %v1742 = vpop.f32.mrf.mxu0
      %1743 = vmatprep.mubr.bf16.mxu0 0
      %1744 = vmatmul.mubr.bf16.gmra.mxu0 %v1199
      %v1745 = vpop.f32.mrf.mxu0
      %v1746 = vadd.f32 %v465, %v1745
      %v1747 = vpop.f32.mrf.mxu0
      %v1748 = vpop.f32.mrf.mxu0
      %v1749 = vadd.f32 %v465, %v1748
      %v1750 = vpop.f32.mrf.mxu0
      %1751 = vmatprep.mubr.bf16.mxu0 0
      %1752 = vmatmul.mubr.bf16.gmra.mxu0 %v1202
      %v1753 = vpop.f32.mrf.mxu0
      %v1754 = vadd.f32 %v465, %v1753
      %v1755 = vpop.f32.mrf.mxu0
      %v1756 = vpop.f32.mrf.mxu0
      %v1757 = vadd.f32 %v465, %v1756
      %v1758 = vpop.f32.mrf.mxu0
      %1759 = vmatprep.mubr.bf16.mxu0 0
      %1760 = vmatmul.mubr.bf16.gmra.mxu0 %v1205
      %v1761 = vpop.f32.mrf.mxu0
      %v1762 = vadd.f32 %v465, %v1761
      %v1763 = vpop.f32.mrf.mxu0
      %v1764 = vpop.f32.mrf.mxu0
      %v1765 = vadd.f32 %v465, %v1764
      %v1766 = vpop.f32.mrf.mxu0
      %1767 = vmatprep.mubr.bf16.mxu0 0
      %1768 = vmatmul.mubr.bf16.gmra.mxu0 %v1208
      %v1769 = vpop.f32.mrf.mxu0
      %v1770 = vadd.f32 %v465, %v1769
      %v1771 = vpop.f32.mrf.mxu0
      %v1772 = vpop.f32.mrf.mxu0
      %v1773 = vadd.f32 %v465, %v1772
      %v1774 = vpop.f32.mrf.mxu0
      %1775 = vmatprep.mubr.bf16.mxu0 0
      %1776 = vmatmul.mubr.bf16.gmra.mxu0 %v1211
      %v1777 = vpop.f32.mrf.mxu0
      %v1778 = vadd.f32 %v465, %v1777
      %v1779 = vpop.f32.mrf.mxu0
      %v1780 = vpop.f32.mrf.mxu0
      %v1781 = vadd.f32 %v465, %v1780
      %v1782 = vpop.f32.mrf.mxu0
      %1783 = vmatprep.mubr.bf16.mxu0 0
      %1784 = vmatmul.mubr.bf16.gmra.mxu0 %v1214
      %v1785 = vpop.f32.mrf.mxu0
      %v1786 = vadd.f32 %v465, %v1785
      %v1787 = vpop.f32.mrf.mxu0
      %v1788 = vpop.f32.mrf.mxu0
      %v1789 = vadd.f32 %v465, %v1788
      %v1790 = vpop.f32.mrf.mxu0
      %1791 = vmatprep.mubr.bf16.mxu0 0
      %1792 = vmatmul.mubr.bf16.gmra.mxu0 %v1217
      %v1793 = vpop.f32.mrf.mxu0
      %v1794 = vadd.f32 %v465, %v1793
      %v1795 = vpop.f32.mrf.mxu0
      %v1796 = vpop.f32.mrf.mxu0
      %v1797 = vadd.f32 %v465, %v1796
      %v1798 = vpop.f32.mrf.mxu0
      %1799 = vmatprep.mubr.bf16.mxu0 0
      %1800 = vmatmul.mubr.bf16.gmra.mxu0 %v1220
      %v1801 = vpop.f32.mrf.mxu0
      %v1802 = vadd.f32 %v465, %v1801
      %v1803 = vpop.f32.mrf.mxu0
      %v1804 = vpop.f32.mrf.mxu0
      %v1805 = vadd.f32 %v465, %v1804
      %v1806 = vpop.f32.mrf.mxu0
      %1807 = vmatprep.mubr.bf16.mxu0 0
      %1808 = vmatmul.mubr.bf16.gmra.mxu0 %v1223
      %v1809 = vpop.f32.mrf.mxu0
      %v1810 = vadd.f32 %v465, %v1809
      %v1811 = vpop.f32.mrf.mxu0
      %v1812 = vpop.f32.mrf.mxu0
      %v1813 = vadd.f32 %v465, %v1812
      %v1814 = vpop.f32.mrf.mxu0
      %1815 = vmatprep.mubr.bf16.mxu0 0
      %1816 = vmatmul.mubr.bf16.gmra.mxu0 %v1226
      %v1817 = vpop.f32.mrf.mxu0
      %v1818 = vadd.f32 %v465, %v1817
      %v1819 = vpop.f32.mrf.mxu0
      %v1820 = vpop.f32.mrf.mxu0
      %v1821 = vadd.f32 %v465, %v1820
      %v1822 = vpop.f32.mrf.mxu0
      %1823 = vmatprep.mubr.bf16.mxu0 0
      %1824 = vmatmul.mubr.bf16.gmra.mxu0 %v1229
      %v1825 = vpop.f32.mrf.mxu0
      %v1826 = vadd.f32 %v465, %v1825
      %v1827 = vpop.f32.mrf.mxu0
      %v1828 = vpop.f32.mrf.mxu0
      %v1829 = vadd.f32 %v465, %v1828
      %v1830 = vpop.f32.mrf.mxu0
      %1831 = vmatprep.mubr.bf16.mxu0 0
      %1832 = vmatmul.mubr.bf16.gmra.mxu0 %v1232
      %v1833 = vpop.f32.mrf.mxu0
      %v1834 = vadd.f32 %v465, %v1833
      %v1835 = vpop.f32.mrf.mxu0
      %v1836 = vpop.f32.mrf.mxu0
      %v1837 = vadd.f32 %v465, %v1836
      %v1838 = vpop.f32.mrf.mxu0
      %1839 = vmatprep.mubr.bf16.mxu0 0
      %1840 = vmatmul.mubr.bf16.gmra.mxu0 %v1235
      %v1841 = vpop.f32.mrf.mxu0
      %v1842 = vadd.f32 %v465, %v1841
      %v1843 = vpop.f32.mrf.mxu0
      %v1844 = vpop.f32.mrf.mxu0
      %v1845 = vadd.f32 %v465, %v1844
      %v1846 = vpop.f32.mrf.mxu0
      %1847 = vmatprep.mubr.bf16.mxu0 0
      %1848 = vmatmul.mubr.bf16.gmra.mxu0 %v1238
      %v1849 = vpop.f32.mrf.mxu0
      %v1850 = vadd.f32 %v465, %v1849
      %v1851 = vpop.f32.mrf.mxu0
      %v1852 = vpop.f32.mrf.mxu0
      %v1853 = vadd.f32 %v465, %v1852
      %v1854 = vpop.f32.mrf.mxu0
      %1855 = vmatprep.mubr.bf16.mxu0 0
      %1856 = vmatmul.mubr.bf16.gmra.mxu0 %v1241
      %v1857 = vpop.f32.mrf.mxu0
      %v1858 = vadd.f32 %v465, %v1857
      %v1859 = vpop.f32.mrf.mxu0
      %v1860 = vpop.f32.mrf.mxu0
      %v1861 = vadd.f32 %v465, %v1860
      %v1862 = vpop.f32.mrf.mxu0
      %1863 = vmatprep.mubr.bf16.mxu0 0
      %1864 = vmatmul.mubr.bf16.gmra.mxu0 %v1244
      %v1865 = vpop.f32.mrf.mxu0
      %v1866 = vadd.f32 %v465, %v1865
      %v1867 = vpop.f32.mrf.mxu0
      %v1868 = vpop.f32.mrf.mxu0
      %v1869 = vadd.f32 %v465, %v1868
      %v1870 = vpop.f32.mrf.mxu0
      %1871 = vmatprep.mubr.bf16.mxu0 0
      %1872 = vmatmul.mubr.bf16.gmra.mxu0 %v1247
      %v1873 = vpop.f32.mrf.mxu0
      %v1874 = vadd.f32 %v465, %v1873
      %v1875 = vpop.f32.mrf.mxu0
      %v1876 = vpop.f32.mrf.mxu0
      %v1877 = vadd.f32 %v465, %v1876
      %v1878 = vpop.f32.mrf.mxu0
      %1879 = vmatprep.mubr.bf16.mxu0 0
      %1880 = vmatmul.mubr.bf16.gmra.mxu0 %v1250
      %v1881 = vpop.f32.mrf.mxu0
      %v1882 = vadd.f32 %v465, %v1881
      %v1883 = vpop.f32.mrf.mxu0
      %v1884 = vpop.f32.mrf.mxu0
      %v1885 = vadd.f32 %v465, %v1884
      %v1886 = vpop.f32.mrf.mxu0
      %1887 = vmatprep.mubr.bf16.mxu0 0
      %1888 = vmatmul.mubr.bf16.gmra.mxu0 %v1253
      %v1889 = vpop.f32.mrf.mxu0
      %v1890 = vadd.f32 %v465, %v1889
      %v1891 = vpop.f32.mrf.mxu0
      %v1892 = vpop.f32.mrf.mxu0
      %v1893 = vadd.f32 %v465, %v1892
      %v1894 = vpop.f32.mrf.mxu0
      %1895 = vmatprep.mubr.bf16.mxu0 0
      %1896 = vmatmul.mubr.bf16.gmra.mxu0 %v1256
      %v1897 = vpop.f32.mrf.mxu0
      %v1898 = vadd.f32 %v465, %v1897
      %v1899 = vpop.f32.mrf.mxu0
      %v1900 = vpop.f32.mrf.mxu0
      %v1901 = vadd.f32 %v465, %v1900
      %v1902 = vpop.f32.mrf.mxu0
      %1903 = vmatprep.mubr.bf16.mxu0 0
      %1904 = vmatmul.mubr.bf16.gmra.mxu0 %v1259
      %v1905 = vpop.f32.mrf.mxu0
      %v1906 = vadd.f32 %v465, %v1905
      %v1907 = vpop.f32.mrf.mxu0
      %v1908 = vpop.f32.mrf.mxu0
      %v1909 = vadd.f32 %v465, %v1908
      %v1910 = vpop.f32.mrf.mxu0
      %1911 = vmatprep.mubr.bf16.mxu0 0
      %1912 = vmatmul.mubr.bf16.gmra.mxu0 %v1262
      %v1913 = vpop.f32.mrf.mxu0
      %v1914 = vadd.f32 %v465, %v1913
      %v1915 = vpop.f32.mrf.mxu0
      %v1916 = vpop.f32.mrf.mxu0
      %v1917 = vadd.f32 %v465, %v1916
      %v1918 = vpop.f32.mrf.mxu0
      %1919 = vmatprep.mubr.bf16.mxu0 0
      %1920 = vmatmul.mubr.bf16.gmra.mxu0 %v1265
      %v1921 = vpop.f32.mrf.mxu0
      %v1922 = vadd.f32 %v465, %v1921
      %v1923 = vpop.f32.mrf.mxu0
      %v1924 = vpop.f32.mrf.mxu0
      %v1925 = vadd.f32 %v465, %v1924
      %v1926 = vpop.f32.mrf.mxu0
      %1927 = vmatprep.mubr.bf16.mxu0 0
      %1928 = vmatmul.mubr.bf16.gmra.mxu0 %v1268
      %v1929 = vpop.f32.mrf.mxu0
      %v1930 = vadd.f32 %v465, %v1929
      %v1931 = vpop.f32.mrf.mxu0
      %v1932 = vpop.f32.mrf.mxu0
      %v1933 = vadd.f32 %v465, %v1932
      %v1934 = vpop.f32.mrf.mxu0
      %1935 = vmatprep.mubr.bf16.mxu0 0
      %1936 = vmatmul.mubr.bf16.gmra.mxu0 %v1271
      %v1937 = vpop.f32.mrf.mxu0
      %v1938 = vadd.f32 %v465, %v1937
      %v1939 = vpop.f32.mrf.mxu0
      %v1940 = vpop.f32.mrf.mxu0
      %v1941 = vadd.f32 %v465, %v1940
      %v1942 = vpop.f32.mrf.mxu0
      %1943 = vmatprep.mubr.bf16.mxu0 0
      %1944 = vmatmul.mubr.bf16.gmra.mxu0 %v1274
      %v1945 = vpop.f32.mrf.mxu0
      %v1946 = vadd.f32 %v465, %v1945
      %v1947 = vpop.f32.mrf.mxu0
      %v1948 = vpop.f32.mrf.mxu0
      %v1949 = vadd.f32 %v465, %v1948
      %v1950 = vpop.f32.mrf.mxu0
      %1951 = vmatprep.mubr.bf16.mxu0 0
      %1952 = vmatmul.mubr.bf16.gmra.mxu0 %v1277
      %v1953 = vpop.f32.mrf.mxu0
      %v1954 = vadd.f32 %v465, %v1953
      %v1955 = vpop.f32.mrf.mxu0
      %v1956 = vpop.f32.mrf.mxu0
      %v1957 = vadd.f32 %v465, %v1956
      %v1958 = vpop.f32.mrf.mxu0
      %1959 = vmatprep.mubr.bf16.mxu0 0
      %1960 = vmatmul.mubr.bf16.gmra.mxu0 %v1280
      %v1961 = vpop.f32.mrf.mxu0
      %v1962 = vadd.f32 %v465, %v1961
      %v1963 = vpop.f32.mrf.mxu0
      %v1964 = vpop.f32.mrf.mxu0
      %v1965 = vadd.f32 %v465, %v1964
      %v1966 = vpop.f32.mrf.mxu0
      %1967 = vmatprep.mubr.bf16.mxu0 0
      %1968 = vmatmul.mubr.bf16.gmra.mxu0 %v1283
      %v1969 = vpop.f32.mrf.mxu0
      %v1970 = vadd.f32 %v465, %v1969
      %v1971 = vpop.f32.mrf.mxu0
      %v1972 = vpop.f32.mrf.mxu0
      %v1973 = vadd.f32 %v465, %v1972
      %v1974 = vpop.f32.mrf.mxu0
      %1975 = vmatprep.mubr.bf16.mxu0 0
      %1976 = vmatmul.mubr.bf16.gmra.mxu0 %v1286
      %v1977 = vpop.f32.mrf.mxu0
      %v1978 = vadd.f32 %v465, %v1977
      %v1979 = vpop.f32.mrf.mxu0
      %v1980 = vpop.f32.mrf.mxu0
      %v1981 = vadd.f32 %v465, %v1980
      %v1982 = vpop.f32.mrf.mxu0
      %1983 = vmatprep.mubr.bf16.mxu0 0
      %1984 = vmatmul.mubr.bf16.gmra.mxu0 %v1289
      %v1985 = vpop.f32.mrf.mxu0
      %v1986 = vadd.f32 %v465, %v1985
      %v1987 = vpop.f32.mrf.mxu0
      %v1988 = vpop.f32.mrf.mxu0
      %v1989 = vadd.f32 %v465, %v1988
      %v1990 = vpop.f32.mrf.mxu0
      %1991 = vmatprep.mubr.bf16.mxu0 0
      %1992 = vmatmul.mubr.bf16.gmra.mxu0 %v1292
      %v1993 = vpop.f32.mrf.mxu0
      %v1994 = vadd.f32 %v465, %v1993
      %v1995 = vpop.f32.mrf.mxu0
      %v1996 = vpop.f32.mrf.mxu0
      %v1997 = vadd.f32 %v465, %v1996
      %v1998 = vpop.f32.mrf.mxu0
      %1999 = vmatprep.mubr.bf16.mxu0 0
      %2000 = vmatmul.mubr.bf16.gmra.mxu0 %v1295
      %v2001 = vpop.f32.mrf.mxu0
      %v2002 = vadd.f32 %v465, %v2001
      %v2003 = vpop.f32.mrf.mxu0
      %v2004 = vpop.f32.mrf.mxu0
      %v2005 = vadd.f32 %v465, %v2004
      %v2006 = vpop.f32.mrf.mxu0
      %2007 = vmatprep.mubr.bf16.mxu0 0
      %2008 = vmatmul.mubr.bf16.gmra.mxu0 %v1298
      %v2009 = vpop.f32.mrf.mxu0
      %v2010 = vadd.f32 %v465, %v2009
      %v2011 = vpop.f32.mrf.mxu0
      %v2012 = vpop.f32.mrf.mxu0
      %v2013 = vadd.f32 %v465, %v2012
      %v2014 = vpop.f32.mrf.mxu0
      %2015 = vmatprep.mubr.bf16.mxu0 0
      %2016 = vmatmul.mubr.bf16.gmra.mxu0 %v1301
      %v2017 = vpop.f32.mrf.mxu0
      %v2018 = vadd.f32 %v465, %v2017
      %v2019 = vpop.f32.mrf.mxu0
      %v2020 = vpop.f32.mrf.mxu0
      %v2021 = vadd.f32 %v465, %v2020
      %v2022 = vpop.f32.mrf.mxu0
      %2023 = vmatprep.mubr.bf16.mxu0 0
      %2024 = vmatmul.mubr.bf16.gmra.mxu0 %v1304
      %v2025 = vpop.f32.mrf.mxu0
      %v2026 = vadd.f32 %v465, %v2025
      %v2027 = vpop.f32.mrf.mxu0
      %v2028 = vpop.f32.mrf.mxu0
      %v2029 = vadd.f32 %v465, %v2028
      %v2030 = vpop.f32.mrf.mxu0
      %2031 = vmatprep.mubr.bf16.mxu0 0
      %2032 = vmatmul.mubr.bf16.gmra.mxu0 %v1307
      %v2033 = vpop.f32.mrf.mxu0
      %v2034 = vadd.f32 %v465, %v2033
      %v2035 = vpop.f32.mrf.mxu0
      %v2036 = vpop.f32.mrf.mxu0
      %v2037 = vadd.f32 %v465, %v2036
      %v2038 = vpop.f32.mrf.mxu0
      %2039 = vmatprep.mubr.bf16.mxu0 0
      %2040 = vmatmul.mubr.bf16.gmra.mxu0 %v1310
      %v2041 = vpop.f32.mrf.mxu0
      %v2042 = vadd.f32 %v465, %v2041
      %v2043 = vpop.f32.mrf.mxu0
      %v2044 = vpop.f32.mrf.mxu0
      %v2045 = vadd.f32 %v465, %v2044
      %v2046 = vpop.f32.mrf.mxu0
      %2047 = vmatprep.mubr.bf16.mxu0 0
      %2048 = vmatmul.mubr.bf16.gmra.mxu0 %v1313
      %v2049 = vpop.f32.mrf.mxu0
      %v2050 = vadd.f32 %v465, %v2049
      %v2051 = vpop.f32.mrf.mxu0
      %v2052 = vpop.f32.mrf.mxu0
      %v2053 = vadd.f32 %v465, %v2052
      %v2054 = vpop.f32.mrf.mxu0
      %2055 = vmatprep.mubr.bf16.mxu0 0
      %2056 = vmatmul.mubr.bf16.gmra.mxu0 %v1316
      %v2057 = vpop.f32.mrf.mxu0
      %v2058 = vadd.f32 %v465, %v2057
      %v2059 = vpop.f32.mrf.mxu0
      %v2060 = vpop.f32.mrf.mxu0
      %v2061 = vadd.f32 %v465, %v2060
      %v2062 = vpop.f32.mrf.mxu0
      %2063 = vmatprep.mubr.bf16.mxu0 0
      %2064 = vmatmul.mubr.bf16.gmra.mxu0 %v1319
      %v2065 = vpop.f32.mrf.mxu0
      %v2066 = vadd.f32 %v465, %v2065
      %v2067 = vpop.f32.mrf.mxu0
      %v2068 = vpop.f32.mrf.mxu0
      %v2069 = vadd.f32 %v465, %v2068
      %v2070 = vpop.f32.mrf.mxu0
      %2071 = vmatprep.mubr.bf16.mxu0 0
      %2072 = vmatmul.mubr.bf16.gmra.mxu0 %v1322
      %v2073 = vpop.f32.mrf.mxu0
      %v2074 = vadd.f32 %v465, %v2073
      %v2075 = vpop.f32.mrf.mxu0
      %v2076 = vpop.f32.mrf.mxu0
      %v2077 = vadd.f32 %v465, %v2076
      %v2078 = vpop.f32.mrf.mxu0
      %2079 = vmatprep.mubr.bf16.mxu0 0
      %2080 = vmatmul.mubr.bf16.gmra.mxu0 %v1325
      %v2081 = vpop.f32.mrf.mxu0
      %v2082 = vadd.f32 %v465, %v2081
      %v2083 = vpop.f32.mrf.mxu0
      %v2084 = vpop.f32.mrf.mxu0
      %v2085 = vadd.f32 %v465, %v2084
      %v2086 = vpop.f32.mrf.mxu0
      %2087 = vmatprep.mubr.bf16.mxu0 0
      %2088 = vmatmul.mubr.bf16.gmra.mxu0 %v1328
      %v2089 = vpop.f32.mrf.mxu0
      %v2090 = vadd.f32 %v465, %v2089
      %v2091 = vpop.f32.mrf.mxu0
      %v2092 = vpop.f32.mrf.mxu0
      %v2093 = vadd.f32 %v465, %v2092
      %v2094 = vpop.f32.mrf.mxu0
      %2095 = vmatprep.mubr.bf16.mxu0 0
      %2096 = vmatmul.mubr.bf16.gmra.mxu0 %v1331
      %v2097 = vpop.f32.mrf.mxu0
      %v2098 = vadd.f32 %v465, %v2097
      %v2099 = vpop.f32.mrf.mxu0
      %v2100 = vpop.f32.mrf.mxu0
      %v2101 = vadd.f32 %v465, %v2100
      %v2102 = vpop.f32.mrf.mxu0
      %2103 = vmatprep.mubr.bf16.mxu0 0
      %2104 = vmatmul.mubr.bf16.gmra.mxu0 %v1334
      %v2105 = vpop.f32.mrf.mxu0
      %v2106 = vadd.f32 %v465, %v2105
      %v2107 = vpop.f32.mrf.mxu0
      %v2108 = vpop.f32.mrf.mxu0
      %v2109 = vadd.f32 %v465, %v2108
      %v2110 = vpop.f32.mrf.mxu0
      %2111 = vmatprep.mubr.bf16.mxu0 0
      %2112 = vmatmul.mubr.bf16.gmra.mxu0 %v1337
      %v2113 = vpop.f32.mrf.mxu0
      %v2114 = vadd.f32 %v465, %v2113
      %v2115 = vpop.f32.mrf.mxu0
      %v2116 = vpop.f32.mrf.mxu0
      %v2117 = vadd.f32 %v465, %v2116
      %v2118 = vpop.f32.mrf.mxu0
      %2119 = vmatprep.mubr.bf16.mxu0 0
      %2120 = vmatmul.mubr.bf16.gmra.mxu0 %v1340
      %v2121 = vpop.f32.mrf.mxu0
      %v2122 = vadd.f32 %v465, %v2121
      %v2123 = vpop.f32.mrf.mxu0
      %v2124 = vpop.f32.mrf.mxu0
      %v2125 = vadd.f32 %v465, %v2124
      %v2126 = vpop.f32.mrf.mxu0
      %2127 = vmatprep.mubr.bf16.mxu0 0
      %2128 = vmatmul.mubr.bf16.gmra.mxu0 %v1343
      %v2129 = vpop.f32.mrf.mxu0
      %v2130 = vadd.f32 %v465, %v2129
      %v2131 = vpop.f32.mrf.mxu0
      %v2132 = vpop.f32.mrf.mxu0
      %v2133 = vadd.f32 %v465, %v2132
      %v2134 = vpop.f32.mrf.mxu0
      %2135 = vmatprep.mubr.bf16.mxu0 0
      %2136 = vmatmul.mubr.bf16.gmra.mxu0 %v1346
      %v2137 = vpop.f32.mrf.mxu0
      %v2138 = vadd.f32 %v465, %v2137
      %v2139 = vpop.f32.mrf.mxu0
      %v2140 = vpop.f32.mrf.mxu0
      %v2141 = vadd.f32 %v465, %v2140
      %v2142 = vpop.f32.mrf.mxu0
      %2143 = vmatprep.mubr.bf16.mxu0 0
      %2144 = vmatmul.mubr.bf16.gmra.mxu0 %v1349
      %v2145 = vpop.f32.mrf.mxu0
      %v2146 = vadd.f32 %v465, %v2145
      %v2147 = vpop.f32.mrf.mxu0
      %v2148 = vpop.f32.mrf.mxu0
      %v2149 = vadd.f32 %v465, %v2148
      %v2150 = vpop.f32.mrf.mxu0
      %2151 = vmatprep.mubr.bf16.mxu0 0
      %2152 = vmatmul.mubr.bf16.gmra.mxu0 %v1352
      %v2153 = vpop.f32.mrf.mxu0
      %v2154 = vadd.f32 %v465, %v2153
      %v2155 = vpop.f32.mrf.mxu0
      %v2156 = vpop.f32.mrf.mxu0
      %v2157 = vadd.f32 %v465, %v2156
      %v2158 = vpop.f32.mrf.mxu0
      %2159 = vmatprep.mubr.bf16.mxu0 0
      %2160 = vmatmul.mubr.bf16.gmra.mxu0 %v1355
      %v2161 = vpop.f32.mrf.mxu0
      %v2162 = vadd.f32 %v465, %v2161
      %v2163 = vpop.f32.mrf.mxu0
      %v2164 = vpop.f32.mrf.mxu0
      %v2165 = vadd.f32 %v465, %v2164
      %v2166 = vpop.f32.mrf.mxu0
      %2167 = vmatprep.mubr.bf16.mxu0 0
      %2168 = vmatmul.mubr.bf16.gmra.mxu0 %v1358
      %v2169 = vpop.f32.mrf.mxu0
      %v2170 = vadd.f32 %v465, %v2169
      %v2171 = vpop.f32.mrf.mxu0
      %v2172 = vpop.f32.mrf.mxu0
      %v2173 = vadd.f32 %v465, %v2172
      %v2174 = vpop.f32.mrf.mxu0
      %2175 = vmatprep.mubr.bf16.mxu0 0
      %2176 = vmatmul.mubr.bf16.gmra.mxu0 %v1361
      %v2177 = vpop.f32.mrf.mxu0
      %v2178 = vadd.f32 %v465, %v2177
      %v2179 = vpop.f32.mrf.mxu0
      %v2180 = vpop.f32.mrf.mxu0
      %v2181 = vadd.f32 %v465, %v2180
      %v2182 = vpop.f32.mrf.mxu0
      %2183 = vmatprep.mubr.bf16.mxu0 0
      %2184 = vmatmul.mubr.bf16.gmra.mxu0 %v1364
      %v2185 = vpop.f32.mrf.mxu0
      %v2186 = vadd.f32 %v465, %v2185
      %v2187 = vpop.f32.mrf.mxu0
      %v2188 = vpop.f32.mrf.mxu0
      %v2189 = vadd.f32 %v465, %v2188
      %v2190 = vpop.f32.mrf.mxu0
      %2191 = vmatprep.mubr.bf16.mxu0 0
      %2192 = vmatmul.mubr.bf16.gmra.mxu0 %v1367
      %v2193 = vpop.f32.mrf.mxu0
      %v2194 = vadd.f32 %v465, %v2193
      %v2195 = vpop.f32.mrf.mxu0
      %v2196 = vpop.f32.mrf.mxu0
      %v2197 = vadd.f32 %v465, %v2196
      %v2198 = vpop.f32.mrf.mxu0
      %2199 = vmatprep.mubr.bf16.mxu0 0
      %2200 = vmatmul.mubr.bf16.gmra.mxu0 %v1370
      %v2201 = vpop.f32.mrf.mxu0
      %v2202 = vadd.f32 %v465, %v2201
      %v2203 = vpop.f32.mrf.mxu0
      %v2204 = vpop.f32.mrf.mxu0
      %v2205 = vadd.f32 %v465, %v2204
      %v2206 = vpop.f32.mrf.mxu0
      %2207 = vmatprep.mubr.bf16.mxu0 0
      %2208 = vmatmul.mubr.bf16.gmra.mxu0 %v1373
      %v2209 = vpop.f32.mrf.mxu0
      %v2210 = vadd.f32 %v465, %v2209
      %v2211 = vpop.f32.mrf.mxu0
      %v2212 = vpop.f32.mrf.mxu0
      %v2213 = vadd.f32 %v465, %v2212
      %v2214 = vpop.f32.mrf.mxu0
      %2215 = vmatprep.mubr.bf16.mxu0 0
      %2216 = vmatmul.mubr.bf16.gmra.mxu0 %v1376
      %v2217 = vpop.f32.mrf.mxu0
      %v2218 = vadd.f32 %v465, %v2217
      %v2219 = vpop.f32.mrf.mxu0
      %v2220 = vpop.f32.mrf.mxu0
      %v2221 = vadd.f32 %v465, %v2220
      %v2222 = vpop.f32.mrf.mxu0
      %2223 = vmatprep.mubr.bf16.mxu0 0
      %2224 = vmatmul.mubr.bf16.gmra.mxu0 %v1379
      %v2225 = vpop.f32.mrf.mxu0
      %v2226 = vadd.f32 %v465, %v2225
      %v2227 = vpop.f32.mrf.mxu0
      %v2228 = vpop.f32.mrf.mxu0
      %v2229 = vadd.f32 %v465, %v2228
      %v2230 = vpop.f32.mrf.mxu0
      %2231 = vmatprep.mubr.bf16.mxu0 0
      %2232 = vmatmul.mubr.bf16.gmra.mxu0 %v1382
      %v2233 = vpop.f32.mrf.mxu0
      %v2234 = vadd.f32 %v465, %v2233
      %v2235 = vpop.f32.mrf.mxu0
      %v2236 = vpop.f32.mrf.mxu0
      %v2237 = vadd.f32 %v465, %v2236
      %v2238 = vpop.f32.mrf.mxu0
      %2239 = vmatprep.mubr.bf16.mxu0 0
      %2240 = vmatmul.mubr.bf16.gmra.mxu0 %v1385
      %v2241 = vpop.f32.mrf.mxu0
      %v2242 = vadd.f32 %v465, %v2241
      %v2243 = vpop.f32.mrf.mxu0
      %v2244 = vpop.f32.mrf.mxu0
      %v2245 = vadd.f32 %v465, %v2244
      %v2246 = vpop.f32.mrf.mxu0
      %2247 = vmatprep.mubr.bf16.mxu0 0
      %2248 = vmatmul.mubr.bf16.gmra.mxu0 %v1388
      %v2249 = vpop.f32.mrf.mxu0
      %v2250 = vadd.f32 %v465, %v2249
      %v2251 = vpop.f32.mrf.mxu0
      %v2252 = vpop.f32.mrf.mxu0
      %v2253 = vadd.f32 %v465, %v2252
      %v2254 = vpop.f32.mrf.mxu0
      %2255 = vmatprep.mubr.bf16.mxu0 0
      %2256 = vmatmul.mubr.bf16.gmra.mxu0 %v1391
      %v2257 = vpop.f32.mrf.mxu0
      %v2258 = vadd.f32 %v465, %v2257
      %v2259 = vpop.f32.mrf.mxu0
      %v2260 = vpop.f32.mrf.mxu0
      %v2261 = vadd.f32 %v465, %v2260
      %v2262 = vpop.f32.mrf.mxu0
      %2263 = vmatprep.mubr.bf16.mxu0 0
      %2264 = vmatmul.mubr.bf16.gmra.mxu0 %v1394
      %v2265 = vpop.f32.mrf.mxu0
      %v2266 = vadd.f32 %v465, %v2265
      %v2267 = vpop.f32.mrf.mxu0
      %v2268 = vpop.f32.mrf.mxu0
      %v2269 = vadd.f32 %v465, %v2268
      %v2270 = vpop.f32.mrf.mxu0
      %2271 = vmatprep.mubr.bf16.mxu0 0
      %2272 = vmatmul.mubr.bf16.gmra.mxu0 %v1397
      %v2273 = vpop.f32.mrf.mxu0
      %v2274 = vadd.f32 %v465, %v2273
      %v2275 = vpop.f32.mrf.mxu0
      %v2276 = vpop.f32.mrf.mxu0
      %v2277 = vadd.f32 %v465, %v2276
      %v2278 = vpop.f32.mrf.mxu0
      %2279 = vmatprep.mubr.bf16.mxu0 0
      %2280 = vmatmul.mubr.bf16.gmra.mxu0 %v1400
      %v2281 = vpop.f32.mrf.mxu0
      %v2282 = vadd.f32 %v465, %v2281
      %v2283 = vpop.f32.mrf.mxu0
      %v2284 = vpop.f32.mrf.mxu0
      %v2285 = vadd.f32 %v465, %v2284
      %v2286 = vpop.f32.mrf.mxu0
      %2287 = vmatprep.mubr.bf16.mxu0 0
      %2288 = vmatmul.mubr.bf16.gmra.mxu0 %v1403
      %v2289 = vpop.f32.mrf.mxu0
      %v2290 = vadd.f32 %v465, %v2289
      %v2291 = vpop.f32.mrf.mxu0
      %v2292 = vpop.f32.mrf.mxu0
      %v2293 = vadd.f32 %v465, %v2292
      %v2294 = vpop.f32.mrf.mxu0
      %2295 = vmatprep.mubr.bf16.mxu0 0
      %2296 = vmatmul.mubr.bf16.gmra.mxu0 %v1406
      %v2297 = vpop.f32.mrf.mxu0
      %v2298 = vadd.f32 %v465, %v2297
      %v2299 = vpop.f32.mrf.mxu0
      %v2300 = vpop.f32.mrf.mxu0
      %v2301 = vadd.f32 %v465, %v2300
      %v2302 = vpop.f32.mrf.mxu0
      %2303 = vmatprep.mubr.bf16.mxu0 0
      %2304 = vmatmul.mubr.bf16.gmra.mxu0 %v1409
      %v2305 = vpop.f32.mrf.mxu0
      %v2306 = vadd.f32 %v465, %v2305
      %v2307 = vpop.f32.mrf.mxu0
      %v2308 = vpop.f32.mrf.mxu0
      %v2309 = vadd.f32 %v465, %v2308
      %v2310 = vpop.f32.mrf.mxu0
      %2311 = vmatprep.mubr.bf16.mxu0 0
      %2312 = vmatmul.mubr.bf16.gmra.mxu0 %v1412
      %v2313 = vpop.f32.mrf.mxu0
      %v2314 = vadd.f32 %v465, %v2313
      %v2315 = vpop.f32.mrf.mxu0
      %v2316 = vpop.f32.mrf.mxu0
      %v2317 = vadd.f32 %v465, %v2316
      %v2318 = vpop.f32.mrf.mxu0
      %2319 = vmatprep.mubr.bf16.mxu0 0
      %2320 = vmatmul.mubr.bf16.gmra.mxu0 %v1415
      %v2321 = vpop.f32.mrf.mxu0
      %v2322 = vadd.f32 %v465, %v2321
      %v2323 = vpop.f32.mrf.mxu0
      %v2324 = vpop.f32.mrf.mxu0
      %v2325 = vadd.f32 %v465, %v2324
      %v2326 = vpop.f32.mrf.mxu0
      %2327 = vmatprep.mubr.bf16.mxu0 0
      %2328 = vmatmul.mubr.bf16.gmra.mxu0 %v1418
      %v2329 = vpop.f32.mrf.mxu0
      %v2330 = vadd.f32 %v465, %v2329
      %v2331 = vpop.f32.mrf.mxu0
      %v2332 = vpop.f32.mrf.mxu0
      %v2333 = vadd.f32 %v465, %v2332
      %v2334 = vpop.f32.mrf.mxu0
      %2335 = vmatprep.mubr.bf16.mxu0 0
      %2336 = vmatmul.mubr.bf16.gmra.mxu0 %v1421
      %v2337 = vpop.f32.mrf.mxu0
      %v2338 = vadd.f32 %v465, %v2337
      %v2339 = vpop.f32.mrf.mxu0
      %v2340 = vpop.f32.mrf.mxu0
      %v2341 = vadd.f32 %v465, %v2340
      %v2342 = vpop.f32.mrf.mxu0
      %2343 = vmatprep.mubr.bf16.mxu0 0
      %2344 = vmatmul.mubr.bf16.gmra.mxu0 %v1424
      %v2345 = vpop.f32.mrf.mxu0
      %v2346 = vadd.f32 %v465, %v2345
      %v2347 = vpop.f32.mrf.mxu0
      %v2348 = vpop.f32.mrf.mxu0
      %v2349 = vadd.f32 %v465, %v2348
      %v2350 = vpop.f32.mrf.mxu0
      %2351 = vmatprep.mubr.bf16.mxu0 0
      %2352 = vmatmul.mubr.bf16.gmra.mxu0 %v1427
      %v2353 = vpop.f32.mrf.mxu0
      %v2354 = vadd.f32 %v465, %v2353
      %v2355 = vpop.f32.mrf.mxu0
      %v2356 = vpop.f32.mrf.mxu0
      %v2357 = vadd.f32 %v465, %v2356
      %v2358 = vpop.f32.mrf.mxu0
      %2359 = vmatprep.mubr.bf16.mxu0 0
      %2360 = vmatmul.mubr.bf16.gmra.mxu0 %v1430
      %v2361 = vpop.f32.mrf.mxu0
      %v2362 = vadd.f32 %v465, %v2361
      %v2363 = vpop.f32.mrf.mxu0
      %v2364 = vpop.f32.mrf.mxu0
      %v2365 = vadd.f32 %v465, %v2364
      %v2366 = vpop.f32.mrf.mxu0
      %2367 = vmatprep.mubr.bf16.mxu0 0
      %2368 = vmatmul.mubr.bf16.gmra.mxu0 %v1433
      %v2369 = vpop.f32.mrf.mxu0
      %v2370 = vadd.f32 %v465, %v2369
      %v2371 = vpop.f32.mrf.mxu0
      %v2372 = vpop.f32.mrf.mxu0
      %v2373 = vadd.f32 %v465, %v2372
      %v2374 = vpop.f32.mrf.mxu0
      %2375 = vmatprep.mubr.bf16.mxu0 0
      %2376 = vmatmul.mubr.bf16.gmra.mxu0 %v1436
      %v2377 = vpop.f32.mrf.mxu0
      %v2378 = vadd.f32 %v465, %v2377
      %v2379 = vpop.f32.mrf.mxu0
      %v2380 = vpop.f32.mrf.mxu0
      %v2381 = vadd.f32 %v465, %v2380
      %v2382 = vpop.f32.mrf.mxu0
      %2383 = vmatprep.mubr.bf16.mxu0 0
      %2384 = vmatmul.mubr.bf16.gmra.mxu0 %v1439
      %v2385 = vpop.f32.mrf.mxu0
      %v2386 = vadd.f32 %v465, %v2385
      %v2387 = vpop.f32.mrf.mxu0
      %v2388 = vpop.f32.mrf.mxu0
      %v2389 = vadd.f32 %v465, %v2388
      %v2390 = vpop.f32.mrf.mxu0
      %2391 = vmatprep.mubr.bf16.mxu0 0
      %2392 = vmatmul.mubr.bf16.gmra.mxu0 %v1442
      %v2393 = vpop.f32.mrf.mxu0
      %v2394 = vadd.f32 %v465, %v2393
      %v2395 = vpop.f32.mrf.mxu0
      %v2396 = vpop.f32.mrf.mxu0
      %v2397 = vadd.f32 %v465, %v2396
      %v2398 = vpop.f32.mrf.mxu0
      %2399 = vmatprep.mubr.bf16.mxu0 0
      %2400 = vmatmul.mubr.bf16.gmra.mxu0 %v1445
      %v2401 = vpop.f32.mrf.mxu0
      %v2402 = vadd.f32 %v465, %v2401
      %v2403 = vpop.f32.mrf.mxu0
      %v2404 = vpop.f32.mrf.mxu0
      %v2405 = vadd.f32 %v465, %v2404
      %v2406 = vpop.f32.mrf.mxu0
      %2407 = vmatprep.mubr.bf16.mxu0 0
      %2408 = vmatmul.mubr.bf16.gmra.mxu0 %v1448
      %v2409 = vpop.f32.mrf.mxu0
      %v2410 = vadd.f32 %v465, %v2409
      %v2411 = vpop.f32.mrf.mxu0
      %v2412 = vpop.f32.mrf.mxu0
      %v2413 = vadd.f32 %v465, %v2412
      %v2414 = vpop.f32.mrf.mxu0
      %2415 = vmatprep.mubr.bf16.mxu0 0
      %2416 = vmatmul.mubr.bf16.gmra.mxu0 %v1451
      %v2417 = vpop.f32.mrf.mxu0
      %v2418 = vadd.f32 %v465, %v2417
      %v2419 = vpop.f32.mrf.mxu0
      %v2420 = vpop.f32.mrf.mxu0
      %v2421 = vadd.f32 %v465, %v2420
      %v2422 = vpop.f32.mrf.mxu0
      %2423 = vmatprep.mubr.bf16.mxu0 0
      %2424 = vmatmul.mubr.bf16.gmra.mxu0 %v1454
      %v2425 = vpop.f32.mrf.mxu0
      %v2426 = vadd.f32 %v465, %v2425
      %v2427 = vpop.f32.mrf.mxu0
      %v2428 = vpop.f32.mrf.mxu0
      %v2429 = vadd.f32 %v465, %v2428
      %v2430 = vpop.f32.mrf.mxu0
      %2431 = vmatprep.mubr.bf16.mxu0 0
      %2432 = vmatmul.mubr.bf16.gmra.mxu0 %v1457
      %v2433 = vpop.f32.mrf.mxu0
      %v2434 = vadd.f32 %v465, %v2433
      %v2435 = vpop.f32.mrf.mxu0
      %v2436 = vpop.f32.mrf.mxu0
      %v2437 = vadd.f32 %v465, %v2436
      %v2438 = vpop.f32.mrf.mxu0
      %2439 = vmatprep.mubr.bf16.mxu0 0
      %2440 = vmatmul.mubr.bf16.gmra.mxu0 %v1460
      %v2441 = vpop.f32.mrf.mxu0
      %v2442 = vadd.f32 %v465, %v2441
      %v2443 = vpop.f32.mrf.mxu0
      %v2444 = vpop.f32.mrf.mxu0
      %v2445 = vadd.f32 %v465, %v2444
      %v2446 = vpop.f32.mrf.mxu0
      %2447 = vmatprep.mubr.bf16.mxu0 0
      %2448 = vmatmul.mubr.bf16.gmra.mxu0 %v1463
      %v2449 = vpop.f32.mrf.mxu0
      %v2450 = vadd.f32 %v465, %v2449
      %v2451 = vpop.f32.mrf.mxu0
      %v2452 = vpop.f32.mrf.mxu0
      %v2453 = vadd.f32 %v465, %v2452
      %v2454 = vpop.f32.mrf.mxu0
      %2455 = vmatprep.mubr.bf16.mxu0 0
      %2456 = vmatmul.mubr.bf16.gmra.mxu0 %v1466
      %v2457 = vpop.f32.mrf.mxu0
      %v2458 = vadd.f32 %v465, %v2457
      %v2459 = vpop.f32.mrf.mxu0
      %v2460 = vpop.f32.mrf.mxu0
      %v2461 = vadd.f32 %v465, %v2460
      %v2462 = vpop.f32.mrf.mxu0
      %2463 = vmatprep.mubr.bf16.mxu0 0
      %2464 = vmatmul.mubr.bf16.gmra.mxu0 %v1469
      %v2465 = vpop.f32.mrf.mxu0
      %v2466 = vadd.f32 %v465, %v2465
      %v2467 = vpop.f32.mrf.mxu0
      %v2468 = vpop.f32.mrf.mxu0
      %v2469 = vadd.f32 %v465, %v2468
      %v2470 = vpop.f32.mrf.mxu0
      %2471 = vmatprep.mubr.bf16.mxu0 0
      %2472 = vmatmul.mubr.bf16.gmra.mxu0 %v1472
      %v2473 = vpop.f32.mrf.mxu0
      %v2474 = vadd.f32 %v465, %v2473
      %v2475 = vpop.f32.mrf.mxu0
      %v2476 = vpop.f32.mrf.mxu0
      %v2477 = vadd.f32 %v465, %v2476
      %v2478 = vpop.f32.mrf.mxu0
      %2479 = vmatprep.mubr.bf16.mxu0 0
      %2480 = vmatmul.mubr.bf16.gmra.mxu0 %v1475
      %v2481 = vpop.f32.mrf.mxu0
      %v2482 = vadd.f32 %v465, %v2481
      %v2483 = vpop.f32.mrf.mxu0
      %v2484 = vpop.f32.mrf.mxu0
      %v2485 = vadd.f32 %v465, %v2484
      %v2486 = vpop.f32.mrf.mxu0
      %2487 = vmatprep.mubr.bf16.mxu0 0
      %2488 = vmatmul.mubr.bf16.gmra.mxu0 %v1478
      %v2489 = vpop.f32.mrf.mxu0
      %v2490 = vadd.f32 %v465, %v2489
      %v2491 = vpop.f32.mrf.mxu0
      %v2492 = vpop.f32.mrf.mxu0
      %v2493 = vadd.f32 %v465, %v2492
      %v2494 = vpop.f32.mrf.mxu0
      %2495 = vmatprep.mubr.bf16.mxu0 0
      %2496 = vmatmul.mubr.bf16.gmra.mxu0 %v1481
      %v2497 = vpop.f32.mrf.mxu0
      %v2498 = vadd.f32 %v465, %v2497
      %v2499 = vpop.f32.mrf.mxu0
      %v2500 = vpop.f32.mrf.mxu0
      %v2501 = vadd.f32 %v465, %v2500
      %v2502 = vpop.f32.mrf.mxu0
      %2503 = vmatprep.mubr.bf16.mxu0 0
      %2504 = vmatmul.mubr.bf16.gmra.mxu0 %v1484
      %v2505 = vpop.f32.mrf.mxu0
      %v2506 = vadd.f32 %v465, %v2505
      %v2507 = vpop.f32.mrf.mxu0
      %v2508 = vpop.f32.mrf.mxu0
      %v2509 = vadd.f32 %v465, %v2508
      %v2510 = vpop.f32.mrf.mxu0
      %2511 = vmatprep.mubr.bf16.mxu0 0
      %2512 = vmatmul.mubr.bf16.gmra.mxu0 %v1487
      %v2513 = vpop.f32.mrf.mxu0
      %v2514 = vadd.f32 %v465, %v2513
      %v2515 = vpop.f32.mrf.mxu0
      %v2516 = vpop.f32.mrf.mxu0
      %v2517 = vadd.f32 %v465, %v2516
      %v2518 = vpop.f32.mrf.mxu0
      %2519 = vmatprep.mubr.bf16.mxu0 0
      %2520 = vmatmul.mubr.bf16.gmra.mxu0 %v1490
      %v2521 = vpop.f32.mrf.mxu0
      %v2522 = vadd.f32 %v465, %v2521
      %v2523 = vpop.f32.mrf.mxu0
      %v2524 = vpop.f32.mrf.mxu0
      %v2525 = vadd.f32 %v465, %v2524
      %v2526 = vpop.f32.mrf.mxu0
      %2527 = vmatprep.mubr.bf16.mxu0 0
      %2528 = vmatmul.mubr.bf16.gmra.mxu0 %v1493
      %v2529 = vpop.f32.mrf.mxu0
      %v2530 = vadd.f32 %v465, %v2529
      %v2531 = vpop.f32.mrf.mxu0
      %v2532 = vpop.f32.mrf.mxu0
      %v2533 = vadd.f32 %v465, %v2532
      %v2534 = vpop.f32.mrf.mxu0
      %2535 = vmatprep.mubr.bf16.mxu0 0
      %2536 = vmatmul.mubr.bf16.gmra.mxu0 %v1496
      %v2537 = vpop.f32.mrf.mxu0
      %v2538 = vadd.f32 %v465, %v2537
      %v2539 = vpop.f32.mrf.mxu0
      %v2540 = vpop.f32.mrf.mxu0
      %v2541 = vadd.f32 %v465, %v2540
      %v2542 = vpop.f32.mrf.mxu0
      %2543 = vmatprep.mubr.bf16.mxu0 0
      %2544 = vmatmul.mubr.bf16.gmra.mxu0 %v1499
      %v2545 = vpop.f32.mrf.mxu0
      %v2546 = vadd.f32 %v465, %v2545
      %v2547 = vpop.f32.mrf.mxu0
      %v2548 = vpop.f32.mrf.mxu0
      %v2549 = vadd.f32 %v465, %v2548
      %v2550 = vpop.f32.mrf.mxu0
      %2551 = vmatprep.mubr.bf16.mxu0 0
      %2552 = vmatmul.mubr.bf16.gmra.mxu0 %v1502
      %v2553 = vpop.f32.mrf.mxu0
      %v2554 = vadd.f32 %v465, %v2553
      %v2555 = vpop.f32.mrf.mxu0
      %v2556 = vpop.f32.mrf.mxu0
      %v2557 = vadd.f32 %v465, %v2556
      %v2558 = vpop.f32.mrf.mxu0
      %2559 = vmatprep.mubr.bf16.mxu0 0
      %2560 = vmatmul.mubr.bf16.gmra.mxu0 %v1505
      %v2561 = vpop.f32.mrf.mxu0
      %v2562 = vadd.f32 %v465, %v2561
      %v2563 = vpop.f32.mrf.mxu0
      %v2564 = vpop.f32.mrf.mxu0
      %v2565 = vadd.f32 %v465, %v2564
      %v2566 = vpop.f32.mrf.mxu0
      %2567 = vdwg.mxu0
      %v2568 = vmax.f32 %v1546, 0.0
      %v2569 = vmax.f32 %v1549, 0.0
      %v2570 = vmax.f32 %v1554, 0.0
      %v2571 = vmax.f32 %v1557, 0.0
      %v2572 = vmax.f32 %v1562, 0.0
      %v2573 = vmax.f32 %v1565, 0.0
      %v2574 = vmax.f32 %v1570, 0.0
      %v2575 = vmax.f32 %v1573, 0.0
      %v2576 = vmax.f32 %v1578, 0.0
      %v2577 = vmax.f32 %v1581, 0.0
      %v2578 = vmax.f32 %v1586, 0.0
      %v2579 = vmax.f32 %v1589, 0.0
      %v2580 = vmax.f32 %v1594, 0.0
      %v2581 = vmax.f32 %v1597, 0.0
      %v2582 = vmax.f32 %v1602, 0.0
      %v2583 = vmax.f32 %v1605, 0.0
      %v2584 = vmax.f32 %v1610, 0.0
      %v2585 = vmax.f32 %v1613, 0.0
      %v2586 = vmax.f32 %v1618, 0.0
      %v2587 = vmax.f32 %v1621, 0.0
      %v2588 = vmax.f32 %v1626, 0.0
      %v2589 = vmax.f32 %v1629, 0.0
      %v2590 = vmax.f32 %v1634, 0.0
      %v2591 = vmax.f32 %v1637, 0.0
      %v2592 = vmax.f32 %v1642, 0.0
      %v2593 = vmax.f32 %v1645, 0.0
      %v2594 = vmax.f32 %v1650, 0.0
      %v2595 = vmax.f32 %v1653, 0.0
      %v2596 = vmax.f32 %v1658, 0.0
      %v2597 = vmax.f32 %v1661, 0.0
      %v2598 = vmax.f32 %v1666, 0.0
      %v2599 = vmax.f32 %v1669, 0.0
      %v2600 = vmax.f32 %v1674, 0.0
      %v2601 = vmax.f32 %v1677, 0.0
      %v2602 = vmax.f32 %v1682, 0.0
      %v2603 = vmax.f32 %v1685, 0.0
      %v2604 = vmax.f32 %v1690, 0.0
      %v2605 = vmax.f32 %v1693, 0.0
      %v2606 = vmax.f32 %v1698, 0.0
      %v2607 = vmax.f32 %v1701, 0.0
      %v2608 = vmax.f32 %v1706, 0.0
      %v2609 = vmax.f32 %v1709, 0.0
      %v2610 = vmax.f32 %v1714, 0.0
      %v2611 = vmax.f32 %v1717, 0.0
      %v2612 = vmax.f32 %v1722, 0.0
      %v2613 = vmax.f32 %v1725, 0.0
      %v2614 = vmax.f32 %v1730, 0.0
      %v2615 = vmax.f32 %v1733, 0.0
      %v2616 = vmax.f32 %v1738, 0.0
      %v2617 = vmax.f32 %v1741, 0.0
      %v2618 = vmax.f32 %v1746, 0.0
      %v2619 = vmax.f32 %v1749, 0.0
      %v2620 = vmax.f32 %v1754, 0.0
      %v2621 = vmax.f32 %v1757, 0.0
      %v2622 = vmax.f32 %v1762, 0.0
      %v2623 = vmax.f32 %v1765, 0.0
      %v2624 = vmax.f32 %v1770, 0.0
      %v2625 = vmax.f32 %v1773, 0.0
      %v2626 = vmax.f32 %v1778, 0.0
      %v2627 = vmax.f32 %v1781, 0.0
      %v2628 = vmax.f32 %v1786, 0.0
      %v2629 = vmax.f32 %v1789, 0.0
      %v2630 = vmax.f32 %v1794, 0.0
      %v2631 = vmax.f32 %v1797, 0.0
      %v2632 = vmax.f32 %v1802, 0.0
      %v2633 = vmax.f32 %v1805, 0.0
      %v2634 = vmax.f32 %v1810, 0.0
      %v2635 = vmax.f32 %v1813, 0.0
      %v2636 = vmax.f32 %v1818, 0.0
      %v2637 = vmax.f32 %v1821, 0.0
      %v2638 = vmax.f32 %v1826, 0.0
      %v2639 = vmax.f32 %v1829, 0.0
      %v2640 = vmax.f32 %v1834, 0.0
      %v2641 = vmax.f32 %v1837, 0.0
      %v2642 = vmax.f32 %v1842, 0.0
      %v2643 = vmax.f32 %v1845, 0.0
      %v2644 = vmax.f32 %v1850, 0.0
      %v2645 = vmax.f32 %v1853, 0.0
      %v2646 = vmax.f32 %v1858, 0.0
      %v2647 = vmax.f32 %v1861, 0.0
      %v2648 = vmax.f32 %v1866, 0.0
      %v2649 = vmax.f32 %v1869, 0.0
      %v2650 = vmax.f32 %v1874, 0.0
      %v2651 = vmax.f32 %v1877, 0.0
      %v2652 = vmax.f32 %v1882, 0.0
      %v2653 = vmax.f32 %v1885, 0.0
      %v2654 = vmax.f32 %v1890, 0.0
      %v2655 = vmax.f32 %v1893, 0.0
      %v2656 = vmax.f32 %v1898, 0.0
      %v2657 = vmax.f32 %v1901, 0.0
      %v2658 = vmax.f32 %v1906, 0.0
      %v2659 = vmax.f32 %v1909, 0.0
      %v2660 = vmax.f32 %v1914, 0.0
      %v2661 = vmax.f32 %v1917, 0.0
      %v2662 = vmax.f32 %v1922, 0.0
      %v2663 = vmax.f32 %v1925, 0.0
      %v2664 = vmax.f32 %v1930, 0.0
      %v2665 = vmax.f32 %v1933, 0.0
      %v2666 = vmax.f32 %v1938, 0.0
      %v2667 = vmax.f32 %v1941, 0.0
      %v2668 = vmax.f32 %v1946, 0.0
      %v2669 = vmax.f32 %v1949, 0.0
      %v2670 = vmax.f32 %v1954, 0.0
      %v2671 = vmax.f32 %v1957, 0.0
      %v2672 = vmax.f32 %v1962, 0.0
      %v2673 = vmax.f32 %v1965, 0.0
      %v2674 = vmax.f32 %v1970, 0.0
      %v2675 = vmax.f32 %v1973, 0.0
      %v2676 = vmax.f32 %v1978, 0.0
      %v2677 = vmax.f32 %v1981, 0.0
      %v2678 = vmax.f32 %v1986, 0.0
      %v2679 = vmax.f32 %v1989, 0.0
      %v2680 = vmax.f32 %v1994, 0.0
      %v2681 = vmax.f32 %v1997, 0.0
      %v2682 = vmax.f32 %v2002, 0.0
      %v2683 = vmax.f32 %v2005, 0.0
      %v2684 = vmax.f32 %v2010, 0.0
      %v2685 = vmax.f32 %v2013, 0.0
      %v2686 = vmax.f32 %v2018, 0.0
      %v2687 = vmax.f32 %v2021, 0.0
      %v2688 = vmax.f32 %v2026, 0.0
      %v2689 = vmax.f32 %v2029, 0.0
      %v2690 = vmax.f32 %v2034, 0.0
      %v2691 = vmax.f32 %v2037, 0.0
      %v2692 = vmax.f32 %v2042, 0.0
      %v2693 = vmax.f32 %v2045, 0.0
      %v2694 = vmax.f32 %v2050, 0.0
      %v2695 = vmax.f32 %v2053, 0.0
      %v2696 = vmax.f32 %v2058, 0.0
      %v2697 = vmax.f32 %v2061, 0.0
      %v2698 = vmax.f32 %v2066, 0.0
      %v2699 = vmax.f32 %v2069, 0.0
      %v2700 = vmax.f32 %v2074, 0.0
      %v2701 = vmax.f32 %v2077, 0.0
      %v2702 = vmax.f32 %v2082, 0.0
      %v2703 = vmax.f32 %v2085, 0.0
      %v2704 = vmax.f32 %v2090, 0.0
      %v2705 = vmax.f32 %v2093, 0.0
      %v2706 = vmax.f32 %v2098, 0.0
      %v2707 = vmax.f32 %v2101, 0.0
      %v2708 = vmax.f32 %v2106, 0.0
      %v2709 = vmax.f32 %v2109, 0.0
      %v2710 = vmax.f32 %v2114, 0.0
      %v2711 = vmax.f32 %v2117, 0.0
      %v2712 = vmax.f32 %v2122, 0.0
      %v2713 = vmax.f32 %v2125, 0.0
      %v2714 = vmax.f32 %v2130, 0.0
      %v2715 = vmax.f32 %v2133, 0.0
      %v2716 = vmax.f32 %v2138, 0.0
      %v2717 = vmax.f32 %v2141, 0.0
      %v2718 = vmax.f32 %v2146, 0.0
      %v2719 = vmax.f32 %v2149, 0.0
      %v2720 = vmax.f32 %v2154, 0.0
      %v2721 = vmax.f32 %v2157, 0.0
      %v2722 = vmax.f32 %v2162, 0.0
      %v2723 = vmax.f32 %v2165, 0.0
      %v2724 = vmax.f32 %v2170, 0.0
      %v2725 = vmax.f32 %v2173, 0.0
      %v2726 = vmax.f32 %v2178, 0.0
      %v2727 = vmax.f32 %v2181, 0.0
      %v2728 = vmax.f32 %v2186, 0.0
      %v2729 = vmax.f32 %v2189, 0.0
      %v2730 = vmax.f32 %v2194, 0.0
      %v2731 = vmax.f32 %v2197, 0.0
      %v2732 = vmax.f32 %v2202, 0.0
      %v2733 = vmax.f32 %v2205, 0.0
      %v2734 = vmax.f32 %v2210, 0.0
      %v2735 = vmax.f32 %v2213, 0.0
      %v2736 = vmax.f32 %v2218, 0.0
      %v2737 = vmax.f32 %v2221, 0.0
      %v2738 = vmax.f32 %v2226, 0.0
      %v2739 = vmax.f32 %v2229, 0.0
      %v2740 = vmax.f32 %v2234, 0.0
      %v2741 = vmax.f32 %v2237, 0.0
      %v2742 = vmax.f32 %v2242, 0.0
      %v2743 = vmax.f32 %v2245, 0.0
      %v2744 = vmax.f32 %v2250, 0.0
      %v2745 = vmax.f32 %v2253, 0.0
      %v2746 = vmax.f32 %v2258, 0.0
      %v2747 = vmax.f32 %v2261, 0.0
      %v2748 = vmax.f32 %v2266, 0.0
      %v2749 = vmax.f32 %v2269, 0.0
      %v2750 = vmax.f32 %v2274, 0.0
      %v2751 = vmax.f32 %v2277, 0.0
      %v2752 = vmax.f32 %v2282, 0.0
      %v2753 = vmax.f32 %v2285, 0.0
      %v2754 = vmax.f32 %v2290, 0.0
      %v2755 = vmax.f32 %v2293, 0.0
      %v2756 = vmax.f32 %v2298, 0.0
      %v2757 = vmax.f32 %v2301, 0.0
      %v2758 = vmax.f32 %v2306, 0.0
      %v2759 = vmax.f32 %v2309, 0.0
      %v2760 = vmax.f32 %v2314, 0.0
      %v2761 = vmax.f32 %v2317, 0.0
      %v2762 = vmax.f32 %v2322, 0.0
      %v2763 = vmax.f32 %v2325, 0.0
      %v2764 = vmax.f32 %v2330, 0.0
      %v2765 = vmax.f32 %v2333, 0.0
      %v2766 = vmax.f32 %v2338, 0.0
      %v2767 = vmax.f32 %v2341, 0.0
      %v2768 = vmax.f32 %v2346, 0.0
      %v2769 = vmax.f32 %v2349, 0.0
      %v2770 = vmax.f32 %v2354, 0.0
      %v2771 = vmax.f32 %v2357, 0.0
      %v2772 = vmax.f32 %v2362, 0.0
      %v2773 = vmax.f32 %v2365, 0.0
      %v2774 = vmax.f32 %v2370, 0.0
      %v2775 = vmax.f32 %v2373, 0.0
      %v2776 = vmax.f32 %v2378, 0.0
      %v2777 = vmax.f32 %v2381, 0.0
      %v2778 = vmax.f32 %v2386, 0.0
      %v2779 = vmax.f32 %v2389, 0.0
      %v2780 = vmax.f32 %v2394, 0.0
      %v2781 = vmax.f32 %v2397, 0.0
      %v2782 = vmax.f32 %v2402, 0.0
      %v2783 = vmax.f32 %v2405, 0.0
      %v2784 = vmax.f32 %v2410, 0.0
      %v2785 = vmax.f32 %v2413, 0.0
      %v2786 = vmax.f32 %v2418, 0.0
      %v2787 = vmax.f32 %v2421, 0.0
      %v2788 = vmax.f32 %v2426, 0.0
      %v2789 = vmax.f32 %v2429, 0.0
      %v2790 = vmax.f32 %v2434, 0.0
      %v2791 = vmax.f32 %v2437, 0.0
      %v2792 = vmax.f32 %v2442, 0.0
      %v2793 = vmax.f32 %v2445, 0.0
      %v2794 = vmax.f32 %v2450, 0.0
      %v2795 = vmax.f32 %v2453, 0.0
      %v2796 = vmax.f32 %v2458, 0.0
      %v2797 = vmax.f32 %v2461, 0.0
      %v2798 = vmax.f32 %v2466, 0.0
      %v2799 = vmax.f32 %v2469, 0.0
      %v2800 = vmax.f32 %v2474, 0.0
      %v2801 = vmax.f32 %v2477, 0.0
      %v2802 = vmax.f32 %v2482, 0.0
      %v2803 = vmax.f32 %v2485, 0.0
      %v2804 = vmax.f32 %v2490, 0.0
      %v2805 = vmax.f32 %v2493, 0.0
      %v2806 = vmax.f32 %v2498, 0.0
      %v2807 = vmax.f32 %v2501, 0.0
      %v2808 = vmax.f32 %v2506, 0.0
      %v2809 = vmax.f32 %v2509, 0.0
      %v2810 = vmax.f32 %v2514, 0.0
      %v2811 = vmax.f32 %v2517, 0.0
      %v2812 = vmax.f32 %v2522, 0.0
      %v2813 = vmax.f32 %v2525, 0.0
      %v2814 = vmax.f32 %v2530, 0.0
      %v2815 = vmax.f32 %v2533, 0.0
      %v2816 = vmax.f32 %v2538, 0.0
      %v2817 = vmax.f32 %v2541, 0.0
      %v2818 = vmax.f32 %v2546, 0.0
      %v2819 = vmax.f32 %v2549, 0.0
      %v2820 = vmax.f32 %v2554, 0.0
      %v2821 = vmax.f32 %v2557, 0.0
      %v2822 = vmax.f32 %v2562, 0.0
      %v2823 = vmax.f32 %v2565, 0.0
      %v2824 = vld [vmem:[%s3] sm:$0xff]
      %v2825 = vld [vmem:[%s3 + $0x8] sm:$0xff]
      %v2826 = vld [vmem:[%s3 + $0x10] sm:$0xff]
      %v2827 = vld [vmem:[%s3 + $0x18] sm:$0xff]
      %v2828 = vld [vmem:[%s3 + $0x20] sm:$0xff]
      %v2829 = vld [vmem:[%s3 + $0x28] sm:$0xff]
      %v2830 = vld [vmem:[%s3 + $0x30] sm:$0xff]
      %v2831 = vld [vmem:[%s3 + $0x38] sm:$0xff]
      %v2832 = vpack.c.bf16 %v2569, %v2568
      %v2833 = vpack.c.bf16 %v2571, %v2570
      %v2834 = vpack.c.bf16 %v2573, %v2572
      %v2835 = vpack.c.bf16 %v2575, %v2574
      %v2836 = vpack.c.bf16 %v2577, %v2576
      %v2837 = vpack.c.bf16 %v2579, %v2578
      %v2838 = vpack.c.bf16 %v2581, %v2580
      %v2839 = vpack.c.bf16 %v2583, %v2582
      %v2840 = vpack.c.bf16 %v2585, %v2584
      %v2841 = vpack.c.bf16 %v2587, %v2586
      %v2842 = vpack.c.bf16 %v2589, %v2588
      %v2843 = vpack.c.bf16 %v2591, %v2590
      %v2844 = vpack.c.bf16 %v2593, %v2592
      %v2845 = vpack.c.bf16 %v2595, %v2594
      %v2846 = vpack.c.bf16 %v2597, %v2596
      %v2847 = vpack.c.bf16 %v2599, %v2598
      %v2848 = vpack.c.bf16 %v2601, %v2600
      %v2849 = vpack.c.bf16 %v2603, %v2602
      %v2850 = vpack.c.bf16 %v2605, %v2604
      %v2851 = vpack.c.bf16 %v2607, %v2606
      %v2852 = vpack.c.bf16 %v2609, %v2608
      %v2853 = vpack.c.bf16 %v2611, %v2610
      %v2854 = vpack.c.bf16 %v2613, %v2612
      %v2855 = vpack.c.bf16 %v2615, %v2614
      %v2856 = vpack.c.bf16 %v2617, %v2616
      %v2857 = vpack.c.bf16 %v2619, %v2618
      %v2858 = vpack.c.bf16 %v2621, %v2620
      %v2859 = vpack.c.bf16 %v2623, %v2622
      %v2860 = vpack.c.bf16 %v2625, %v2624
      %v2861 = vpack.c.bf16 %v2627, %v2626
      %v2862 = vpack.c.bf16 %v2629, %v2628
      %v2863 = vpack.c.bf16 %v2631, %v2630
      %v2864 = vpack.c.bf16 %v2633, %v2632
      %v2865 = vpack.c.bf16 %v2635, %v2634
      %v2866 = vpack.c.bf16 %v2637, %v2636
      %v2867 = vpack.c.bf16 %v2639, %v2638
      %v2868 = vpack.c.bf16 %v2641, %v2640
      %v2869 = vpack.c.bf16 %v2643, %v2642
      %v2870 = vpack.c.bf16 %v2645, %v2644
      %v2871 = vpack.c.bf16 %v2647, %v2646
      %v2872 = vpack.c.bf16 %v2649, %v2648
      %v2873 = vpack.c.bf16 %v2651, %v2650
      %v2874 = vpack.c.bf16 %v2653, %v2652
      %v2875 = vpack.c.bf16 %v2655, %v2654
      %v2876 = vpack.c.bf16 %v2657, %v2656
      %v2877 = vpack.c.bf16 %v2659, %v2658
      %v2878 = vpack.c.bf16 %v2661, %v2660
      %v2879 = vpack.c.bf16 %v2663, %v2662
      %v2880 = vpack.c.bf16 %v2665, %v2664
      %v2881 = vpack.c.bf16 %v2667, %v2666
      %v2882 = vpack.c.bf16 %v2669, %v2668
      %v2883 = vpack.c.bf16 %v2671, %v2670
      %v2884 = vpack.c.bf16 %v2673, %v2672
      %v2885 = vpack.c.bf16 %v2675, %v2674
      %v2886 = vpack.c.bf16 %v2677, %v2676
      %v2887 = vpack.c.bf16 %v2679, %v2678
      %v2888 = vpack.c.bf16 %v2681, %v2680
      %v2889 = vpack.c.bf16 %v2683, %v2682
      %v2890 = vpack.c.bf16 %v2685, %v2684
      %v2891 = vpack.c.bf16 %v2687, %v2686
      %v2892 = vpack.c.bf16 %v2689, %v2688
      %v2893 = vpack.c.bf16 %v2691, %v2690
      %v2894 = vpack.c.bf16 %v2693, %v2692
      %v2895 = vpack.c.bf16 %v2695, %v2694
      %v2896 = vpack.c.bf16 %v2697, %v2696
      %v2897 = vpack.c.bf16 %v2699, %v2698
      %v2898 = vpack.c.bf16 %v2701, %v2700
      %v2899 = vpack.c.bf16 %v2703, %v2702
      %v2900 = vpack.c.bf16 %v2705, %v2704
      %v2901 = vpack.c.bf16 %v2707, %v2706
      %v2902 = vpack.c.bf16 %v2709, %v2708
      %v2903 = vpack.c.bf16 %v2711, %v2710
      %v2904 = vpack.c.bf16 %v2713, %v2712
      %v2905 = vpack.c.bf16 %v2715, %v2714
      %v2906 = vpack.c.bf16 %v2717, %v2716
      %v2907 = vpack.c.bf16 %v2719, %v2718
      %v2908 = vpack.c.bf16 %v2721, %v2720
      %v2909 = vpack.c.bf16 %v2723, %v2722
      %v2910 = vpack.c.bf16 %v2725, %v2724
      %v2911 = vpack.c.bf16 %v2727, %v2726
      %v2912 = vpack.c.bf16 %v2729, %v2728
      %v2913 = vpack.c.bf16 %v2731, %v2730
      %v2914 = vpack.c.bf16 %v2733, %v2732
      %v2915 = vpack.c.bf16 %v2735, %v2734
      %v2916 = vpack.c.bf16 %v2737, %v2736
      %v2917 = vpack.c.bf16 %v2739, %v2738
      %v2918 = vpack.c.bf16 %v2741, %v2740
      %v2919 = vpack.c.bf16 %v2743, %v2742
      %v2920 = vpack.c.bf16 %v2745, %v2744
      %v2921 = vpack.c.bf16 %v2747, %v2746
      %v2922 = vpack.c.bf16 %v2749, %v2748
      %v2923 = vpack.c.bf16 %v2751, %v2750
      %v2924 = vpack.c.bf16 %v2753, %v2752
      %v2925 = vpack.c.bf16 %v2755, %v2754
      %v2926 = vpack.c.bf16 %v2757, %v2756
      %v2927 = vpack.c.bf16 %v2759, %v2758
      %v2928 = vpack.c.bf16 %v2761, %v2760
      %v2929 = vpack.c.bf16 %v2763, %v2762
      %v2930 = vpack.c.bf16 %v2765, %v2764
      %v2931 = vpack.c.bf16 %v2767, %v2766
      %v2932 = vpack.c.bf16 %v2769, %v2768
      %v2933 = vpack.c.bf16 %v2771, %v2770
      %v2934 = vpack.c.bf16 %v2773, %v2772
      %v2935 = vpack.c.bf16 %v2775, %v2774
      %v2936 = vpack.c.bf16 %v2777, %v2776
      %v2937 = vpack.c.bf16 %v2779, %v2778
      %v2938 = vpack.c.bf16 %v2781, %v2780
      %v2939 = vpack.c.bf16 %v2783, %v2782
      %v2940 = vpack.c.bf16 %v2785, %v2784
      %v2941 = vpack.c.bf16 %v2787, %v2786
      %v2942 = vpack.c.bf16 %v2789, %v2788
      %v2943 = vpack.c.bf16 %v2791, %v2790
      %v2944 = vpack.c.bf16 %v2793, %v2792
      %v2945 = vpack.c.bf16 %v2795, %v2794
      %v2946 = vpack.c.bf16 %v2797, %v2796
      %v2947 = vpack.c.bf16 %v2799, %v2798
      %v2948 = vpack.c.bf16 %v2801, %v2800
      %v2949 = vpack.c.bf16 %v2803, %v2802
      %v2950 = vpack.c.bf16 %v2805, %v2804
      %v2951 = vpack.c.bf16 %v2807, %v2806
      %v2952 = vpack.c.bf16 %v2809, %v2808
      %v2953 = vpack.c.bf16 %v2811, %v2810
      %v2954 = vpack.c.bf16 %v2813, %v2812
      %v2955 = vpack.c.bf16 %v2815, %v2814
      %v2956 = vpack.c.bf16 %v2817, %v2816
      %v2957 = vpack.c.bf16 %v2819, %v2818
      %v2958 = vpack.c.bf16 %v2821, %v2820
      %v2959 = vpack.c.bf16 %v2823, %v2822
      %v2968 = vunpack.c.l.b16 %v2824
      %v2969 = vunpack.c.h.b16 %v2824
      %v2970 = vunpack.c.l.b16 %v2825
      %v2971 = vunpack.c.h.b16 %v2825
      %v2972 = vunpack.c.l.b16 %v2826
      %v2973 = vunpack.c.h.b16 %v2826
      %v2974 = vunpack.c.l.b16 %v2827
      %v2975 = vunpack.c.h.b16 %v2827
      %v2976 = vunpack.c.l.b16 %v2828
      %v2977 = vunpack.c.h.b16 %v2828
      %v2978 = vunpack.c.l.b16 %v2829
      %v2979 = vunpack.c.h.b16 %v2829
      %v2980 = vunpack.c.l.b16 %v2830
      %v2981 = vunpack.c.h.b16 %v2830
      %v2982 = vunpack.c.l.b16 %v2831
      %v2983 = vunpack.c.h.b16 %v2831
      %v2984 = vpack.c.b16 %v2968, %v2968
      %v2985 = vpack.c.b16 %v2969, %v2969
      %v2986 = vpack.c.b16 %v2970, %v2970
      %v2987 = vpack.c.b16 %v2971, %v2971
      %v2988 = vpack.c.b16 %v2972, %v2972
      %v2989 = vpack.c.b16 %v2973, %v2973
      %v2990 = vpack.c.b16 %v2974, %v2974
      %v2991 = vpack.c.b16 %v2975, %v2975
      %v2992 = vpack.c.b16 %v2976, %v2976
      %v2993 = vpack.c.b16 %v2977, %v2977
      %v2994 = vpack.c.b16 %v2978, %v2978
      %v2995 = vpack.c.b16 %v2979, %v2979
      %v2996 = vpack.c.b16 %v2980, %v2980
      %v2997 = vpack.c.b16 %v2981, %v2981
      %v2998 = vpack.c.b16 %v2982, %v2982
      %v2999 = vpack.c.b16 %v2983, %v2983
      %3016 = vmatprep.subr.bf16.mxu0 0
      %3017 = vmatpush1.bf16.msra.mxu0 %v2839
      %3018 = vmatprep.subr.bf16.mxu0 0
      %3019 = vmatpush1.bf16.msra.mxu0 %v2838
      %3020 = vmatprep.subr.bf16.mxu0 0
      %3021 = vmatpush1.bf16.msra.mxu0 %v2837
      %3022 = vmatprep.subr.bf16.mxu0 0
      %3023 = vmatpush1.bf16.msra.mxu0 %v2836
      %3024 = vmatprep.subr.bf16.mxu0 0
      %3025 = vmatpush1.bf16.msra.mxu0 %v2835
      %3026 = vmatprep.subr.bf16.mxu0 0
      %3027 = vmatpush1.bf16.msra.mxu0 %v2834
      %3028 = vmatprep.subr.bf16.mxu0 0
      %3029 = vmatpush1.bf16.msra.mxu0 %v2833
      %3030 = vmatprep.subr.bf16.mxu0 0
      %3031 = vmatpush1.bf16.msra.mxu0 %v2832
      %3032 = vmatprep.subr.bf16.mxu0 0
      %3033 = vmatpush2.bf16.msra.mxu0 %v2847
      %3034 = vmatprep.subr.bf16.mxu0 0
      %3035 = vmatpush2.bf16.msra.mxu0 %v2846
      %3036 = vmatprep.subr.bf16.mxu0 0
      %3037 = vmatpush2.bf16.msra.mxu0 %v2845
      %3038 = vmatprep.subr.bf16.mxu0 0
      %3039 = vmatpush2.bf16.msra.mxu0 %v2844
      %3040 = vmatprep.subr.bf16.mxu0 0
      %3041 = vmatpush2.bf16.msra.mxu0 %v2843
      %3042 = vmatprep.subr.bf16.mxu0 0
      %3043 = vmatpush2.bf16.msra.mxu0 %v2842
      %3044 = vmatprep.subr.bf16.mxu0 0
      %3045 = vmatpush2.bf16.msra.mxu0 %v2841
      %3046 = vmatprep.subr.bf16.mxu0 0
      %3047 = vmatpush2.bf16.msra.mxu0 %v2840
      %3048 = vmatprep.mubr.bf16.mxu0 %v2985
      %3049 = vmatmul.mubr.bf16.gmra.mxu0 %v2984
      %v3050 = vpop.f32.mrf.mxu0
      %v3051 = vadd.f32 0.0, %v3050
      %v3052 = vpop.f32.mrf.mxu0
      %v3053 = vpop.f32.mrf.mxu0
      %v3054 = vpop.f32.mrf.mxu0
      %3055 = vdwg.mxu0
      %3056 = vmatprep.subr.bf16.mxu0 0
      %3057 = vmatpush1.bf16.msra.mxu0 %v2855
      %3058 = vmatprep.subr.bf16.mxu0 0
      %3059 = vmatpush1.bf16.msra.mxu0 %v2854
      %3060 = vmatprep.subr.bf16.mxu0 0
      %3061 = vmatpush1.bf16.msra.mxu0 %v2853
      %3062 = vmatprep.subr.bf16.mxu0 0
      %3063 = vmatpush1.bf16.msra.mxu0 %v2852
      %3064 = vmatprep.subr.bf16.mxu0 0
      %3065 = vmatpush1.bf16.msra.mxu0 %v2851
      %3066 = vmatprep.subr.bf16.mxu0 0
      %3067 = vmatpush1.bf16.msra.mxu0 %v2850
      %3068 = vmatprep.subr.bf16.mxu0 0
      %3069 = vmatpush1.bf16.msra.mxu0 %v2849
      %3070 = vmatprep.subr.bf16.mxu0 0
      %3071 = vmatpush1.bf16.msra.mxu0 %v2848
      %3072 = vmatprep.subr.bf16.mxu0 0
      %3073 = vmatpush2.bf16.msra.mxu0 %v2863
      %3074 = vmatprep.subr.bf16.mxu0 0
      %3075 = vmatpush2.bf16.msra.mxu0 %v2862
      %3076 = vmatprep.subr.bf16.mxu0 0
      %3077 = vmatpush2.bf16.msra.mxu0 %v2861
      %3078 = vmatprep.subr.bf16.mxu0 0
      %3079 = vmatpush2.bf16.msra.mxu0 %v2860
      %3080 = vmatprep.subr.bf16.mxu0 0
      %3081 = vmatpush2.bf16.msra.mxu0 %v2859
      %3082 = vmatprep.subr.bf16.mxu0 0
      %3083 = vmatpush2.bf16.msra.mxu0 %v2858
      %3084 = vmatprep.subr.bf16.mxu0 0
      %3085 = vmatpush2.bf16.msra.mxu0 %v2857
      %3086 = vmatprep.subr.bf16.mxu0 0
      %3087 = vmatpush2.bf16.msra.mxu0 %v2856
      %3088 = vmatprep.mubr.bf16.mxu0 %v2987
      %3089 = vmatmul.mubr.bf16.gmra.mxu0 %v2986
      %v3090 = vpop.f32.mrf.mxu0
      %v3091 = vadd.f32 %v3051, %v3090
      %v3092 = vpop.f32.mrf.mxu0
      %v3093 = vpop.f32.mrf.mxu0
      %v3094 = vpop.f32.mrf.mxu0
      %3095 = vdwg.mxu0
      %3096 = vmatprep.subr.bf16.mxu0 0
      %3097 = vmatpush1.bf16.msra.mxu0 %v2871
      %3098 = vmatprep.subr.bf16.mxu0 0
      %3099 = vmatpush1.bf16.msra.mxu0 %v2870
      %3100 = vmatprep.subr.bf16.mxu0 0
      %3101 = vmatpush1.bf16.msra.mxu0 %v2869
      %3102 = vmatprep.subr.bf16.mxu0 0
      %3103 = vmatpush1.bf16.msra.mxu0 %v2868
      %3104 = vmatprep.subr.bf16.mxu0 0
      %3105 = vmatpush1.bf16.msra.mxu0 %v2867
      %3106 = vmatprep.subr.bf16.mxu0 0
      %3107 = vmatpush1.bf16.msra.mxu0 %v2866
      %3108 = vmatprep.subr.bf16.mxu0 0
      %3109 = vmatpush1.bf16.msra.mxu0 %v2865
      %3110 = vmatprep.subr.bf16.mxu0 0
      %3111 = vmatpush1.bf16.msra.mxu0 %v2864
      %3112 = vmatprep.subr.bf16.mxu0 0
      %3113 = vmatpush2.bf16.msra.mxu0 %v2879
      %3114 = vmatprep.subr.bf16.mxu0 0
      %3115 = vmatpush2.bf16.msra.mxu0 %v2878
      %3116 = vmatprep.subr.bf16.mxu0 0
      %3117 = vmatpush2.bf16.msra.mxu0 %v2877
      %3118 = vmatprep.subr.bf16.mxu0 0
      %3119 = vmatpush2.bf16.msra.mxu0 %v2876
      %3120 = vmatprep.subr.bf16.mxu0 0
      %3121 = vmatpush2.bf16.msra.mxu0 %v2875
      %3122 = vmatprep.subr.bf16.mxu0 0
      %3123 = vmatpush2.bf16.msra.mxu0 %v2874
      %3124 = vmatprep.subr.bf16.mxu0 0
      %3125 = vmatpush2.bf16.msra.mxu0 %v2873
      %3126 = vmatprep.subr.bf16.mxu0 0
      %3127 = vmatpush2.bf16.msra.mxu0 %v2872
      %3128 = vmatprep.mubr.bf16.mxu0 %v2989
      %3129 = vmatmul.mubr.bf16.gmra.mxu0 %v2988
      %v3130 = vpop.f32.mrf.mxu0
      %v3131 = vadd.f32 %v3091, %v3130
      %v3132 = vpop.f32.mrf.mxu0
      %v3133 = vpop.f32.mrf.mxu0
      %v3134 = vpop.f32.mrf.mxu0
      %3135 = vdwg.mxu0
      %3136 = vmatprep.subr.bf16.mxu0 0
      %3137 = vmatpush1.bf16.msra.mxu0 %v2887
      %3138 = vmatprep.subr.bf16.mxu0 0
      %3139 = vmatpush1.bf16.msra.mxu0 %v2886
      %3140 = vmatprep.subr.bf16.mxu0 0
      %3141 = vmatpush1.bf16.msra.mxu0 %v2885
      %3142 = vmatprep.subr.bf16.mxu0 0
      %3143 = vmatpush1.bf16.msra.mxu0 %v2884
      %3144 = vmatprep.subr.bf16.mxu0 0
      %3145 = vmatpush1.bf16.msra.mxu0 %v2883
      %3146 = vmatprep.subr.bf16.mxu0 0
      %3147 = vmatpush1.bf16.msra.mxu0 %v2882
      %3148 = vmatprep.subr.bf16.mxu0 0
      %3149 = vmatpush1.bf16.msra.mxu0 %v2881
      %3150 = vmatprep.subr.bf16.mxu0 0
      %3151 = vmatpush1.bf16.msra.mxu0 %v2880
      %3152 = vmatprep.subr.bf16.mxu0 0
      %3153 = vmatpush2.bf16.msra.mxu0 %v2895
      %3154 = vmatprep.subr.bf16.mxu0 0
      %3155 = vmatpush2.bf16.msra.mxu0 %v2894
      %3156 = vmatprep.subr.bf16.mxu0 0
      %3157 = vmatpush2.bf16.msra.mxu0 %v2893
      %3158 = vmatprep.subr.bf16.mxu0 0
      %3159 = vmatpush2.bf16.msra.mxu0 %v2892
      %3160 = vmatprep.subr.bf16.mxu0 0
      %3161 = vmatpush2.bf16.msra.mxu0 %v2891
      %3162 = vmatprep.subr.bf16.mxu0 0
      %3163 = vmatpush2.bf16.msra.mxu0 %v2890
      %3164 = vmatprep.subr.bf16.mxu0 0
      %3165 = vmatpush2.bf16.msra.mxu0 %v2889
      %3166 = vmatprep.subr.bf16.mxu0 0
      %3167 = vmatpush2.bf16.msra.mxu0 %v2888
      %3168 = vmatprep.mubr.bf16.mxu0 %v2991
      %3169 = vmatmul.mubr.bf16.gmra.mxu0 %v2990
      %v3170 = vpop.f32.mrf.mxu0
      %v3171 = vadd.f32 %v3131, %v3170
      %v3172 = vpop.f32.mrf.mxu0
      %v3173 = vpop.f32.mrf.mxu0
      %v3174 = vpop.f32.mrf.mxu0
      %3175 = vdwg.mxu0
      %3176 = vmatprep.subr.bf16.mxu0 0
      %3177 = vmatpush1.bf16.msra.mxu0 %v2903
      %3178 = vmatprep.subr.bf16.mxu0 0
      %3179 = vmatpush1.bf16.msra.mxu0 %v2902
      %3180 = vmatprep.subr.bf16.mxu0 0
      %3181 = vmatpush1.bf16.msra.mxu0 %v2901
      %3182 = vmatprep.subr.bf16.mxu0 0
      %3183 = vmatpush1.bf16.msra.mxu0 %v2900
      %3184 = vmatprep.subr.bf16.mxu0 0
      %3185 = vmatpush1.bf16.msra.mxu0 %v2899
      %3186 = vmatprep.subr.bf16.mxu0 0
      %3187 = vmatpush1.bf16.msra.mxu0 %v2898
      %3188 = vmatprep.subr.bf16.mxu0 0
      %3189 = vmatpush1.bf16.msra.mxu0 %v2897
      %3190 = vmatprep.subr.bf16.mxu0 0
      %3191 = vmatpush1.bf16.msra.mxu0 %v2896
      %3192 = vmatprep.subr.bf16.mxu0 0
      %3193 = vmatpush2.bf16.msra.mxu0 %v2911
      %3194 = vmatprep.subr.bf16.mxu0 0
      %3195 = vmatpush2.bf16.msra.mxu0 %v2910
      %3196 = vmatprep.subr.bf16.mxu0 0
      %3197 = vmatpush2.bf16.msra.mxu0 %v2909
      %3198 = vmatprep.subr.bf16.mxu0 0
      %3199 = vmatpush2.bf16.msra.mxu0 %v2908
      %3200 = vmatprep.subr.bf16.mxu0 0
      %3201 = vmatpush2.bf16.msra.mxu0 %v2907
      %3202 = vmatprep.subr.bf16.mxu0 0
      %3203 = vmatpush2.bf16.msra.mxu0 %v2906
      %3204 = vmatprep.subr.bf16.mxu0 0
      %3205 = vmatpush2.bf16.msra.mxu0 %v2905
      %3206 = vmatprep.subr.bf16.mxu0 0
      %3207 = vmatpush2.bf16.msra.mxu0 %v2904
      %3208 = vmatprep.mubr.bf16.mxu0 %v2993
      %3209 = vmatmul.mubr.bf16.gmra.mxu0 %v2992
      %v3210 = vpop.f32.mrf.mxu0
      %v3211 = vadd.f32 %v3171, %v3210
      %v3212 = vpop.f32.mrf.mxu0
      %v3213 = vpop.f32.mrf.mxu0
      %v3214 = vpop.f32.mrf.mxu0
      %3215 = vdwg.mxu0
      %3216 = vmatprep.subr.bf16.mxu0 0
      %3217 = vmatpush1.bf16.msra.mxu0 %v2919
      %3218 = vmatprep.subr.bf16.mxu0 0
      %3219 = vmatpush1.bf16.msra.mxu0 %v2918
      %3220 = vmatprep.subr.bf16.mxu0 0
      %3221 = vmatpush1.bf16.msra.mxu0 %v2917
      %3222 = vmatprep.subr.bf16.mxu0 0
      %3223 = vmatpush1.bf16.msra.mxu0 %v2916
      %3224 = vmatprep.subr.bf16.mxu0 0
      %3225 = vmatpush1.bf16.msra.mxu0 %v2915
      %3226 = vmatprep.subr.bf16.mxu0 0
      %3227 = vmatpush1.bf16.msra.mxu0 %v2914
      %3228 = vmatprep.subr.bf16.mxu0 0
      %3229 = vmatpush1.bf16.msra.mxu0 %v2913
      %3230 = vmatprep.subr.bf16.mxu0 0
      %3231 = vmatpush1.bf16.msra.mxu0 %v2912
      %3232 = vmatprep.subr.bf16.mxu0 0
      %3233 = vmatpush2.bf16.msra.mxu0 %v2927
      %3234 = vmatprep.subr.bf16.mxu0 0
      %3235 = vmatpush2.bf16.msra.mxu0 %v2926
      %3236 = vmatprep.subr.bf16.mxu0 0
      %3237 = vmatpush2.bf16.msra.mxu0 %v2925
      %3238 = vmatprep.subr.bf16.mxu0 0
      %3239 = vmatpush2.bf16.msra.mxu0 %v2924
      %3240 = vmatprep.subr.bf16.mxu0 0
      %3241 = vmatpush2.bf16.msra.mxu0 %v2923
      %3242 = vmatprep.subr.bf16.mxu0 0
      %3243 = vmatpush2.bf16.msra.mxu0 %v2922
      %3244 = vmatprep.subr.bf16.mxu0 0
      %3245 = vmatpush2.bf16.msra.mxu0 %v2921
      %3246 = vmatprep.subr.bf16.mxu0 0
      %3247 = vmatpush2.bf16.msra.mxu0 %v2920
      %3248 = vmatprep.mubr.bf16.mxu0 %v2995
      %3249 = vmatmul.mubr.bf16.gmra.mxu0 %v2994
      %v3250 = vpop.f32.mrf.mxu0
      %v3251 = vadd.f32 %v3211, %v3250
      %v3252 = vpop.f32.mrf.mxu0
      %v3253 = vpop.f32.mrf.mxu0
      %v3254 = vpop.f32.mrf.mxu0
      %3255 = vdwg.mxu0
      %3256 = vmatprep.subr.bf16.mxu0 0
      %3257 = vmatpush1.bf16.msra.mxu0 %v2935
      %3258 = vmatprep.subr.bf16.mxu0 0
      %3259 = vmatpush1.bf16.msra.mxu0 %v2934
      %3260 = vmatprep.subr.bf16.mxu0 0
      %3261 = vmatpush1.bf16.msra.mxu0 %v2933
      %3262 = vmatprep.subr.bf16.mxu0 0
      %3263 = vmatpush1.bf16.msra.mxu0 %v2932
      %3264 = vmatprep.subr.bf16.mxu0 0
      %3265 = vmatpush1.bf16.msra.mxu0 %v2931
      %3266 = vmatprep.subr.bf16.mxu0 0
      %3267 = vmatpush1.bf16.msra.mxu0 %v2930
      %3268 = vmatprep.subr.bf16.mxu0 0
      %3269 = vmatpush1.bf16.msra.mxu0 %v2929
      %3270 = vmatprep.subr.bf16.mxu0 0
      %3271 = vmatpush1.bf16.msra.mxu0 %v2928
      %3272 = vmatprep.subr.bf16.mxu0 0
      %3273 = vmatpush2.bf16.msra.mxu0 %v2943
      %3274 = vmatprep.subr.bf16.mxu0 0
      %3275 = vmatpush2.bf16.msra.mxu0 %v2942
      %3276 = vmatprep.subr.bf16.mxu0 0
      %3277 = vmatpush2.bf16.msra.mxu0 %v2941
      %3278 = vmatprep.subr.bf16.mxu0 0
      %3279 = vmatpush2.bf16.msra.mxu0 %v2940
      %3280 = vmatprep.subr.bf16.mxu0 0
      %3281 = vmatpush2.bf16.msra.mxu0 %v2939
      %3282 = vmatprep.subr.bf16.mxu0 0
      %3283 = vmatpush2.bf16.msra.mxu0 %v2938
      %3284 = vmatprep.subr.bf16.mxu0 0
      %3285 = vmatpush2.bf16.msra.mxu0 %v2937
      %3286 = vmatprep.subr.bf16.mxu0 0
      %3287 = vmatpush2.bf16.msra.mxu0 %v2936
      %3288 = vmatprep.mubr.bf16.mxu0 %v2997
      %3289 = vmatmul.mubr.bf16.gmra.mxu0 %v2996
      %v3290 = vpop.f32.mrf.mxu0
      %v3291 = vadd.f32 %v3251, %v3290
      %v3292 = vpop.f32.mrf.mxu0
      %v3293 = vpop.f32.mrf.mxu0
      %v3294 = vpop.f32.mrf.mxu0
      %3295 = vdwg.mxu0
      %3296 = vmatprep.subr.bf16.mxu0 0
      %3297 = vmatpush1.bf16.msra.mxu0 %v2951
      %3298 = vmatprep.subr.bf16.mxu0 0
      %3299 = vmatpush1.bf16.msra.mxu0 %v2950
      %3300 = vmatprep.subr.bf16.mxu0 0
      %3301 = vmatpush1.bf16.msra.mxu0 %v2949
      %3302 = vmatprep.subr.bf16.mxu0 0
      %3303 = vmatpush1.bf16.msra.mxu0 %v2948
      %3304 = vmatprep.subr.bf16.mxu0 0
      %3305 = vmatpush1.bf16.msra.mxu0 %v2947
      %3306 = vmatprep.subr.bf16.mxu0 0
      %3307 = vmatpush1.bf16.msra.mxu0 %v2946
      %3308 = vmatprep.subr.bf16.mxu0 0
      %3309 = vmatpush1.bf16.msra.mxu0 %v2945
      %3310 = vmatprep.subr.bf16.mxu0 0
      %3311 = vmatpush1.bf16.msra.mxu0 %v2944
      %3312 = vmatprep.subr.bf16.mxu0 0
      %3313 = vmatpush2.bf16.msra.mxu0 %v2959
      %3314 = vmatprep.subr.bf16.mxu0 0
      %3315 = vmatpush2.bf16.msra.mxu0 %v2958
      %3316 = vmatprep.subr.bf16.mxu0 0
      %3317 = vmatpush2.bf16.msra.mxu0 %v2957
      %3318 = vmatprep.subr.bf16.mxu0 0
      %3319 = vmatpush2.bf16.msra.mxu0 %v2956
      %3320 = vmatprep.subr.bf16.mxu0 0
      %3321 = vmatpush2.bf16.msra.mxu0 %v2955
      %3322 = vmatprep.subr.bf16.mxu0 0
      %3323 = vmatpush2.bf16.msra.mxu0 %v2954
      %3324 = vmatprep.subr.bf16.mxu0 0
      %3325 = vmatpush2.bf16.msra.mxu0 %v2953
      %3326 = vmatprep.subr.bf16.mxu0 0
      %3327 = vmatpush2.bf16.msra.mxu0 %v2952
      %3328 = vmatprep.mubr.bf16.mxu0 %v2999
      %3329 = vmatmul.mubr.bf16.gmra.mxu0 %v2998
      %v3330 = vpop.f32.mrf.mxu0
      %v3331 = vadd.f32 %v3291, %v3330
      %v3332 = vpop.f32.mrf.mxu0
      %v3333 = vpop.f32.mrf.mxu0
      %v3334 = vpop.f32.mrf.mxu0
      %3335 = vdwg.mxu0
      %v3336 = vpack.c.bf16 %v3331, %v3331
      %vm3337 = vcmask 257024
      %3338 = vst.msk [vmem:[%s197] sm:$0xf] %vm3337, %v3336
      %p3339 = scmp.lt.s32.totalorder %s15, 1
      %s3340 = scalar_select %p3339, %s15, 1
      %s3341 = smul.addr %s3340, 4
      %s3342 = scalar_lea.vmem %s4, %s3341
      // Predicated region
      $region37: #{anomaly_detection_forward.2} parent=35 // pred_check
        %p3343 = pneg %p122
      $region38: #{anomaly_detection_forward.2} parent=35 // pred_check_branch
        %3345 = sbr.rel (%p3343) target = $region40
      $region39: #{anomaly_detection_forward.2} parent=35 // pred_region
        _
      $region40: #{anomaly_detection_forward.2} parent=35 // pred_fallthru
        _
    $region36: #{anomaly_detection_forward.2} parent=5 // pred_fallthru
      _
    %p3346 = scmp.le.s32.totalorder 2, %s10
    // Predicated region
    $region41: #{anomaly_detection_forward.2} parent=5 // pred_check
      %p3347 = pneg %p3346
    $region42: #{anomaly_detection_forward.2} parent=5 // pred_check_branch
      %3349 = sbr.rel (%p3347) target = $region44
    $region43: #{anomaly_detection_forward.2} parent=5 // pred_region
      %s3350 = ssub.s32 %s10, 2
      // Predicated region
      $region45: #{anomaly_detection_forward.2} parent=43 // pred_check
        %p3351 = pneg %p128
      $region46: #{anomaly_detection_forward.2} parent=43 // pred_check_branch
        %3353 = sbr.rel (%p3351) target = $region48
      $region47: #{anomaly_detection_forward.2} parent=43 // pred_region
        %p3354 = scmp.lt.s32.totalorder %s16, 1
        %s3355 = scalar_select %p3354, %s16, 1
        %s3356 = smul.addr %s3355, 4
        %s3357 = scalar_lea.vmem %s4, %s3356
      $region48: #{anomaly_detection_forward.2} parent=43 // pred_fallthru
        _
    $region44: #{anomaly_detection_forward.2} parent=5 // pred_fallthru
      _
  $region6: #{anomaly_detection_forward.2} parent=0 // loop_footer
    %s14 = sadd.s32 1, %s10
  $region7: #{anomaly_detection_forward.2} parent=0 // loop_footer_branch
    %9 = sbr.rel target = $region3
  $region8: #{anomaly_detection_forward.2} parent=0 // loop_exit
    _

// kernel: anomaly_detection_forward.3
$region0: #{anomaly_detection_forward.3}
  #allocation0 [shape = 'u32[]', space=smem, size = 0x4, offset = 0x4, fixed_abs, tag = 'smem constant byte address 0x4 - core index']
  #allocation1 [shape = 'u32[144,128]{1,0:T(1,128)}', space=vmem, size = 0x12000, scoped, tag = 'internal scratch']
  #allocation2 [shape = 'f32[64,512]{1,0:T(8,128)}', space=vmem, size = 0x20000, scoped, tag = 'scratch operand']
  #allocation3 [shape = 'f32[8,128]{1,0:T(8,128)}', space=vmem, size = 0x1000, scoped, tag = 'scratch operand']
  #allocation4 [shape = 'f32[8,128]{1,0:T(8,128)}', space=vmem, size = 0x1000, scoped, tag = 'scratch operand']
  #allocation5 [shape = 's32[1]{0}', space=sflag, size = 0x4, scoped, tag = 'scoped memory for anomaly_detection_forward.3']
  #allocation6 [shape = 'u8[512]{0}', space=smem, size = 0x200, scoped, tag = 'prefetched SMEM operand 0']
  %s0 = inlined_call_operand.vmem [shape: s32[8], index: 0, kind: input, shape index: {}]
  %s1 = inlined_call_operand.vmem [shape: bf16[1,64,32], index: 1, kind: input, shape index: {}]
  %s2 = inlined_call_operand.vmem [shape: s32[1,8,1], index: 2, kind: input, shape index: {}]
  %s3 = inlined_call_operand.vmem [shape: bf16[32,512], index: 3, kind: input, shape index: {}]
  %s4 = inlined_call_operand.vmem [shape: f32[1,512], index: 4, kind: input, shape index: {}]
  %s5 = inlined_call_operand.vmem [shape: bf16[128,512], index: 5, kind: input, shape index: {}]
  %s6 = inlined_call_operand.vmem [shape: f32[128,2], index: 6, kind: input, shape index: {}]
  %s7 = inlined_call_operand.vmem [shape: f32[1,2], index: 7, kind: input, shape index: {}]
  %s8 = inlined_call_operand.vmem [shape: f32[1,8,2], index: 8, kind: output, shape index: {}]
  %s9 = sld [smem:[#allocation0]]
  $region45: #{anomaly_detection_forward.3} parent=0
    _
  %s11 = ssub.s32 1, %s9
  %s12 = scalar_select 0, %s11, %s9
  %s13 = sshll.u32 %s0, 4
  %s14 = int_to_ptr.vmem [resolvable:$true] %s13
  %16 = dma.vmem_to_smem %s14, 16, [#allocation6], [#allocation5]
  %17 = dma.done [#allocation5], 16
  %18 = sfence
  // Predicated region
  $region2: #{anomaly_detection_forward.3} parent=0 // pred_check
    _
  $region3: #{anomaly_detection_forward.3} parent=0 // pred_check_branch
    %20 = sbr.rel (0) target = $region5
  $region4: #{anomaly_detection_forward.3} parent=0 // pred_region
    _
  $region5: #{anomaly_detection_forward.3} parent=0 // pred_fallthru
    _
  // Predicated region
  $region6: #{anomaly_detection_forward.3} parent=0 // pred_check
    _
  $region7: #{anomaly_detection_forward.3} parent=0 // pred_check_branch
    %22 = sbr.rel (0) target = $region9
  $region8: #{anomaly_detection_forward.3} parent=0 // pred_region
    _
  $region9: #{anomaly_detection_forward.3} parent=0 // pred_fallthru
    _
  // Predicated region
  $region10: #{anomaly_detection_forward.3} parent=0 // pred_check
    _
  $region11: #{anomaly_detection_forward.3} parent=0 // pred_check_branch
    %24 = sbr.rel (0) target = $region13
  $region12: #{anomaly_detection_forward.3} parent=0 // pred_region
    _
  $region13: #{anomaly_detection_forward.3} parent=0 // pred_fallthru
    _
  // Predicated region
  $region14: #{anomaly_detection_forward.3} parent=0 // pred_check
    _
  $region15: #{anomaly_detection_forward.3} parent=0 // pred_check_branch
    %26 = sbr.rel (0) target = $region17
  $region16: #{anomaly_detection_forward.3} parent=0 // pred_region
    _
  $region17: #{anomaly_detection_forward.3} parent=0 // pred_fallthru
    _
  // Predicated region
  $region18: #{anomaly_detection_forward.3} parent=0 // pred_check
    _
  $region19: #{anomaly_detection_forward.3} parent=0 // pred_check_branch
    %28 = sbr.rel (0) target = $region21
  $region20: #{anomaly_detection_forward.3} parent=0 // pred_region
    _
  $region21: #{anomaly_detection_forward.3} parent=0 // pred_fallthru
    _
  // Predicated region
  $region22: #{anomaly_detection_forward.3} parent=0 // pred_check
    _
  $region23: #{anomaly_detection_forward.3} parent=0 // pred_check_branch
    %30 = sbr.rel (0) target = $region25
  $region24: #{anomaly_detection_forward.3} parent=0 // pred_region
    _
  $region25: #{anomaly_detection_forward.3} parent=0 // pred_fallthru
    _
  // Predicated region
  $region26: #{anomaly_detection_forward.3} parent=0 // pred_check
    _
  $region27: #{anomaly_detection_forward.3} parent=0 // pred_check_branch
    %32 = sbr.rel (0) target = $region29
  $region28: #{anomaly_detection_forward.3} parent=0 // pred_region
    _
  $region29: #{anomaly_detection_forward.3} parent=0 // pred_fallthru
    _
  %v34 = vld [vmem:[%s1] sm:$0xf]
  %v35 = vld [vmem:[%s1 + $0x4] sm:$0xf]
  %v36 = vld [vmem:[%s1 + $0x8] sm:$0xf]
  %v37 = vld [vmem:[%s1 + $0xc] sm:$0xf]
  %v38 = vld [vmem:[%s1 + $0x10] sm:$0xf]
  %v39 = vld [vmem:[%s1 + $0x14] sm:$0xf]
  %v40 = vld [vmem:[%s1 + $0x18] sm:$0xf]
  %v41 = vld [vmem:[%s1 + $0x1c] sm:$0xf]
  %v42 = vld [vmem:[%s3] sm:$0xff]
  %v43 = vld [vmem:[%s3 + $0x8] sm:$0xff]
  %v44 = vld [vmem:[%s3 + $0x10] sm:$0xff]
  %v45 = vld [vmem:[%s3 + $0x18] sm:$0xff]
  %v46 = vld [vmem:[%s3 + $0x20] sm:$0xff]
  %v47 = vld [vmem:[%s3 + $0x28] sm:$0xff]
  %v48 = vld [vmem:[%s3 + $0x30] sm:$0xff]
  %v49 = vld [vmem:[%s3 + $0x38] sm:$0xff]
  %v50 = vld [vmem:[%s4] sm:$0xf]
  %v52 = vlaneseq
  %v53 = vshrl.u32 %v52, 7
  %v54 = vsub.s32 0, %v53
  %v55 = vrot.slane %v50, %v54
  %v56 = vlaneseq
  %v57 = vshrl.u32 %v56, 7
  %v58 = vsub.s32 1, %v57
  %v59 = vrot.slane %v50, %v58
  %v60 = vlaneseq
  %v61 = vshrl.u32 %v60, 7
  %v62 = vsub.s32 2, %v61
  %v63 = vrot.slane %v50, %v62
  %v64 = vlaneseq
  %v65 = vshrl.u32 %v64, 7
  %v66 = vsub.s32 3, %v65
  %v67 = vrot.slane %v50, %v66
  %v80 = vunpack.c.l.b16 %v34
  %v81 = vunpack.c.l.b16 %v35
  %v82 = vunpack.c.l.b16 %v36
  %v83 = vunpack.c.l.b16 %v37
  %v84 = vunpack.c.l.b16 %v38
  %v85 = vunpack.c.l.b16 %v39
  %v86 = vunpack.c.l.b16 %v40
  %v87 = vunpack.c.l.b16 %v41
  %v88 = vpack.c.b16 %v81, %v80
  %v89 = vpack.c.b16 %v83, %v82
  %v90 = vpack.c.b16 %v85, %v84
  %v91 = vpack.c.b16 %v87, %v86
  %v100 = vunpack.c.l.b16 %v42
  %v101 = vunpack.c.h.b16 %v42
  %v102 = vunpack.c.l.b16 %v43
  %v103 = vunpack.c.h.b16 %v43
  %v104 = vunpack.c.l.b16 %v44
  %v105 = vunpack.c.h.b16 %v44
  %v106 = vunpack.c.l.b16 %v45
  %v107 = vunpack.c.h.b16 %v45
  %v108 = vunpack.c.l.b16 %v46
  %v109 = vunpack.c.h.b16 %v46
  %v110 = vunpack.c.l.b16 %v47
  %v111 = vunpack.c.h.b16 %v47
  %v112 = vunpack.c.l.b16 %v48
  %v113 = vunpack.c.h.b16 %v48
  %v114 = vunpack.c.l.b16 %v49
  %v115 = vunpack.c.h.b16 %v49
  %v116 = vpack.c.b16 %v104, %v100
  %v117 = vpack.c.b16 %v105, %v101
  %v118 = vpack.c.b16 %v106, %v102
  %v119 = vpack.c.b16 %v107, %v103
  %v120 = vpack.c.b16 %v112, %v108
  %v121 = vpack.c.b16 %v113, %v109
  %v122 = vpack.c.b16 %v114, %v110
  %v123 = vpack.c.b16 %v115, %v111
  %vm132 = vcmask 261120
  %v134 = vsel %vm132, %v88, 0
  %v137 = vsel %vm132, %v89, 0
  %v140 = vsel %vm132, %v90, 0
  %v143 = vsel %vm132, %v91, 0
  %145 = vmatprep.subr.bf16.mxu0 0
  %146 = vmatpush1.bf16.msra.mxu0 0
  %147 = vmatprep.subr.bf16.mxu0 0
  %148 = vmatpush1.bf16.msra.mxu0 0
  %149 = vmatprep.subr.bf16.mxu0 0
  %150 = vmatpush1.bf16.msra.mxu0 0
  %151 = vmatprep.subr.bf16.mxu0 0
  %152 = vmatpush1.bf16.msra.mxu0 0
  %153 = vmatprep.subr.bf16.mxu0 0
  %154 = vmatpush1.bf16.msra.mxu0 0
  %155 = vmatprep.subr.bf16.mxu0 0
  %156 = vmatpush1.bf16.msra.mxu0 0
  %157 = vmatprep.subr.bf16.mxu0 %v121
  %158 = vmatpush1.bf16.msra.mxu0 %v120
  %159 = vmatprep.subr.bf16.mxu0 %v117
  %160 = vmatpush1.bf16.msra.mxu0 %v116
  %161 = vmatprep.subr.bf16.mxu0 0
  %162 = vmatpush2.bf16.msra.mxu0 0
  %163 = vmatprep.subr.bf16.mxu0 0
  %164 = vmatpush2.bf16.msra.mxu0 0
  %165 = vmatprep.subr.bf16.mxu0 0
  %166 = vmatpush2.bf16.msra.mxu0 0
  %167 = vmatprep.subr.bf16.mxu0 0
  %168 = vmatpush2.bf16.msra.mxu0 0
  %169 = vmatprep.subr.bf16.mxu0 0
  %170 = vmatpush2.bf16.msra.mxu0 0
  %171 = vmatprep.subr.bf16.mxu0 0
  %172 = vmatpush2.bf16.msra.mxu0 0
  %173 = vmatprep.subr.bf16.mxu0 0
  %174 = vmatpush2.bf16.msra.mxu0 0
  %175 = vmatprep.subr.bf16.mxu0 0
  %176 = vmatpush2.bf16.msra.mxu0 0
  %177 = vmatprep.mubr.bf16.mxu0 0
  %178 = vmatmul.mubr.bf16.gmra.mxu0 %v134
  %v179 = vpop.f32.mrf.mxu0
  %v180 = vadd.f32 %v55, %v179
  %v181 = vpop.f32.mrf.mxu0
  %v182 = vadd.f32 %v59, %v181
  %v183 = vpop.f32.mrf.mxu0
  %v184 = vadd.f32 %v55, %v183
  %v185 = vpop.f32.mrf.mxu0
  %v186 = vadd.f32 %v59, %v185
  %187 = vmatprep.mubr.bf16.mxu0 0
  %188 = vmatmul.mubr.bf16.gmra.mxu0 %v137
  %v189 = vpop.f32.mrf.mxu0
  %v190 = vadd.f32 %v55, %v189
  %v191 = vpop.f32.mrf.mxu0
  %v192 = vadd.f32 %v59, %v191
  %v193 = vpop.f32.mrf.mxu0
  %v194 = vadd.f32 %v55, %v193
  %v195 = vpop.f32.mrf.mxu0
  %v196 = vadd.f32 %v59, %v195
  %197 = vmatprep.mubr.bf16.mxu0 0
  %198 = vmatmul.mubr.bf16.gmra.mxu0 %v140
  %v199 = vpop.f32.mrf.mxu0
  %v200 = vadd.f32 %v55, %v199
  %v201 = vpop.f32.mrf.mxu0
  %v202 = vadd.f32 %v59, %v201
  %v203 = vpop.f32.mrf.mxu0
  %v204 = vadd.f32 %v55, %v203
  %v205 = vpop.f32.mrf.mxu0
  %v206 = vadd.f32 %v59, %v205
  %207 = vmatprep.mubr.bf16.mxu0 0
  %208 = vmatmul.mubr.bf16.gmra.mxu0 %v143
  %v209 = vpop.f32.mrf.mxu0
  %v210 = vadd.f32 %v55, %v209
  %v211 = vpop.f32.mrf.mxu0
  %v212 = vadd.f32 %v59, %v211
  %v213 = vpop.f32.mrf.mxu0
  %v214 = vadd.f32 %v55, %v213
  %v215 = vpop.f32.mrf.mxu0
  %v216 = vadd.f32 %v59, %v215
  %217 = vdwg.mxu0
  %218 = vmatprep.subr.bf16.mxu0 0
  %219 = vmatpush1.bf16.msra.mxu0 0
  %220 = vmatprep.subr.bf16.mxu0 0
  %221 = vmatpush1.bf16.msra.mxu0 0
  %222 = vmatprep.subr.bf16.mxu0 0
  %223 = vmatpush1.bf16.msra.mxu0 0
  %224 = vmatprep.subr.bf16.mxu0 0
  %225 = vmatpush1.bf16.msra.mxu0 0
  %226 = vmatprep.subr.bf16.mxu0 0
  %227 = vmatpush1.bf16.msra.mxu0 0
  %228 = vmatprep.subr.bf16.mxu0 0
  %229 = vmatpush1.bf16.msra.mxu0 0
  %230 = vmatprep.subr.bf16.mxu0 %v123
  %231 = vmatpush1.bf16.msra.mxu0 %v122
  %232 = vmatprep.subr.bf16.mxu0 %v119
  %233 = vmatpush1.bf16.msra.mxu0 %v118
  %234 = vmatprep.subr.bf16.mxu0 0
  %235 = vmatpush2.bf16.msra.mxu0 0
  %236 = vmatprep.subr.bf16.mxu0 0
  %237 = vmatpush2.bf16.msra.mxu0 0
  %238 = vmatprep.subr.bf16.mxu0 0
  %239 = vmatpush2.bf16.msra.mxu0 0
  %240 = vmatprep.subr.bf16.mxu0 0
  %241 = vmatpush2.bf16.msra.mxu0 0
  %242 = vmatprep.subr.bf16.mxu0 0
  %243 = vmatpush2.bf16.msra.mxu0 0
  %244 = vmatprep.subr.bf16.mxu0 0
  %245 = vmatpush2.bf16.msra.mxu0 0
  %246 = vmatprep.subr.bf16.mxu0 0
  %247 = vmatpush2.bf16.msra.mxu0 0
  %248 = vmatprep.subr.bf16.mxu0 0
  %249 = vmatpush2.bf16.msra.mxu0 0
  %250 = vmatprep.mubr.bf16.mxu0 0
  %251 = vmatmul.mubr.bf16.gmra.mxu0 %v134
  %v252 = vpop.f32.mrf.mxu0
  %v253 = vadd.f32 %v63, %v252
  %v254 = vpop.f32.mrf.mxu0
  %v255 = vadd.f32 %v67, %v254
  %v256 = vpop.f32.mrf.mxu0
  %v257 = vadd.f32 %v63, %v256
  %v258 = vpop.f32.mrf.mxu0
  %v259 = vadd.f32 %v67, %v258
  %260 = vmatprep.mubr.bf16.mxu0 0
  %261 = vmatmul.mubr.bf16.gmra.mxu0 %v137
  %v262 = vpop.f32.mrf.mxu0
  %v263 = vadd.f32 %v63, %v262
  %v264 = vpop.f32.mrf.mxu0
  %v265 = vadd.f32 %v67, %v264
  %v266 = vpop.f32.mrf.mxu0
  %v267 = vadd.f32 %v63, %v266
  %v268 = vpop.f32.mrf.mxu0
  %v269 = vadd.f32 %v67, %v268
  %270 = vmatprep.mubr.bf16.mxu0 0
  %271 = vmatmul.mubr.bf16.gmra.mxu0 %v140
  %v272 = vpop.f32.mrf.mxu0
  %v273 = vadd.f32 %v63, %v272
  %v274 = vpop.f32.mrf.mxu0
  %v275 = vadd.f32 %v67, %v274
  %v276 = vpop.f32.mrf.mxu0
  %v277 = vadd.f32 %v63, %v276
  %v278 = vpop.f32.mrf.mxu0
  %v279 = vadd.f32 %v67, %v278
  %280 = vmatprep.mubr.bf16.mxu0 0
  %281 = vmatmul.mubr.bf16.gmra.mxu0 %v143
  %v282 = vpop.f32.mrf.mxu0
  %v283 = vadd.f32 %v63, %v282
  %v284 = vpop.f32.mrf.mxu0
  %v285 = vadd.f32 %v67, %v284
  %v286 = vpop.f32.mrf.mxu0
  %v287 = vadd.f32 %v63, %v286
  %v288 = vpop.f32.mrf.mxu0
  %v289 = vadd.f32 %v67, %v288
  %290 = vdwg.mxu0
  %291 = vst [vmem:[#allocation2] sm:$0xff] %v180
  %292 = vst [vmem:[#allocation2 + $0x8] sm:$0xff] %v182
  %293 = vst [vmem:[#allocation2 + $0x10] sm:$0xff] %v253
  %294 = vst [vmem:[#allocation2 + $0x18] sm:$0xff] %v255
  %295 = vst [vmem:[#allocation2 + $0x20] sm:$0xff] %v184
  %296 = vst [vmem:[#allocation2 + $0x28] sm:$0xff] %v186
  %297 = vst [vmem:[#allocation2 + $0x30] sm:$0xff] %v257
  %298 = vst [vmem:[#allocation2 + $0x38] sm:$0xff] %v259
  %299 = vst [vmem:[#allocation2 + $0x40] sm:$0xff] %v190
  %300 = vst [vmem:[#allocation2 + $0x48] sm:$0xff] %v192
  %301 = vst [vmem:[#allocation2 + $0x50] sm:$0xff] %v263
  %302 = vst [vmem:[#allocation2 + $0x58] sm:$0xff] %v265
  %303 = vst [vmem:[#allocation2 + $0x60] sm:$0xff] %v194
  %304 = vst [vmem:[#allocation2 + $0x68] sm:$0xff] %v196
  %305 = vst [vmem:[#allocation2 + $0x70] sm:$0xff] %v267
  %306 = vst [vmem:[#allocation2 + $0x78] sm:$0xff] %v269
  %307 = vst [vmem:[#allocation2 + $0x80] sm:$0xff] %v200
  %308 = vst [vmem:[#allocation2 + $0x88] sm:$0xff] %v202
  %309 = vst [vmem:[#allocation2 + $0x90] sm:$0xff] %v273
  %310 = vst [vmem:[#allocation2 + $0x98] sm:$0xff] %v275
  %311 = vst [vmem:[#allocation2 + $0xa0] sm:$0xff] %v204
  %312 = vst [vmem:[#allocation2 + $0xa8] sm:$0xff] %v206
  %313 = vst [vmem:[#allocation2 + $0xb0] sm:$0xff] %v277
  %314 = vst [vmem:[#allocation2 + $0xb8] sm:$0xff] %v279
  %315 = vst [vmem:[#allocation2 + $0xc0] sm:$0xff] %v210
  %316 = vst [vmem:[#allocation2 + $0xc8] sm:$0xff] %v212
  %317 = vst [vmem:[#allocation2 + $0xd0] sm:$0xff] %v283
  %318 = vst [vmem:[#allocation2 + $0xd8] sm:$0xff] %v285
  %319 = vst [vmem:[#allocation2 + $0xe0] sm:$0xff] %v214
  %320 = vst [vmem:[#allocation2 + $0xe8] sm:$0xff] %v216
  %321 = vst [vmem:[#allocation2 + $0xf0] sm:$0xff] %v287
  %322 = vst [vmem:[#allocation2 + $0xf8] sm:$0xff] %v289
  %323 = vst [vmem:[#allocation3] sm:$0xff] 0.0
  %324 = vst [vmem:[#allocation4] sm:$0xff] 0.0
  %v325 = vld [vmem:[%s2] sm:$0xff]
  %s326 = smul.u32 0, 8
  %s327 = sld [smem:[#allocation6 + %s326]]
  %s328 = sadd.s32 %s326, 1
  %s329 = sld [smem:[#allocation6 + %s328]]
  %p330 = scmp.gt.s32.totalorder %s327, %s329
  %s331 = scalar_select %p330, %s327, %s329
  %s332 = sadd.s32 %s326, 2
  %s333 = sld [smem:[#allocation6 + %s332]]
  %p334 = scmp.gt.s32.totalorder %s331, %s333
  %s335 = scalar_select %p334, %s331, %s333
  %s336 = sadd.s32 %s326, 3
  %s337 = sld [smem:[#allocation6 + %s336]]
  %p338 = scmp.gt.s32.totalorder %s335, %s337
  %s339 = scalar_select %p338, %s335, %s337
  %s340 = sadd.s32 %s326, 4
  %s341 = sld [smem:[#allocation6 + %s340]]
  %p342 = scmp.gt.s32.totalorder %s339, %s341
  %s343 = scalar_select %p342, %s339, %s341
  %s344 = sadd.s32 %s326, 5
  %s345 = sld [smem:[#allocation6 + %s344]]
  %p346 = scmp.gt.s32.totalorder %s343, %s345
  %s347 = scalar_select %p346, %s343, %s345
  %s348 = sadd.s32 %s326, 6
  %s349 = sld [smem:[#allocation6 + %s348]]
  %p350 = scmp.gt.s32.totalorder %s347, %s349
  %s351 = scalar_select %p350, %s347, %s349
  %s352 = sadd.s32 %s326, 7
  %s353 = sld [smem:[#allocation6 + %s352]]
  %p354 = scmp.gt.s32.totalorder %s351, %s353
  %s355 = scalar_select %p354, %s351, %s353
  // While loop
  $region30: #{anomaly_detection_forward.3} parent=0 // loop_pre_header
    _
  $region31: #{anomaly_detection_forward.3} parent=0 // loop_header
    %s357 = sphi 0, %s359
    %p358 = scmp.ge.s32.totalorder %s357, %s355
  $region32: #{anomaly_detection_forward.3} parent=0 // loop_header_branch
    %361 = sbr.rel (%p358) target = $region36
  $region33: #{anomaly_detection_forward.3} parent=0 // loop_body
    %s362 = smul.u32 %s357, 8
    %s363 = sshra.s32 %s362, 3
    %s364 = sand.u32 %s362, 7
    %s365 = smul.u32 %s363, 4
    %s366 = smul.addr %s365, 8
    %s367 = scalar_lea.vmem [#allocation2], %s366
    %v368 = vld [vmem:[%s367] sm:$0xff]
    %v369 = vld [vmem:[%s367 + $0x8] sm:$0xff]
    %v370 = vld [vmem:[%s367 + $0x10] sm:$0xff]
    %v371 = vld [vmem:[%s367 + $0x18] sm:$0xff]
    %v372 = vld [vmem:[#allocation3] sm:$0xff]
    %v373 = vpack.c.bf16 %v372, %v372
    %v374 = vld [vmem:[%s5] sm:$0xff]
    %v375 = vld [vmem:[%s5 + $0x8] sm:$0xff]
    %v376 = vld [vmem:[%s5 + $0x10] sm:$0xff]
    %v377 = vld [vmem:[%s5 + $0x18] sm:$0xff]
    %v378 = vld [vmem:[%s5 + $0x20] sm:$0xff]
    %v379 = vld [vmem:[%s5 + $0x28] sm:$0xff]
    %v380 = vld [vmem:[%s5 + $0x30] sm:$0xff]
    %v381 = vld [vmem:[%s5 + $0x38] sm:$0xff]
    %v382 = vld [vmem:[%s5 + $0x40] sm:$0xff]
    %v383 = vld [vmem:[%s5 + $0x48] sm:$0xff]
    %v384 = vld [vmem:[%s5 + $0x50] sm:$0xff]
    %v385 = vld [vmem:[%s5 + $0x58] sm:$0xff]
    %v386 = vld [vmem:[%s5 + $0x60] sm:$0xff]
    %v387 = vld [vmem:[%s5 + $0x68] sm:$0xff]
    %v388 = vld [vmem:[%s5 + $0x70] sm:$0xff]
    %v389 = vld [vmem:[%s5 + $0x78] sm:$0xff]
    %v390 = vld [vmem:[%s5 + $0x80] sm:$0xff]
    %v391 = vld [vmem:[%s5 + $0x88] sm:$0xff]
    %v392 = vld [vmem:[%s5 + $0x90] sm:$0xff]
    %v393 = vld [vmem:[%s5 + $0x98] sm:$0xff]
    %v394 = vld [vmem:[%s5 + $0xa0] sm:$0xff]
    %v395 = vld [vmem:[%s5 + $0xa8] sm:$0xff]
    %v396 = vld [vmem:[%s5 + $0xb0] sm:$0xff]
    %v397 = vld [vmem:[%s5 + $0xb8] sm:$0xff]
    %v398 = vld [vmem:[%s5 + $0xc0] sm:$0xff]
    %v399 = vld [vmem:[%s5 + $0xc8] sm:$0xff]
    %v400 = vld [vmem:[%s5 + $0xd0] sm:$0xff]
    %v401 = vld [vmem:[%s5 + $0xd8] sm:$0xff]
    %v402 = vld [vmem:[%s5 + $0xe0] sm:$0xff]
    %v403 = vld [vmem:[%s5 + $0xe8] sm:$0xff]
    %v404 = vld [vmem:[%s5 + $0xf0] sm:$0xff]
    %v405 = vld [vmem:[%s5 + $0xf8] sm:$0xff]
    %v438 = vunpack.c.l.b16 %v374
    %v439 = vunpack.c.h.b16 %v374
    %v440 = vunpack.c.l.b16 %v375
    %v441 = vunpack.c.h.b16 %v375
    %v442 = vunpack.c.l.b16 %v376
    %v443 = vunpack.c.h.b16 %v376
    %v444 = vunpack.c.l.b16 %v377
    %v445 = vunpack.c.h.b16 %v377
    %v446 = vunpack.c.l.b16 %v378
    %v447 = vunpack.c.h.b16 %v378
    %v448 = vunpack.c.l.b16 %v379
    %v449 = vunpack.c.h.b16 %v379
    %v450 = vunpack.c.l.b16 %v380
    %v451 = vunpack.c.h.b16 %v380
    %v452 = vunpack.c.l.b16 %v381
    %v453 = vunpack.c.h.b16 %v381
    %v454 = vunpack.c.l.b16 %v382
    %v455 = vunpack.c.h.b16 %v382
    %v456 = vunpack.c.l.b16 %v383
    %v457 = vunpack.c.h.b16 %v383
    %v458 = vunpack.c.l.b16 %v384
    %v459 = vunpack.c.h.b16 %v384
    %v460 = vunpack.c.l.b16 %v385
    %v461 = vunpack.c.h.b16 %v385
    %v462 = vunpack.c.l.b16 %v386
    %v463 = vunpack.c.h.b16 %v386
    %v464 = vunpack.c.l.b16 %v387
    %v465 = vunpack.c.h.b16 %v387
    %v466 = vunpack.c.l.b16 %v388
    %v467 = vunpack.c.h.b16 %v388
    %v468 = vunpack.c.l.b16 %v389
    %v469 = vunpack.c.h.b16 %v389
    %v470 = vunpack.c.l.b16 %v390
    %v471 = vunpack.c.h.b16 %v390
    %v472 = vunpack.c.l.b16 %v391
    %v473 = vunpack.c.h.b16 %v391
    %v474 = vunpack.c.l.b16 %v392
    %v475 = vunpack.c.h.b16 %v392
    %v476 = vunpack.c.l.b16 %v393
    %v477 = vunpack.c.h.b16 %v393
    %v478 = vunpack.c.l.b16 %v394
    %v479 = vunpack.c.h.b16 %v394
    %v480 = vunpack.c.l.b16 %v395
    %v481 = vunpack.c.h.b16 %v395
    %v482 = vunpack.c.l.b16 %v396
    %v483 = vunpack.c.h.b16 %v396
    %v484 = vunpack.c.l.b16 %v397
    %v485 = vunpack.c.h.b16 %v397
    %v486 = vunpack.c.l.b16 %v398
    %v487 = vunpack.c.h.b16 %v398
    %v488 = vunpack.c.l.b16 %v399
    %v489 = vunpack.c.h.b16 %v399
    %v490 = vunpack.c.l.b16 %v400
    %v491 = vunpack.c.h.b16 %v400
    %v492 = vunpack.c.l.b16 %v401
    %v493 = vunpack.c.h.b16 %v401
    %v494 = vunpack.c.l.b16 %v402
    %v495 = vunpack.c.h.b16 %v402
    %v496 = vunpack.c.l.b16 %v403
    %v497 = vunpack.c.h.b16 %v403
    %v498 = vunpack.c.l.b16 %v404
    %v499 = vunpack.c.h.b16 %v404
    %v500 = vunpack.c.l.b16 %v405
    %v501 = vunpack.c.h.b16 %v405
    %v502 = vpack.c.b16 %v442, %v438
    %v503 = vpack.c.b16 %v443, %v439
    %v504 = vpack.c.b16 %v444, %v440
    %v505 = vpack.c.b16 %v445, %v441
    %v506 = vpack.c.b16 %v450, %v446
    %v507 = vpack.c.b16 %v451, %v447
    %v508 = vpack.c.b16 %v452, %v448
    %v509 = vpack.c.b16 %v453, %v449
    %v510 = vpack.c.b16 %v458, %v454
    %v511 = vpack.c.b16 %v459, %v455
    %v512 = vpack.c.b16 %v460, %v456
    %v513 = vpack.c.b16 %v461, %v457
    %v514 = vpack.c.b16 %v466, %v462
    %v515 = vpack.c.b16 %v467, %v463
    %v516 = vpack.c.b16 %v468, %v464
    %v517 = vpack.c.b16 %v469, %v465
    %v518 = vpack.c.b16 %v474, %v470
    %v519 = vpack.c.b16 %v475, %v471
    %v520 = vpack.c.b16 %v476, %v472
    %v521 = vpack.c.b16 %v477, %v473
    %v522 = vpack.c.b16 %v482, %v478
    %v523 = vpack.c.b16 %v483, %v479
    %v524 = vpack.c.b16 %v484, %v480
    %v525 = vpack.c.b16 %v485, %v481
    %v526 = vpack.c.b16 %v490, %v486
    %v527 = vpack.c.b16 %v491, %v487
    %v528 = vpack.c.b16 %v492, %v488
    %v529 = vpack.c.b16 %v493, %v489
    %v530 = vpack.c.b16 %v498, %v494
    %v531 = vpack.c.b16 %v499, %v495
    %v532 = vpack.c.b16 %v500, %v496
    %v533 = vpack.c.b16 %v501, %v497
    %566 = vmatprep.subr.bf16.mxu0 %v531
    %567 = vmatpush1.bf16.msra.mxu0 %v530
    %568 = vmatprep.subr.bf16.mxu0 %v527
    %569 = vmatpush1.bf16.msra.mxu0 %v526
    %570 = vmatprep.subr.bf16.mxu0 %v523
    %571 = vmatpush1.bf16.msra.mxu0 %v522
    %572 = vmatprep.subr.bf16.mxu0 %v519
    %573 = vmatpush1.bf16.msra.mxu0 %v518
    %574 = vmatprep.subr.bf16.mxu0 %v515
    %575 = vmatpush1.bf16.msra.mxu0 %v514
    %576 = vmatprep.subr.bf16.mxu0 %v511
    %577 = vmatpush1.bf16.msra.mxu0 %v510
    %578 = vmatprep.subr.bf16.mxu0 %v507
    %579 = vmatpush1.bf16.msra.mxu0 %v506
    %580 = vmatprep.subr.bf16.mxu0 %v503
    %581 = vmatpush1.bf16.msra.mxu0 %v502
    %582 = vmatprep.subr.bf16.mxu0 0
    %583 = vmatpush2.bf16.msra.mxu0 0
    %584 = vmatprep.subr.bf16.mxu0 0
    %585 = vmatpush2.bf16.msra.mxu0 0
    %586 = vmatprep.subr.bf16.mxu0 0
    %587 = vmatpush2.bf16.msra.mxu0 0
    %588 = vmatprep.subr.bf16.mxu0 0
    %589 = vmatpush2.bf16.msra.mxu0 0
    %590 = vmatprep.subr.bf16.mxu0 0
    %591 = vmatpush2.bf16.msra.mxu0 0
    %592 = vmatprep.subr.bf16.mxu0 0
    %593 = vmatpush2.bf16.msra.mxu0 0
    %594 = vmatprep.subr.bf16.mxu0 0
    %595 = vmatpush2.bf16.msra.mxu0 0
    %596 = vmatprep.subr.bf16.mxu0 0
    %597 = vmatpush2.bf16.msra.mxu0 0
    %598 = vmatprep.mubr.bf16.mxu0 0
    %599 = vmatmul.mubr.bf16.gmra.mxu0 %v373
    %v600 = vpop.f32.mrf.mxu0
    %v601 = vadd.f32 0.0, %v600
    %v602 = vpop.f32.mrf.mxu0
    %v603 = vadd.f32 0.0, %v602
    %v604 = vpop.f32.mrf.mxu0
    %v605 = vpop.f32.mrf.mxu0
    %606 = vdwg.mxu0
    %607 = vmatprep.subr.bf16.mxu0 %v533
    %608 = vmatpush1.bf16.msra.mxu0 %v532
    %609 = vmatprep.subr.bf16.mxu0 %v529
    %610 = vmatpush1.bf16.msra.mxu0 %v528
    %611 = vmatprep.subr.bf16.mxu0 %v525
    %612 = vmatpush1.bf16.msra.mxu0 %v524
    %613 = vmatprep.subr.bf16.mxu0 %v521
    %614 = vmatpush1.bf16.msra.mxu0 %v520
    %615 = vmatprep.subr.bf16.mxu0 %v517
    %616 = vmatpush1.bf16.msra.mxu0 %v516
    %617 = vmatprep.subr.bf16.mxu0 %v513
    %618 = vmatpush1.bf16.msra.mxu0 %v512
    %619 = vmatprep.subr.bf16.mxu0 %v509
    %620 = vmatpush1.bf16.msra.mxu0 %v508
    %621 = vmatprep.subr.bf16.mxu0 %v505
    %622 = vmatpush1.bf16.msra.mxu0 %v504
    %623 = vmatprep.subr.bf16.mxu0 0
    %624 = vmatpush2.bf16.msra.mxu0 0
    %625 = vmatprep.subr.bf16.mxu0 0
    %626 = vmatpush2.bf16.msra.mxu0 0
    %627 = vmatprep.subr.bf16.mxu0 0
    %628 = vmatpush2.bf16.msra.mxu0 0
    %629 = vmatprep.subr.bf16.mxu0 0
    %630 = vmatpush2.bf16.msra.mxu0 0
    %631 = vmatprep.subr.bf16.mxu0 0
    %632 = vmatpush2.bf16.msra.mxu0 0
    %633 = vmatprep.subr.bf16.mxu0 0
    %634 = vmatpush2.bf16.msra.mxu0 0
    %635 = vmatprep.subr.bf16.mxu0 0
    %636 = vmatpush2.bf16.msra.mxu0 0
    %637 = vmatprep.subr.bf16.mxu0 0
    %638 = vmatpush2.bf16.msra.mxu0 0
    %639 = vmatprep.mubr.bf16.mxu0 0
    %640 = vmatmul.mubr.bf16.gmra.mxu0 %v373
    %v641 = vpop.f32.mrf.mxu0
    %v642 = vadd.f32 0.0, %v641
    %v643 = vpop.f32.mrf.mxu0
    %v644 = vadd.f32 0.0, %v643
    %v645 = vpop.f32.mrf.mxu0
    %v646 = vpop.f32.mrf.mxu0
    %647 = vdwg.mxu0
    %v648 = vadd.f32 %v368, %v601
    %v649 = vadd.f32 %v369, %v603
    %v650 = vadd.f32 %v370, %v642
    %v651 = vadd.f32 %v371, %v644
    %v652 = vxor.u32 %v648, 2147483648
    %v653 = vmul.f32 %v652, 1.442695
    %v654 = vpow.pop %v653
    %v655 = vadd.f32 %v654, 1.0
    %v656 = vrcp.pop %v655
    %v657 = vmul.f32 1.0, %v656
    %v658 = vxor.u32 %v649, 2147483648
    %v659 = vmul.f32 %v658, 1.442695
    %v660 = vpow.pop %v659
    %v661 = vadd.f32 %v660, 1.0
    %v662 = vrcp.pop %v661
    %v663 = vmul.f32 1.0, %v662
    %v664 = vtanh.pop %v650
    %v665 = vxor.u32 %v651, 2147483648
    %v666 = vmul.f32 %v665, 1.442695
    %v667 = vpow.pop %v666
    %v668 = vadd.f32 %v667, 1.0
    %v669 = vrcp.pop %v668
    %v670 = vmul.f32 1.0, %v669
    %v671 = vld [vmem:[#allocation4] sm:$0xff]
    %v672 = vmul.f32 %v663, %v671
    %v673 = vmul.f32 %v657, %v664
    %v674 = vadd.f32 %v672, %v673
    %v675 = vtanh.pop %v674
    %v676 = vmul.f32 %v670, %v675
    %v677 = vstv %s357
    %vm678 = vcmp.lt.s32.totalorder %v677, %v325
    %v679 = vsel %vm678, 1, 0
    %680 = vset.pattern.permute.xlu0 0
    %681 = vperm.xlu0 %680, %v679
    %v682 = vpop.permute.xlu0 %681
    %vm683 = vcmp.eq.s32.totalorder %v682, 1
    %v684 = vsel %vm683, %v676, %v372
    %685 = vst [vmem:[#allocation3] sm:$0xff] %v684
    %v686 = vld [vmem:[#allocation4] sm:$0xff]
    %v687 = vsel %vm683, %v674, %v686
    %688 = vst [vmem:[#allocation4] sm:$0xff] %v687
  $region34: #{anomaly_detection_forward.3} parent=0 // loop_footer
    %s359 = sadd.s32 %s357, 1
  $region35: #{anomaly_detection_forward.3} parent=0 // loop_footer_branch
    %356 = sbr.rel target = $region31
  $region36: #{anomaly_detection_forward.3} parent=0 // loop_exit
    _
  %v689 = vld [vmem:[#allocation3] sm:$0xff]
  %v690 = vld [vmem:[%s6] sm:$0xff]
  %v691 = vld [vmem:[%s6 + $0x8] sm:$0xff]
  %v692 = vld [vmem:[%s6 + $0x10] sm:$0xff]
  %v693 = vld [vmem:[%s6 + $0x18] sm:$0xff]
  %v694 = vld [vmem:[%s6 + $0x20] sm:$0xff]
  %v695 = vld [vmem:[%s6 + $0x28] sm:$0xff]
  %v696 = vld [vmem:[%s6 + $0x30] sm:$0xff]
  %v697 = vld [vmem:[%s6 + $0x38] sm:$0xff]
  %v698 = vld [vmem:[%s6 + $0x40] sm:$0xff]
  %v699 = vld [vmem:[%s6 + $0x48] sm:$0xff]
  %v700 = vld [vmem:[%s6 + $0x50] sm:$0xff]
  %v701 = vld [vmem:[%s6 + $0x58] sm:$0xff]
  %v702 = vld [vmem:[%s6 + $0x60] sm:$0xff]
  %v703 = vld [vmem:[%s6 + $0x68] sm:$0xff]
  %v704 = vld [vmem:[%s6 + $0x70] sm:$0xff]
  %v705 = vld [vmem:[%s6 + $0x78] sm:$0xff]
  %v706 = vld [vmem:[%s7] sm:$0x1]
  %v708 = vlaneseq
  %v709 = vshrl.u32 %v708, 7
  %v710 = vsub.s32 0, %v709
  %v711 = vrot.slane %v706, %v710
  %713 = vmatprep.subr.mxu0 0.0
  %714 = vmatpush1.msra.mxu0 %v705
  %715 = vmatprep.subr.mxu0 0.0
  %716 = vmatpush1.msra.mxu0 %v704
  %717 = vmatprep.subr.mxu0 0.0
  %718 = vmatpush1.msra.mxu0 %v703
  %719 = vmatprep.subr.mxu0 0.0
  %720 = vmatpush1.msra.mxu0 %v702
  %721 = vmatprep.subr.mxu0 0.0
  %722 = vmatpush1.msra.mxu0 %v701
  %723 = vmatprep.subr.mxu0 0.0
  %724 = vmatpush1.msra.mxu0 %v700
  %725 = vmatprep.subr.mxu0 0.0
  %726 = vmatpush1.msra.mxu0 %v699
  %727 = vmatprep.subr.mxu0 0.0
  %728 = vmatpush1.msra.mxu0 %v698
  %729 = vmatprep.subr.mxu0 0.0
  %730 = vmatpush1.msra.mxu0 %v697
  %731 = vmatprep.subr.mxu0 0.0
  %732 = vmatpush1.msra.mxu0 %v696
  %733 = vmatprep.subr.mxu0 0.0
  %734 = vmatpush1.msra.mxu0 %v695
  %735 = vmatprep.subr.mxu0 0.0
  %736 = vmatpush1.msra.mxu0 %v694
  %737 = vmatprep.subr.mxu0 0.0
  %738 = vmatpush1.msra.mxu0 %v693
  %739 = vmatprep.subr.mxu0 0.0
  %740 = vmatpush1.msra.mxu0 %v692
  %741 = vmatprep.subr.mxu0 0.0
  %742 = vmatpush1.msra.mxu0 %v691
  %743 = vmatprep.subr.mxu0 0.0
  %744 = vmatpush1.msra.mxu0 %v690
  %745 = vmatprep.subr.mxu0 0.0
  %746 = vmatpush2.msra.mxu0 0.0
  %747 = vmatprep.subr.mxu0 0.0
  %748 = vmatpush2.msra.mxu0 0.0
  %749 = vmatprep.subr.mxu0 0.0
  %750 = vmatpush2.msra.mxu0 0.0
  %751 = vmatprep.subr.mxu0 0.0
  %752 = vmatpush2.msra.mxu0 0.0
  %753 = vmatprep.subr.mxu0 0.0
  %754 = vmatpush2.msra.mxu0 0.0
  %755 = vmatprep.subr.mxu0 0.0
  %756 = vmatpush2.msra.mxu0 0.0
  %757 = vmatprep.subr.mxu0 0.0
  %758 = vmatpush2.msra.mxu0 0.0
  %759 = vmatprep.subr.mxu0 0.0
  %760 = vmatpush2.msra.mxu0 0.0
  %761 = vmatprep.subr.mxu0 0.0
  %762 = vmatpush2.msra.mxu0 0.0
  %763 = vmatprep.subr.mxu0 0.0
  %764 = vmatpush2.msra.mxu0 0.0
  %765 = vmatprep.subr.mxu0 0.0
  %766 = vmatpush2.msra.mxu0 0.0
  %767 = vmatprep.subr.mxu0 0.0
  %768 = vmatpush2.msra.mxu0 0.0
  %769 = vmatprep.subr.mxu0 0.0
  %770 = vmatpush2.msra.mxu0 0.0
  %771 = vmatprep.subr.mxu0 0.0
  %772 = vmatpush2.msra.mxu0 0.0
  %773 = vmatprep.subr.mxu0 0.0
  %774 = vmatpush2.msra.mxu0 0.0
  %775 = vmatprep.subr.mxu0 0.0
  %776 = vmatpush2.msra.mxu0 0.0
  %777 = vmatprep.mubr.f32.mxu0 0.0
  %778 = vmatmul.mubr.f32.gmra.mxu0 %v689
  %v779 = vpop.f32.mrf.mxu0
  %v780 = vadd.f32 %v711, %v779
  %v781 = vpop.f32.mrf.mxu0
  %782 = vdwg.mxu0
  %vm783 = vcmask 15360
  %784 = vst.msk [vmem:[%s8] sm:$0xff] %vm783, %v780
  // Predicated region
  $region37: #{anomaly_detection_forward.3} parent=0 // pred_check
    _
  $region38: #{anomaly_detection_forward.3} parent=0 // pred_check_branch
    %786 = sbr.rel (0) target = $region40
  $region39: #{anomaly_detection_forward.3} parent=0 // pred_region
    _
  $region40: #{anomaly_detection_forward.3} parent=0 // pred_fallthru
    _
  // Predicated region
  $region41: #{anomaly_detection_forward.3} parent=0 // pred_check
    _
  $region42: #{anomaly_detection_forward.3} parent=0 // pred_check_branch
    %788 = sbr.rel (0) target = $region44
  $region43: #{anomaly_detection_forward.3} parent=0 // pred_region
    _
  $region44: #{anomaly_detection_forward.3} parent=0 // pred_fallthru
    _

</llo_original>
